<compile_context>
chip_gen: v6e
topology: v6e:2x2x1
jax: 0.10.0
libtpu: 0.0.40
codegen_flags: <defaults>
</compile_context>

<pallas_src>
import functools

import jax
import jax.numpy as jnp
from jax.experimental import pallas as pl
from jax.experimental.pallas import tpu as pltpu

NEG_SLOPE = 0.2
BN_EPS = 1e-5
VMEM_LIMIT_BYTES = 32 * 1024 * 1024   # safe on v5e/v6e (128 MiB) and v7x (64 MiB)


# ---------------------------------------------------------------------------
# Pallas kernel 1: fused im2col-matmul * (folded scale in W) + shift -> act
# ---------------------------------------------------------------------------
def _conv_mm_kernel(p_ref, w_ref, shift_ref, o_ref, *, apply_act):
    acc = jnp.dot(p_ref[...], w_ref[...], preferred_element_type=jnp.float32)
    y = acc + shift_ref[...]                     # broadcast [1, N] over rows
    if apply_act:
        y = jnp.where(y > 0, y, NEG_SLOPE * y)   # LeakyReLU(0.2)
    o_ref[...] = y.astype(o_ref.dtype)


def fused_conv_matmul(patches, w, shift, apply_act, out_dtype=jnp.bfloat16):
    """patches [M, K] bf16  x  w [K, N] bf16 (scale folded)  + shift [1, N]."""
    M, K = patches.shape
    K2, N = w.shape
    assert K == K2
    # M-tile: small layers take one block; big layers tile at 512 rows
    # (double-buffered by BlockSpec; worst case ~7 MiB resident << 32 MiB).
    TM = M if M <= 1024 else 512
    grid = (pl.cdiv(M, TM),)
    bytes_accessed = (patches.size * patches.dtype.itemsize
                      + w.size * w.dtype.itemsize
                      + shift.size * shift.dtype.itemsize
                      + M * N * jnp.dtype(out_dtype).itemsize)
    return pl.pallas_call(
        functools.partial(_conv_mm_kernel, apply_act=apply_act),
        out_shape=jax.ShapeDtypeStruct((M, N), out_dtype),
        grid=grid,
        in_specs=[
            pl.BlockSpec((TM, K), lambda i: (i, 0)),   # patches tile
            pl.BlockSpec((K, N), lambda i: (0, 0)),    # resident weight
            pl.BlockSpec((1, N), lambda i: (0, 0)),    # resident shift
        ],
        out_specs=pl.BlockSpec((TM, N), lambda i: (i, 0)),
        compiler_params=pltpu.CompilerParams(
            dimension_semantics=("parallel",),         # shard rows across TCs
            vmem_limit_bytes=VMEM_LIMIT_BYTES),
        cost_estimate=pl.CostEstimate(
            flops=2 * M * K * N,
            transcendentals=0,
            bytes_accessed=bytes_accessed),
    )(patches, w, shift)


# ---------------------------------------------------------------------------
# Pallas kernel 2: fc_phi as a VPU multiply + lane reduction (N=1 conv)
# ---------------------------------------------------------------------------
def _phi_kernel(x_ref, w_ref, b_ref, o_ref):
    prod = x_ref[...].astype(jnp.float32) * w_ref[...]       # [TB, K]
    o_ref[...] = jnp.sum(prod, axis=-1, keepdims=True) + b_ref[...]


def phi_reduce(x_flat, w_flat, bias):
    """x_flat [B, K] bf16, w_flat [1, K] f32, bias [1, 1] f32 -> [B, 1] f32."""
    B, K = x_flat.shape
    TB = B if B <= 1024 else 512
    grid = (pl.cdiv(B, TB),)
    return pl.pallas_call(
        _phi_kernel,
        out_shape=jax.ShapeDtypeStruct((B, 1), jnp.float32),
        grid=grid,
        in_specs=[
            pl.BlockSpec((TB, K), lambda i: (i, 0)),
            pl.BlockSpec((1, K), lambda i: (0, 0)),
            pl.BlockSpec((1, 1), lambda i: (0, 0)),
        ],
        out_specs=pl.BlockSpec((TB, 1), lambda i: (i, 0)),
        compiler_params=pltpu.CompilerParams(
            dimension_semantics=("parallel",),
            vmem_limit_bytes=VMEM_LIMIT_BYTES),
        cost_estimate=pl.CostEstimate(
            flops=2 * B * K, transcendentals=0,
            bytes_accessed=x_flat.size * 2 + w_flat.size * 4 + B * 4),
    )(x_flat, w_flat, bias)


# ---------------------------------------------------------------------------
# Glue: NHWC im2col (plain JAX; emits [B*Ho*Wo, k*k*C] directly, no
# stack/transpose intermediates).  Patch feature order = (kh, kw, c).
# ---------------------------------------------------------------------------
def im2col_nhwc(x, k, s, p):
    B, H, W, C = x.shape
    Ho = (H + 2 * p - k) // s + 1
    Wo = (W + 2 * p - k) // s + 1
    xp = jnp.pad(x, ((0, 0), (p, p), (p, p), (0, 0)))
    cols = []
    for kh in range(k):
        for kw in range(k):
            cols.append(xp[:, kh:kh + s * Ho:s, kw:kw + s * Wo:s, :])
    patches = jnp.concatenate(cols, axis=-1)       # [B, Ho, Wo, k*k*C]
    return patches.reshape(B * Ho * Wo, k * k * C), Ho, Wo


def conv_block(x_nhwc, w_kkio, shift, apply_act, k, s, p):
    """x [B,H,W,C] -> [B,Ho,Wo,C_out] (NHWC throughout)."""
    B = x_nhwc.shape[0]
    N = w_kkio.shape[1]
    patches, Ho, Wo = im2col_nhwc(x_nhwc, k, s, p)
    patches = patches.astype(jnp.bfloat16)
    out = fused_conv_matmul(patches, w_kkio, shift, apply_act)
    return out.reshape(B, Ho, Wo, N)


# ---------------------------------------------------------------------------
# Deterministic parameter init (shapes follow TransportT.__init__) + folding
# ---------------------------------------------------------------------------
def init_params(key, in_ch=3):
    def normal(k, shape, scale=0.05):
        return scale * jax.random.normal(k, shape, dtype=jnp.float32)

    ks = iter(jax.random.split(key, 32))
    p = {}
    # main1: Conv(3->32, bias) / Conv(32->64)+BN / Conv(64->128)+BN ; main2: Conv(128->256)+BN
    p["w1"] = normal(next(ks), (32, in_ch, 4, 4))
    p["b1"] = normal(next(ks), (32,))
    for i, (ci, co) in zip((2, 3, 4), ((32, 64), (64, 128), (128, 256))):
        p[f"w{i}"] = normal(next(ks), (co, ci, 4, 4))
        p[f"bn{i}_gamma"] = 1.0 + normal(next(ks), (co,))
        p[f"bn{i}_beta"] = normal(next(ks), (co,))
        p[f"bn{i}_mean"] = normal(next(ks), (co,))
        p[f"bn{i}_var"] = jax.random.uniform(
            next(ks), (co,), dtype=jnp.float32, minval=0.5, maxval=1.5)
    # fc_phi: Conv(256 -> 1, kernel 2, stride 1, pad 0, bias)
    p["w_phi"] = normal(next(ks), (1, 256, 2, 2))
    p["b_phi"] = normal(next(ks), (1,))
    return p


def _fold_conv(w_oikk, scale, shift):
    """[C_out,C_in,k,k] -> bf16 [k*k*C_in, C_out] with scale folded, shift [1,C_out]."""
    c_out = w_oikk.shape[0]
    w_kkio = jnp.transpose(w_oikk, (2, 3, 1, 0)).reshape(-1, c_out)   # (kh,kw,ci) major
    w_folded = (w_kkio * scale[None, :]).astype(jnp.bfloat16)
    return w_folded, shift.reshape(1, c_out).astype(jnp.float32)


def prepare_params(p):
    """Precompute once: BN-folded bf16 weight matrices and f32 shifts."""
    convs = []
    convs.append(_fold_conv(p["w1"], jnp.ones((32,), jnp.float32), p["b1"]))
    for i in (2, 3, 4):
        g, b = p[f"bn{i}_gamma"], p[f"bn{i}_beta"]
        m, v = p[f"bn{i}_mean"], p[f"bn{i}_var"]
        scale = g / jnp.sqrt(v + BN_EPS)
        shift = b - m * scale
        convs.append(_fold_conv(p[f"w{i}"], scale, shift))
    # fc_phi weight flattened to match NHWC (h, w, c) flatten of the 2x2x256 act.
    w_phi = jnp.transpose(p["w_phi"][0], (1, 2, 0)).reshape(1, -1).astype(jnp.float32)
    b_phi = p["b_phi"].reshape(1, 1).astype(jnp.float32)
    return {"convs": tuple(convs), "phi_w": w_phi, "phi_b": b_phi}


# ---------------------------------------------------------------------------
# TransportT.forward
# ---------------------------------------------------------------------------
def transport_t_forward(prepped, x, input_shape=(3, 32, 32)):
    B = x.shape[0]
    x = x.reshape(B, *input_shape)                 # x.view(B, *input_shape), NCHW
    x = jnp.transpose(x, (0, 2, 3, 1))             # single NCHW -> NHWC transpose
    x = x.astype(jnp.bfloat16)

    # main1 + main2: 4 x (Conv 4x4 s2 p1 + affine + LeakyReLU), NHWC all the way.
    # Note: layer-1 C_out=32 (<128 lanes) is left unpadded on purpose — padding
    # to 128 would 4x the K of layer 2; the narrow store is tiny at these sizes.
    for w, shift in prepped["convs"]:
        x = conv_block(x, w, shift, True, 4, 2, 1)
    # -> [B,16,16,32] -> [B,8,8,64] -> [B,4,4,128] -> [B,2,2,256]

    # fc_phi: Conv(256->1, k=2, s=1, p=0, bias) == dot over the full 2x2x256 patch,
    # done as a VPU multiply + lane reduction (no MXU N=1 waste).
    x_flat = x.reshape(B, -1)                      # [B, 1024], (h, w, c) order
    out = phi_reduce(x_flat, prepped["phi_w"], prepped["phi_b"])
    return out                                     # [B, 1]


if __name__ == "__main__":
    key = jax.random.PRNGKey(0)
    k_param, k_x = jax.random.split(key)

    params = init_params(k_param)
    prepped = prepare_params(params)
    x = jax.random.normal(k_x, (2, 3, 32, 32), dtype=jnp.float32)

    fwd = jax.jit(transport_t_forward)
    out = fwd(prepped, x)
    out = jax.block_until_ready(out)

    assert out.shape == (2, 1), out.shape
    assert bool(jnp.all(jnp.isfinite(out)))
    print("KERNEL_OK")
</pallas_src>

<mosaic_0001>
module attributes {stable_mosaic.version = 11 : i64} {
  func.func @_conv_mm_kernel(%arg0: i32, %arg1: memref<512x48xbf16, #tpu.memory_space<vmem>>, %arg2: memref<48x32xbf16, #tpu.memory_space<vmem>>, %arg3: memref<1x32xf32, #tpu.memory_space<vmem>>, %arg4: memref<512x32xbf16, #tpu.memory_space<vmem>>) attributes {dimension_semantics = [#tpu.dimension_semantics<parallel>], iteration_bounds = array<i64: 1>, scalar_prefetch = 0 : i64, scratch_operands = 0 : i64, tpu.core_type = #tpu.core_type<tc>, window_params = [{transform_indices = @transform_0, window_bounds = array<i64: 512, 48>}, {pipeline_mode = #tpu.pipeline_mode<synchronous>, transform_indices = @transform_1, window_bounds = array<i64: 48, 32>}, {pipeline_mode = #tpu.pipeline_mode<synchronous>, transform_indices = @transform_2, window_bounds = array<i64: 1, 32>}, {transform_indices = @transform_3, window_bounds = array<i64: 512, 32>}]} {
    %c0 = arith.constant 0 : index
    %c0_0 = arith.constant 0 : index
    %0 = vector.load %arg1[%c0, %c0_0] : memref<512x48xbf16, #tpu.memory_space<vmem>>, vector<512x48xbf16>
    %c0_1 = arith.constant 0 : index
    %c0_2 = arith.constant 0 : index
    %1 = vector.load %arg2[%c0_1, %c0_2] : memref<48x32xbf16, #tpu.memory_space<vmem>>, vector<48x32xbf16>
    %cst = arith.constant dense<0.000000e+00> : vector<512x32xf32>
    %2 = tpu.matmul %0, %1, %cst {dimension_numbers = #tpu.dot_dimension_numbers<[1], [0], [0], [1], [0, 0, 1, 1], [], []>} : vector<512x48xbf16>, vector<48x32xbf16>, vector<512x32xf32> -> vector<512x32xf32>
    %c0_3 = arith.constant 0 : index
    %c0_4 = arith.constant 0 : index
    %3 = vector.load %arg3[%c0_3, %c0_4] : memref<1x32xf32, #tpu.memory_space<vmem>>, vector<1x32xf32>
    %4 = vector.broadcast %3 : vector<1x32xf32> to vector<512x32xf32>
    %5 = arith.addf %2, %4 : vector<512x32xf32>
    %cst_5 = arith.constant 0.000000e+00 : f32
    %6 = vector.broadcast %cst_5 : f32 to vector<512x32xf32>
    %7 = arith.cmpf ogt, %5, %6 : vector<512x32xf32>
    %cst_6 = arith.constant 2.000000e-01 : f32
    %8 = vector.broadcast %cst_6 : f32 to vector<512x32xf32>
    %9 = arith.mulf %8, %5 : vector<512x32xf32>
    %10 = arith.select %7, %5, %9 : vector<512x32xi1>, vector<512x32xf32>
    %11 = arith.truncf %10 : vector<512x32xf32> to vector<512x32xbf16>
    %c0_7 = arith.constant 0 : index
    %c0_8 = arith.constant 0 : index
    %12 = vector.load %arg4[%c0_7, %c0_8] : memref<512x32xbf16, #tpu.memory_space<vmem>>, vector<512x32xbf16>
    tpu.vector_store %arg4[%c0_7, %c0_8], %11 {strides = array<i32>} : memref<512x32xbf16, #tpu.memory_space<vmem>>, vector<512x32xbf16>,
    return
  }
  func.func @transform_0(%arg0: i32) -> (i32, i32) {
    %c0_i32 = arith.constant 0 : i32
    %c0_i32_0 = arith.constant 0 : i32
    return %arg0, %c0_i32 : i32, i32
  }
  func.func @transform_1(%arg0: i32) -> (i32, i32) {
    %c0_i32 = arith.constant 0 : i32
    %c0_i32_0 = arith.constant 0 : i32
    %c0_i32_1 = arith.constant 0 : i32
    return %c0_i32, %c0_i32_0 : i32, i32
  }
  func.func @transform_2(%arg0: i32) -> (i32, i32) {
    %c0_i32 = arith.constant 0 : i32
    %c0_i32_0 = arith.constant 0 : i32
    %c0_i32_1 = arith.constant 0 : i32
    return %c0_i32, %c0_i32_0 : i32, i32
  }
  func.func @transform_3(%arg0: i32) -> (i32, i32) {
    %c0_i32 = arith.constant 0 : i32
    %c0_i32_0 = arith.constant 0 : i32
    return %arg0, %c0_i32 : i32, i32
  }
}

module attributes {stable_mosaic.version = 11 : i64} {
  func.func @_conv_mm_kernel(%arg0: i32, %arg1: memref<128x512xbf16, #tpu.memory_space<vmem>>, %arg2: memref<512x64xbf16, #tpu.memory_space<vmem>>, %arg3: memref<1x64xf32, #tpu.memory_space<vmem>>, %arg4: memref<128x64xbf16, #tpu.memory_space<vmem>>) attributes {dimension_semantics = [#tpu.dimension_semantics<parallel>], iteration_bounds = array<i64: 1>, scalar_prefetch = 0 : i64, scratch_operands = 0 : i64, tpu.core_type = #tpu.core_type<tc>, window_params = [{transform_indices = @transform_0, window_bounds = array<i64: 128, 512>}, {pipeline_mode = #tpu.pipeline_mode<synchronous>, transform_indices = @transform_1, window_bounds = array<i64: 512, 64>}, {pipeline_mode = #tpu.pipeline_mode<synchronous>, transform_indices = @transform_2, window_bounds = array<i64: 1, 64>}, {transform_indices = @transform_3, window_bounds = array<i64: 128, 64>}]} {
    %c0 = arith.constant 0 : index
    %c0_0 = arith.constant 0 : index
    %0 = vector.load %arg1[%c0, %c0_0] : memref<128x512xbf16, #tpu.memory_space<vmem>>, vector<128x512xbf16>
    %c0_1 = arith.constant 0 : index
    %c0_2 = arith.constant 0 : index
    %1 = vector.load %arg2[%c0_1, %c0_2] : memref<512x64xbf16, #tpu.memory_space<vmem>>, vector<512x64xbf16>
    %cst = arith.constant dense<0.000000e+00> : vector<128x64xf32>
    %2 = tpu.matmul %0, %1, %cst {dimension_numbers = #tpu.dot_dimension_numbers<[1], [0], [0], [1], [0, 0, 1, 1], [], []>} : vector<128x512xbf16>, vector<512x64xbf16>, vector<128x64xf32> -> vector<128x64xf32>
    %c0_3 = arith.constant 0 : index
    %c0_4 = arith.constant 0 : index
    %3 = vector.load %arg3[%c0_3, %c0_4] : memref<1x64xf32, #tpu.memory_space<vmem>>, vector<1x64xf32>
    %4 = vector.broadcast %3 : vector<1x64xf32> to vector<128x64xf32>
    %5 = arith.addf %2, %4 : vector<128x64xf32>
    %cst_5 = arith.constant 0.000000e+00 : f32
    %6 = vector.broadcast %cst_5 : f32 to vector<128x64xf32>
    %7 = arith.cmpf ogt, %5, %6 : vector<128x64xf32>
    %cst_6 = arith.constant 2.000000e-01 : f32
    %8 = vector.broadcast %cst_6 : f32 to vector<128x64xf32>
    %9 = arith.mulf %8, %5 : vector<128x64xf32>
    %10 = arith.select %7, %5, %9 : vector<128x64xi1>, vector<128x64xf32>
    %11 = arith.truncf %10 : vector<128x64xf32> to vector<128x64xbf16>
    %c0_7 = arith.constant 0 : index
    %c0_8 = arith.constant 0 : index
    %12 = vector.load %arg4[%c0_7, %c0_8] : memref<128x64xbf16, #tpu.memory_space<vmem>>, vector<128x64xbf16>
    tpu.vector_store %arg4[%c0_7, %c0_8], %11 {strides = array<i32>} : memref<128x64xbf16, #tpu.memory_space<vmem>>, vector<128x64xbf16>,
    return
  }
  func.func @transform_0(%arg0: i32) -> (i32, i32) {
    %c0_i32 = arith.constant 0 : i32
    %c0_i32_0 = arith.constant 0 : i32
    return %arg0, %c0_i32 : i32, i32
  }
  func.func @transform_1(%arg0: i32) -> (i32, i32) {
    %c0_i32 = arith.constant 0 : i32
    %c0_i32_0 = arith.constant 0 : i32
    %c0_i32_1 = arith.constant 0 : i32
    return %c0_i32, %c0_i32_0 : i32, i32
  }
  func.func @transform_2(%arg0: i32) -> (i32, i32) {
    %c0_i32 = arith.constant 0 : i32
    %c0_i32_0 = arith.constant 0 : i32
    %c0_i32_1 = arith.constant 0 : i32
    return %c0_i32, %c0_i32_0 : i32, i32
  }
  func.func @transform_3(%arg0: i32) -> (i32, i32) {
    %c0_i32 = arith.constant 0 : i32
    %c0_i32_0 = arith.constant 0 : i32
    return %arg0, %c0_i32 : i32, i32
  }
}

module attributes {stable_mosaic.version = 11 : i64} {
  func.func @_conv_mm_kernel(%arg0: i32, %arg1: memref<32x1024xbf16, #tpu.memory_space<vmem>>, %arg2: memref<1024x128xbf16, #tpu.memory_space<vmem>>, %arg3: memref<1x128xf32, #tpu.memory_space<vmem>>, %arg4: memref<32x128xbf16, #tpu.memory_space<vmem>>) attributes {dimension_semantics = [#tpu.dimension_semantics<parallel>], iteration_bounds = array<i64: 1>, scalar_prefetch = 0 : i64, scratch_operands = 0 : i64, tpu.core_type = #tpu.core_type<tc>, window_params = [{transform_indices = @transform_0, window_bounds = array<i64: 32, 1024>}, {pipeline_mode = #tpu.pipeline_mode<synchronous>, transform_indices = @transform_1, window_bounds = array<i64: 1024, 128>}, {pipeline_mode = #tpu.pipeline_mode<synchronous>, transform_indices = @transform_2, window_bounds = array<i64: 1, 128>}, {transform_indices = @transform_3, window_bounds = array<i64: 32, 128>}]} {
    %c0 = arith.constant 0 : index
    %c0_0 = arith.constant 0 : index
    %0 = vector.load %arg1[%c0, %c0_0] : memref<32x1024xbf16, #tpu.memory_space<vmem>>, vector<32x1024xbf16>
    %c0_1 = arith.constant 0 : index
    %c0_2 = arith.constant 0 : index
    %1 = vector.load %arg2[%c0_1, %c0_2] : memref<1024x128xbf16, #tpu.memory_space<vmem>>, vector<1024x128xbf16>
    %cst = arith.constant dense<0.000000e+00> : vector<32x128xf32>
    %2 = tpu.matmul %0, %1, %cst {dimension_numbers = #tpu.dot_dimension_numbers<[1], [0], [0], [1], [0, 0, 1, 1], [], []>} : vector<32x1024xbf16>, vector<1024x128xbf16>, vector<32x128xf32> -> vector<32x128xf32>
    %c0_3 = arith.constant 0 : index
    %c0_4 = arith.constant 0 : index
    %3 = vector.load %arg3[%c0_3, %c0_4] : memref<1x128xf32, #tpu.memory_space<vmem>>, vector<1x128xf32>
    %4 = vector.broadcast %3 : vector<1x128xf32> to vector<32x128xf32>
    %5 = arith.addf %2, %4 : vector<32x128xf32>
    %cst_5 = arith.constant 0.000000e+00 : f32
    %6 = vector.broadcast %cst_5 : f32 to vector<32x128xf32>
    %7 = arith.cmpf ogt, %5, %6 : vector<32x128xf32>
    %cst_6 = arith.constant 2.000000e-01 : f32
    %8 = vector.broadcast %cst_6 : f32 to vector<32x128xf32>
    %9 = arith.mulf %8, %5 : vector<32x128xf32>
    %10 = arith.select %7, %5, %9 : vector<32x128xi1>, vector<32x128xf32>
    %11 = arith.truncf %10 : vector<32x128xf32> to vector<32x128xbf16>
    %c0_7 = arith.constant 0 : index
    %c0_8 = arith.constant 0 : index
    %12 = vector.load %arg4[%c0_7, %c0_8] : memref<32x128xbf16, #tpu.memory_space<vmem>>, vector<32x128xbf16>
    tpu.vector_store %arg4[%c0_7, %c0_8], %11 {strides = array<i32>} : memref<32x128xbf16, #tpu.memory_space<vmem>>, vector<32x128xbf16>,
    return
  }
  func.func @transform_0(%arg0: i32) -> (i32, i32) {
    %c0_i32 = arith.constant 0 : i32
    %c0_i32_0 = arith.constant 0 : i32
    return %arg0, %c0_i32 : i32, i32
  }
  func.func @transform_1(%arg0: i32) -> (i32, i32) {
    %c0_i32 = arith.constant 0 : i32
    %c0_i32_0 = arith.constant 0 : i32
    %c0_i32_1 = arith.constant 0 : i32
    return %c0_i32, %c0_i32_0 : i32, i32
  }
  func.func @transform_2(%arg0: i32) -> (i32, i32) {
    %c0_i32 = arith.constant 0 : i32
    %c0_i32_0 = arith.constant 0 : i32
    %c0_i32_1 = arith.constant 0 : i32
    return %c0_i32, %c0_i32_0 : i32, i32
  }
  func.func @transform_3(%arg0: i32) -> (i32, i32) {
    %c0_i32 = arith.constant 0 : i32
    %c0_i32_0 = arith.constant 0 : i32
    return %arg0, %c0_i32 : i32, i32
  }
}

module attributes {stable_mosaic.version = 11 : i64} {
  func.func @_conv_mm_kernel(%arg0: i32, %arg1: memref<8x2048xbf16, #tpu.memory_space<vmem>>, %arg2: memref<2048x256xbf16, #tpu.memory_space<vmem>>, %arg3: memref<1x256xf32, #tpu.memory_space<vmem>>, %arg4: memref<8x256xbf16, #tpu.memory_space<vmem>>) attributes {dimension_semantics = [#tpu.dimension_semantics<parallel>], iteration_bounds = array<i64: 1>, scalar_prefetch = 0 : i64, scratch_operands = 0 : i64, tpu.core_type = #tpu.core_type<tc>, window_params = [{transform_indices = @transform_0, window_bounds = array<i64: 8, 2048>}, {pipeline_mode = #tpu.pipeline_mode<synchronous>, transform_indices = @transform_1, window_bounds = array<i64: 2048, 256>}, {pipeline_mode = #tpu.pipeline_mode<synchronous>, transform_indices = @transform_2, window_bounds = array<i64: 1, 256>}, {transform_indices = @transform_3, window_bounds = array<i64: 8, 256>}]} {
    %c0 = arith.constant 0 : index
    %c0_0 = arith.constant 0 : index
    %0 = vector.load %arg1[%c0, %c0_0] : memref<8x2048xbf16, #tpu.memory_space<vmem>>, vector<8x2048xbf16>
    %c0_1 = arith.constant 0 : index
    %c0_2 = arith.constant 0 : index
    %1 = vector.load %arg2[%c0_1, %c0_2] : memref<2048x256xbf16, #tpu.memory_space<vmem>>, vector<2048x256xbf16>
    %cst = arith.constant dense<0.000000e+00> : vector<8x256xf32>
    %2 = tpu.matmul %0, %1, %cst {dimension_numbers = #tpu.dot_dimension_numbers<[1], [0], [0], [1], [0, 0, 1, 1], [], []>} : vector<8x2048xbf16>, vector<2048x256xbf16>, vector<8x256xf32> -> vector<8x256xf32>
    %c0_3 = arith.constant 0 : index
    %c0_4 = arith.constant 0 : index
    %3 = vector.load %arg3[%c0_3, %c0_4] : memref<1x256xf32, #tpu.memory_space<vmem>>, vector<1x256xf32>
    %4 = vector.broadcast %3 : vector<1x256xf32> to vector<8x256xf32>
    %5 = arith.addf %2, %4 : vector<8x256xf32>
    %cst_5 = arith.constant 0.000000e+00 : f32
    %6 = vector.broadcast %cst_5 : f32 to vector<8x256xf32>
    %7 = arith.cmpf ogt, %5, %6 : vector<8x256xf32>
    %cst_6 = arith.constant 2.000000e-01 : f32
    %8 = vector.broadcast %cst_6 : f32 to vector<8x256xf32>
    %9 = arith.mulf %8, %5 : vector<8x256xf32>
    %10 = arith.select %7, %5, %9 : vector<8x256xi1>, vector<8x256xf32>
    %11 = arith.truncf %10 : vector<8x256xf32> to vector<8x256xbf16>
    %c0_7 = arith.constant 0 : index
    %c0_8 = arith.constant 0 : index
    %12 = vector.load %arg4[%c0_7, %c0_8] : memref<8x256xbf16, #tpu.memory_space<vmem>>, vector<8x256xbf16>
    tpu.vector_store %arg4[%c0_7, %c0_8], %11 {strides = array<i32>} : memref<8x256xbf16, #tpu.memory_space<vmem>>, vector<8x256xbf16>,
    return
  }
  func.func @transform_0(%arg0: i32) -> (i32, i32) {
    %c0_i32 = arith.constant 0 : i32
    %c0_i32_0 = arith.constant 0 : i32
    return %arg0, %c0_i32 : i32, i32
  }
  func.func @transform_1(%arg0: i32) -> (i32, i32) {
    %c0_i32 = arith.constant 0 : i32
    %c0_i32_0 = arith.constant 0 : i32
    %c0_i32_1 = arith.constant 0 : i32
    return %c0_i32, %c0_i32_0 : i32, i32
  }
  func.func @transform_2(%arg0: i32) -> (i32, i32) {
    %c0_i32 = arith.constant 0 : i32
    %c0_i32_0 = arith.constant 0 : i32
    %c0_i32_1 = arith.constant 0 : i32
    return %c0_i32, %c0_i32_0 : i32, i32
  }
  func.func @transform_3(%arg0: i32) -> (i32, i32) {
    %c0_i32 = arith.constant 0 : i32
    %c0_i32_0 = arith.constant 0 : i32
    return %arg0, %c0_i32 : i32, i32
  }
}

module attributes {stable_mosaic.version = 11 : i64} {
  func.func @_phi_kernel(%arg0: i32, %arg1: memref<2x1024xbf16, #tpu.memory_space<vmem>>, %arg2: memref<1x1024xf32, #tpu.memory_space<vmem>>, %arg3: memref<1x1xf32, #tpu.memory_space<vmem>>, %arg4: memref<2x1xf32, #tpu.memory_space<vmem>>) attributes {dimension_semantics = [#tpu.dimension_semantics<parallel>], iteration_bounds = array<i64: 1>, scalar_prefetch = 0 : i64, scratch_operands = 0 : i64, tpu.core_type = #tpu.core_type<tc>, window_params = [{transform_indices = @transform_0, window_bounds = array<i64: 2, 1024>}, {pipeline_mode = #tpu.pipeline_mode<synchronous>, transform_indices = @transform_1, window_bounds = array<i64: 1, 1024>}, {pipeline_mode = #tpu.pipeline_mode<synchronous>, transform_indices = @transform_2, window_bounds = array<i64: 1, 1>}, {transform_indices = @transform_3, window_bounds = array<i64: 2, 1>}]} {
    %c0 = arith.constant 0 : index
    %c0_0 = arith.constant 0 : index
    %0 = vector.load %arg1[%c0, %c0_0] : memref<2x1024xbf16, #tpu.memory_space<vmem>>, vector<2x1024xbf16>
    %1 = arith.extf %0 : vector<2x1024xbf16> to vector<2x1024xf32>
    %c0_1 = arith.constant 0 : index
    %c0_2 = arith.constant 0 : index
    %2 = vector.load %arg2[%c0_1, %c0_2] : memref<1x1024xf32, #tpu.memory_space<vmem>>, vector<1x1024xf32>
    %3 = vector.broadcast %2 : vector<1x1024xf32> to vector<2x1024xf32>
    %4 = arith.mulf %1, %3 : vector<2x1024xf32>
    %cst = arith.constant dense<0.000000e+00> : vector<2xf32>
    %5 = vector.multi_reduction <add>, %4, %cst [1] : vector<2x1024xf32> to vector<2xf32>
    %6 = vector.shape_cast %5 : vector<2xf32> to vector<2x1xf32>
    %c0_3 = arith.constant 0 : index
    %c0_4 = arith.constant 0 : index
    %7 = vector.load %arg3[%c0_3, %c0_4] : memref<1x1xf32, #tpu.memory_space<vmem>>, vector<1x1xf32>
    %8 = vector.broadcast %7 : vector<1x1xf32> to vector<2x1xf32>
    %9 = arith.addf %6, %8 : vector<2x1xf32>
    %c0_5 = arith.constant 0 : index
    %c0_6 = arith.constant 0 : index
    %10 = vector.load %arg4[%c0_5, %c0_6] : memref<2x1xf32, #tpu.memory_space<vmem>>, vector<2x1xf32>
    tpu.vector_store %arg4[%c0_5, %c0_6], %9 {strides = array<i32>} : memref<2x1xf32, #tpu.memory_space<vmem>>, vector<2x1xf32>,
    return
  }
  func.func @transform_0(%arg0: i32) -> (i32, i32) {
    %c0_i32 = arith.constant 0 : i32
    %c0_i32_0 = arith.constant 0 : i32
    return %arg0, %c0_i32 : i32, i32
  }
  func.func @transform_1(%arg0: i32) -> (i32, i32) {
    %c0_i32 = arith.constant 0 : i32
    %c0_i32_0 = arith.constant 0 : i32
    %c0_i32_1 = arith.constant 0 : i32
    return %c0_i32, %c0_i32_0 : i32, i32
  }
  func.func @transform_2(%arg0: i32) -> (i32, i32) {
    %c0_i32 = arith.constant 0 : i32
    %c0_i32_0 = arith.constant 0 : i32
    %c0_i32_1 = arith.constant 0 : i32
    return %c0_i32, %c0_i32_0 : i32, i32
  }
  func.func @transform_3(%arg0: i32) -> (i32, i32) {
    %c0_i32 = arith.constant 0 : i32
    %c0_i32_0 = arith.constant 0 : i32
    return %arg0, %c0_i32 : i32, i32
  }
}

</mosaic_0001>

<llo_original>
// kernel: transport_t_forward.5
$region0: #{transport_t_forward.5}
  #allocation0 [shape = 'u32[]', space=smem, size = 0x4, offset = 0x4, fixed_abs, tag = 'smem constant byte address 0x4 - core index']
  #allocation1 [shape = 'u32[144,128]{1,0:T(1,128)}', space=vmem, size = 0x12000, scoped, tag = 'internal scratch']
  %s0 = inlined_call_operand.vmem [shape: bf16[512,48], index: 0, kind: input, shape index: {}]
  %s1 = inlined_call_operand.vmem [shape: bf16[48,32], index: 1, kind: input, shape index: {}]
  %s2 = inlined_call_operand.vmem [shape: f32[1,32], index: 2, kind: input, shape index: {}]
  %s3 = inlined_call_operand.vmem [shape: bf16[512,32], index: 3, kind: output, shape index: {}]
  %s4 = sld [smem:[#allocation0]]
  $region22: #{transport_t_forward.5} parent=0
    _
  %s6 = ssub.s32 1, %s4
  %s7 = scalar_select 0, %s6, %s4
  // Predicated region
  $region2: #{transport_t_forward.5} parent=0 // pred_check
    _
  $region3: #{transport_t_forward.5} parent=0 // pred_check_branch
    %9 = sbr.rel (0) target = $region5
  $region4: #{transport_t_forward.5} parent=0 // pred_region
    _
  $region5: #{transport_t_forward.5} parent=0 // pred_fallthru
    _
  // Predicated region
  $region6: #{transport_t_forward.5} parent=0 // pred_check
    _
  $region7: #{transport_t_forward.5} parent=0 // pred_check_branch
    %11 = sbr.rel (0) target = $region9
  $region8: #{transport_t_forward.5} parent=0 // pred_region
    _
  $region9: #{transport_t_forward.5} parent=0 // pred_fallthru
    _
  // Predicated region
  $region10: #{transport_t_forward.5} parent=0 // pred_check
    _
  $region11: #{transport_t_forward.5} parent=0 // pred_check_branch
    %13 = sbr.rel (0) target = $region13
  $region12: #{transport_t_forward.5} parent=0 // pred_region
    _
  $region13: #{transport_t_forward.5} parent=0 // pred_fallthru
    _
  %v15 = vld [vmem:[%s0] sm:$0xf]
  %v16 = vld [vmem:[%s0 + $0x4] sm:$0xf]
  %v17 = vld [vmem:[%s0 + $0x8] sm:$0xf]
  %v18 = vld [vmem:[%s0 + $0xc] sm:$0xf]
  %v19 = vld [vmem:[%s0 + $0x10] sm:$0xf]
  %v20 = vld [vmem:[%s0 + $0x14] sm:$0xf]
  %v21 = vld [vmem:[%s0 + $0x18] sm:$0xf]
  %v22 = vld [vmem:[%s0 + $0x1c] sm:$0xf]
  %v23 = vld [vmem:[%s0 + $0x20] sm:$0xf]
  %v24 = vld [vmem:[%s0 + $0x24] sm:$0xf]
  %v25 = vld [vmem:[%s0 + $0x28] sm:$0xf]
  %v26 = vld [vmem:[%s0 + $0x2c] sm:$0xf]
  %v27 = vld [vmem:[%s0 + $0x30] sm:$0xf]
  %v28 = vld [vmem:[%s0 + $0x34] sm:$0xf]
  %v29 = vld [vmem:[%s0 + $0x38] sm:$0xf]
  %v30 = vld [vmem:[%s0 + $0x3c] sm:$0xf]
  %v31 = vld [vmem:[%s0 + $0x40] sm:$0xf]
  %v32 = vld [vmem:[%s0 + $0x44] sm:$0xf]
  %v33 = vld [vmem:[%s0 + $0x48] sm:$0xf]
  %v34 = vld [vmem:[%s0 + $0x4c] sm:$0xf]
  %v35 = vld [vmem:[%s0 + $0x50] sm:$0xf]
  %v36 = vld [vmem:[%s0 + $0x54] sm:$0xf]
  %v37 = vld [vmem:[%s0 + $0x58] sm:$0xf]
  %v38 = vld [vmem:[%s0 + $0x5c] sm:$0xf]
  %v39 = vld [vmem:[%s0 + $0x60] sm:$0xf]
  %v40 = vld [vmem:[%s0 + $0x64] sm:$0xf]
  %v41 = vld [vmem:[%s0 + $0x68] sm:$0xf]
  %v42 = vld [vmem:[%s0 + $0x6c] sm:$0xf]
  %v43 = vld [vmem:[%s0 + $0x70] sm:$0xf]
  %v44 = vld [vmem:[%s0 + $0x74] sm:$0xf]
  %v45 = vld [vmem:[%s0 + $0x78] sm:$0xf]
  %v46 = vld [vmem:[%s0 + $0x7c] sm:$0xf]
  %v47 = vld [vmem:[%s0 + $0x80] sm:$0xf]
  %v48 = vld [vmem:[%s0 + $0x84] sm:$0xf]
  %v49 = vld [vmem:[%s0 + $0x88] sm:$0xf]
  %v50 = vld [vmem:[%s0 + $0x8c] sm:$0xf]
  %v51 = vld [vmem:[%s0 + $0x90] sm:$0xf]
  %v52 = vld [vmem:[%s0 + $0x94] sm:$0xf]
  %v53 = vld [vmem:[%s0 + $0x98] sm:$0xf]
  %v54 = vld [vmem:[%s0 + $0x9c] sm:$0xf]
  %v55 = vld [vmem:[%s0 + $0xa0] sm:$0xf]
  %v56 = vld [vmem:[%s0 + $0xa4] sm:$0xf]
  %v57 = vld [vmem:[%s0 + $0xa8] sm:$0xf]
  %v58 = vld [vmem:[%s0 + $0xac] sm:$0xf]
  %v59 = vld [vmem:[%s0 + $0xb0] sm:$0xf]
  %v60 = vld [vmem:[%s0 + $0xb4] sm:$0xf]
  %v61 = vld [vmem:[%s0 + $0xb8] sm:$0xf]
  %v62 = vld [vmem:[%s0 + $0xbc] sm:$0xf]
  %v63 = vld [vmem:[%s0 + $0xc0] sm:$0xf]
  %v64 = vld [vmem:[%s0 + $0xc4] sm:$0xf]
  %v65 = vld [vmem:[%s0 + $0xc8] sm:$0xf]
  %v66 = vld [vmem:[%s0 + $0xcc] sm:$0xf]
  %v67 = vld [vmem:[%s0 + $0xd0] sm:$0xf]
  %v68 = vld [vmem:[%s0 + $0xd4] sm:$0xf]
  %v69 = vld [vmem:[%s0 + $0xd8] sm:$0xf]
  %v70 = vld [vmem:[%s0 + $0xdc] sm:$0xf]
  %v71 = vld [vmem:[%s0 + $0xe0] sm:$0xf]
  %v72 = vld [vmem:[%s0 + $0xe4] sm:$0xf]
  %v73 = vld [vmem:[%s0 + $0xe8] sm:$0xf]
  %v74 = vld [vmem:[%s0 + $0xec] sm:$0xf]
  %v75 = vld [vmem:[%s0 + $0xf0] sm:$0xf]
  %v76 = vld [vmem:[%s0 + $0xf4] sm:$0xf]
  %v77 = vld [vmem:[%s0 + $0xf8] sm:$0xf]
  %v78 = vld [vmem:[%s0 + $0xfc] sm:$0xf]
  %v79 = vld [vmem:[%s1] sm:$0xf]
  %v80 = vld [vmem:[%s1 + $0x4] sm:$0xf]
  %v81 = vld [vmem:[%s1 + $0x8] sm:$0xf]
  %v82 = vld [vmem:[%s1 + $0xc] sm:$0xf]
  %v83 = vld [vmem:[%s1 + $0x10] sm:$0xf]
  %v84 = vld [vmem:[%s1 + $0x14] sm:$0xf]
  %v85 = vld [vmem:[%s2] sm:$0x1]
  %v87 = vlaneseq
  %v88 = vshrl.u32 %v87, 7
  %v89 = vsub.s32 0, %v88
  %v90 = vrot.slane %v85, %v89
  %v156 = vunpack.c.l.b16 %v15
  %v157 = vunpack.c.l.b16 %v16
  %v158 = vunpack.c.l.b16 %v17
  %v159 = vunpack.c.l.b16 %v18
  %v160 = vunpack.c.l.b16 %v19
  %v161 = vunpack.c.l.b16 %v20
  %v162 = vunpack.c.l.b16 %v21
  %v163 = vunpack.c.l.b16 %v22
  %v164 = vunpack.c.l.b16 %v23
  %v165 = vunpack.c.l.b16 %v24
  %v166 = vunpack.c.l.b16 %v25
  %v167 = vunpack.c.l.b16 %v26
  %v168 = vunpack.c.l.b16 %v27
  %v169 = vunpack.c.l.b16 %v28
  %v170 = vunpack.c.l.b16 %v29
  %v171 = vunpack.c.l.b16 %v30
  %v172 = vunpack.c.l.b16 %v31
  %v173 = vunpack.c.l.b16 %v32
  %v174 = vunpack.c.l.b16 %v33
  %v175 = vunpack.c.l.b16 %v34
  %v176 = vunpack.c.l.b16 %v35
  %v177 = vunpack.c.l.b16 %v36
  %v178 = vunpack.c.l.b16 %v37
  %v179 = vunpack.c.l.b16 %v38
  %v180 = vunpack.c.l.b16 %v39
  %v181 = vunpack.c.l.b16 %v40
  %v182 = vunpack.c.l.b16 %v41
  %v183 = vunpack.c.l.b16 %v42
  %v184 = vunpack.c.l.b16 %v43
  %v185 = vunpack.c.l.b16 %v44
  %v186 = vunpack.c.l.b16 %v45
  %v187 = vunpack.c.l.b16 %v46
  %v188 = vunpack.c.l.b16 %v47
  %v189 = vunpack.c.l.b16 %v48
  %v190 = vunpack.c.l.b16 %v49
  %v191 = vunpack.c.l.b16 %v50
  %v192 = vunpack.c.l.b16 %v51
  %v193 = vunpack.c.l.b16 %v52
  %v194 = vunpack.c.l.b16 %v53
  %v195 = vunpack.c.l.b16 %v54
  %v196 = vunpack.c.l.b16 %v55
  %v197 = vunpack.c.l.b16 %v56
  %v198 = vunpack.c.l.b16 %v57
  %v199 = vunpack.c.l.b16 %v58
  %v200 = vunpack.c.l.b16 %v59
  %v201 = vunpack.c.l.b16 %v60
  %v202 = vunpack.c.l.b16 %v61
  %v203 = vunpack.c.l.b16 %v62
  %v204 = vunpack.c.l.b16 %v63
  %v205 = vunpack.c.l.b16 %v64
  %v206 = vunpack.c.l.b16 %v65
  %v207 = vunpack.c.l.b16 %v66
  %v208 = vunpack.c.l.b16 %v67
  %v209 = vunpack.c.l.b16 %v68
  %v210 = vunpack.c.l.b16 %v69
  %v211 = vunpack.c.l.b16 %v70
  %v212 = vunpack.c.l.b16 %v71
  %v213 = vunpack.c.l.b16 %v72
  %v214 = vunpack.c.l.b16 %v73
  %v215 = vunpack.c.l.b16 %v74
  %v216 = vunpack.c.l.b16 %v75
  %v217 = vunpack.c.l.b16 %v76
  %v218 = vunpack.c.l.b16 %v77
  %v219 = vunpack.c.l.b16 %v78
  %v220 = vpack.c.b16 %v157, %v156
  %v221 = vpack.c.b16 %v159, %v158
  %v222 = vpack.c.b16 %v161, %v160
  %v223 = vpack.c.b16 %v163, %v162
  %v224 = vpack.c.b16 %v165, %v164
  %v225 = vpack.c.b16 %v167, %v166
  %v226 = vpack.c.b16 %v169, %v168
  %v227 = vpack.c.b16 %v171, %v170
  %v228 = vpack.c.b16 %v173, %v172
  %v229 = vpack.c.b16 %v175, %v174
  %v230 = vpack.c.b16 %v177, %v176
  %v231 = vpack.c.b16 %v179, %v178
  %v232 = vpack.c.b16 %v181, %v180
  %v233 = vpack.c.b16 %v183, %v182
  %v234 = vpack.c.b16 %v185, %v184
  %v235 = vpack.c.b16 %v187, %v186
  %v236 = vpack.c.b16 %v189, %v188
  %v237 = vpack.c.b16 %v191, %v190
  %v238 = vpack.c.b16 %v193, %v192
  %v239 = vpack.c.b16 %v195, %v194
  %v240 = vpack.c.b16 %v197, %v196
  %v241 = vpack.c.b16 %v199, %v198
  %v242 = vpack.c.b16 %v201, %v200
  %v243 = vpack.c.b16 %v203, %v202
  %v244 = vpack.c.b16 %v205, %v204
  %v245 = vpack.c.b16 %v207, %v206
  %v246 = vpack.c.b16 %v209, %v208
  %v247 = vpack.c.b16 %v211, %v210
  %v248 = vpack.c.b16 %v213, %v212
  %v249 = vpack.c.b16 %v215, %v214
  %v250 = vpack.c.b16 %v217, %v216
  %v251 = vpack.c.b16 %v219, %v218
  %v258 = vunpack.c.l.b16 %v79
  %v259 = vunpack.c.l.b16 %v80
  %v260 = vunpack.c.l.b16 %v81
  %v261 = vunpack.c.l.b16 %v82
  %v262 = vunpack.c.l.b16 %v83
  %v263 = vunpack.c.l.b16 %v84
  %v264 = vpack.c.b16 %v259, %v258
  %v265 = vpack.c.b16 %v261, %v260
  %v266 = vpack.c.b16 %v263, %v262
  %vm270 = vcmask 392192
  %v272 = vsel %vm270, %v220, 0
  %v275 = vsel %vm270, %v221, 0
  %v278 = vsel %vm270, %v222, 0
  %v281 = vsel %vm270, %v223, 0
  %v284 = vsel %vm270, %v224, 0
  %v287 = vsel %vm270, %v225, 0
  %v290 = vsel %vm270, %v226, 0
  %v293 = vsel %vm270, %v227, 0
  %v296 = vsel %vm270, %v228, 0
  %v299 = vsel %vm270, %v229, 0
  %v302 = vsel %vm270, %v230, 0
  %v305 = vsel %vm270, %v231, 0
  %v308 = vsel %vm270, %v232, 0
  %v311 = vsel %vm270, %v233, 0
  %v314 = vsel %vm270, %v234, 0
  %v317 = vsel %vm270, %v235, 0
  %v320 = vsel %vm270, %v236, 0
  %v323 = vsel %vm270, %v237, 0
  %v326 = vsel %vm270, %v238, 0
  %v329 = vsel %vm270, %v239, 0
  %v332 = vsel %vm270, %v240, 0
  %v335 = vsel %vm270, %v241, 0
  %v338 = vsel %vm270, %v242, 0
  %v341 = vsel %vm270, %v243, 0
  %v344 = vsel %vm270, %v244, 0
  %v347 = vsel %vm270, %v245, 0
  %v350 = vsel %vm270, %v246, 0
  %v353 = vsel %vm270, %v247, 0
  %v356 = vsel %vm270, %v248, 0
  %v359 = vsel %vm270, %v249, 0
  %v362 = vsel %vm270, %v250, 0
  %v365 = vsel %vm270, %v251, 0
  %367 = vmatprep.subr.bf16.mxu0 0
  %368 = vmatpush1.bf16.msra.mxu0 0
  %369 = vmatprep.subr.bf16.mxu0 0
  %370 = vmatpush1.bf16.msra.mxu0 0
  %371 = vmatprep.subr.bf16.mxu0 0
  %372 = vmatpush1.bf16.msra.mxu0 0
  %373 = vmatprep.subr.bf16.mxu0 0
  %374 = vmatpush1.bf16.msra.mxu0 0
  %375 = vmatprep.subr.bf16.mxu0 0
  %376 = vmatpush1.bf16.msra.mxu0 0
  %377 = vmatprep.subr.bf16.mxu0 0
  %378 = vmatpush1.bf16.msra.mxu0 %v266
  %379 = vmatprep.subr.bf16.mxu0 0
  %380 = vmatpush1.bf16.msra.mxu0 %v265
  %381 = vmatprep.subr.bf16.mxu0 0
  %382 = vmatpush1.bf16.msra.mxu0 %v264
  %383 = vmatprep.subr.bf16.mxu0 0
  %384 = vmatpush2.bf16.msra.mxu0 0
  %385 = vmatprep.subr.bf16.mxu0 0
  %386 = vmatpush2.bf16.msra.mxu0 0
  %387 = vmatprep.subr.bf16.mxu0 0
  %388 = vmatpush2.bf16.msra.mxu0 0
  %389 = vmatprep.subr.bf16.mxu0 0
  %390 = vmatpush2.bf16.msra.mxu0 0
  %391 = vmatprep.subr.bf16.mxu0 0
  %392 = vmatpush2.bf16.msra.mxu0 0
  %393 = vmatprep.subr.bf16.mxu0 0
  %394 = vmatpush2.bf16.msra.mxu0 0
  %395 = vmatprep.subr.bf16.mxu0 0
  %396 = vmatpush2.bf16.msra.mxu0 0
  %397 = vmatprep.subr.bf16.mxu0 0
  %398 = vmatpush2.bf16.msra.mxu0 0
  %399 = vmatprep.mubr.bf16.mxu0 0
  %400 = vmatmul.mubr.bf16.gmra.mxu0 %v272
  %v401 = vpop.f32.mrf.mxu0
  %v402 = vadd.f32 %v90, %v401
  %v403 = vpop.f32.mrf.mxu0
  %v404 = vpop.f32.mrf.mxu0
  %v405 = vadd.f32 %v90, %v404
  %v406 = vpop.f32.mrf.mxu0
  %407 = vmatprep.mubr.bf16.mxu0 0
  %408 = vmatmul.mubr.bf16.gmra.mxu0 %v275
  %v409 = vpop.f32.mrf.mxu0
  %v410 = vadd.f32 %v90, %v409
  %v411 = vpop.f32.mrf.mxu0
  %v412 = vpop.f32.mrf.mxu0
  %v413 = vadd.f32 %v90, %v412
  %v414 = vpop.f32.mrf.mxu0
  %415 = vmatprep.mubr.bf16.mxu0 0
  %416 = vmatmul.mubr.bf16.gmra.mxu0 %v278
  %v417 = vpop.f32.mrf.mxu0
  %v418 = vadd.f32 %v90, %v417
  %v419 = vpop.f32.mrf.mxu0
  %v420 = vpop.f32.mrf.mxu0
  %v421 = vadd.f32 %v90, %v420
  %v422 = vpop.f32.mrf.mxu0
  %423 = vmatprep.mubr.bf16.mxu0 0
  %424 = vmatmul.mubr.bf16.gmra.mxu0 %v281
  %v425 = vpop.f32.mrf.mxu0
  %v426 = vadd.f32 %v90, %v425
  %v427 = vpop.f32.mrf.mxu0
  %v428 = vpop.f32.mrf.mxu0
  %v429 = vadd.f32 %v90, %v428
  %v430 = vpop.f32.mrf.mxu0
  %431 = vmatprep.mubr.bf16.mxu0 0
  %432 = vmatmul.mubr.bf16.gmra.mxu0 %v284
  %v433 = vpop.f32.mrf.mxu0
  %v434 = vadd.f32 %v90, %v433
  %v435 = vpop.f32.mrf.mxu0
  %v436 = vpop.f32.mrf.mxu0
  %v437 = vadd.f32 %v90, %v436
  %v438 = vpop.f32.mrf.mxu0
  %439 = vmatprep.mubr.bf16.mxu0 0
  %440 = vmatmul.mubr.bf16.gmra.mxu0 %v287
  %v441 = vpop.f32.mrf.mxu0
  %v442 = vadd.f32 %v90, %v441
  %v443 = vpop.f32.mrf.mxu0
  %v444 = vpop.f32.mrf.mxu0
  %v445 = vadd.f32 %v90, %v444
  %v446 = vpop.f32.mrf.mxu0
  %447 = vmatprep.mubr.bf16.mxu0 0
  %448 = vmatmul.mubr.bf16.gmra.mxu0 %v290
  %v449 = vpop.f32.mrf.mxu0
  %v450 = vadd.f32 %v90, %v449
  %v451 = vpop.f32.mrf.mxu0
  %v452 = vpop.f32.mrf.mxu0
  %v453 = vadd.f32 %v90, %v452
  %v454 = vpop.f32.mrf.mxu0
  %455 = vmatprep.mubr.bf16.mxu0 0
  %456 = vmatmul.mubr.bf16.gmra.mxu0 %v293
  %v457 = vpop.f32.mrf.mxu0
  %v458 = vadd.f32 %v90, %v457
  %v459 = vpop.f32.mrf.mxu0
  %v460 = vpop.f32.mrf.mxu0
  %v461 = vadd.f32 %v90, %v460
  %v462 = vpop.f32.mrf.mxu0
  %463 = vmatprep.mubr.bf16.mxu0 0
  %464 = vmatmul.mubr.bf16.gmra.mxu0 %v296
  %v465 = vpop.f32.mrf.mxu0
  %v466 = vadd.f32 %v90, %v465
  %v467 = vpop.f32.mrf.mxu0
  %v468 = vpop.f32.mrf.mxu0
  %v469 = vadd.f32 %v90, %v468
  %v470 = vpop.f32.mrf.mxu0
  %471 = vmatprep.mubr.bf16.mxu0 0
  %472 = vmatmul.mubr.bf16.gmra.mxu0 %v299
  %v473 = vpop.f32.mrf.mxu0
  %v474 = vadd.f32 %v90, %v473
  %v475 = vpop.f32.mrf.mxu0
  %v476 = vpop.f32.mrf.mxu0
  %v477 = vadd.f32 %v90, %v476
  %v478 = vpop.f32.mrf.mxu0
  %479 = vmatprep.mubr.bf16.mxu0 0
  %480 = vmatmul.mubr.bf16.gmra.mxu0 %v302
  %v481 = vpop.f32.mrf.mxu0
  %v482 = vadd.f32 %v90, %v481
  %v483 = vpop.f32.mrf.mxu0
  %v484 = vpop.f32.mrf.mxu0
  %v485 = vadd.f32 %v90, %v484
  %v486 = vpop.f32.mrf.mxu0
  %487 = vmatprep.mubr.bf16.mxu0 0
  %488 = vmatmul.mubr.bf16.gmra.mxu0 %v305
  %v489 = vpop.f32.mrf.mxu0
  %v490 = vadd.f32 %v90, %v489
  %v491 = vpop.f32.mrf.mxu0
  %v492 = vpop.f32.mrf.mxu0
  %v493 = vadd.f32 %v90, %v492
  %v494 = vpop.f32.mrf.mxu0
  %495 = vmatprep.mubr.bf16.mxu0 0
  %496 = vmatmul.mubr.bf16.gmra.mxu0 %v308
  %v497 = vpop.f32.mrf.mxu0
  %v498 = vadd.f32 %v90, %v497
  %v499 = vpop.f32.mrf.mxu0
  %v500 = vpop.f32.mrf.mxu0
  %v501 = vadd.f32 %v90, %v500
  %v502 = vpop.f32.mrf.mxu0
  %503 = vmatprep.mubr.bf16.mxu0 0
  %504 = vmatmul.mubr.bf16.gmra.mxu0 %v311
  %v505 = vpop.f32.mrf.mxu0
  %v506 = vadd.f32 %v90, %v505
  %v507 = vpop.f32.mrf.mxu0
  %v508 = vpop.f32.mrf.mxu0
  %v509 = vadd.f32 %v90, %v508
  %v510 = vpop.f32.mrf.mxu0
  %511 = vmatprep.mubr.bf16.mxu0 0
  %512 = vmatmul.mubr.bf16.gmra.mxu0 %v314
  %v513 = vpop.f32.mrf.mxu0
  %v514 = vadd.f32 %v90, %v513
  %v515 = vpop.f32.mrf.mxu0
  %v516 = vpop.f32.mrf.mxu0
  %v517 = vadd.f32 %v90, %v516
  %v518 = vpop.f32.mrf.mxu0
  %519 = vmatprep.mubr.bf16.mxu0 0
  %520 = vmatmul.mubr.bf16.gmra.mxu0 %v317
  %v521 = vpop.f32.mrf.mxu0
  %v522 = vadd.f32 %v90, %v521
  %v523 = vpop.f32.mrf.mxu0
  %v524 = vpop.f32.mrf.mxu0
  %v525 = vadd.f32 %v90, %v524
  %v526 = vpop.f32.mrf.mxu0
  %527 = vmatprep.mubr.bf16.mxu0 0
  %528 = vmatmul.mubr.bf16.gmra.mxu0 %v320
  %v529 = vpop.f32.mrf.mxu0
  %v530 = vadd.f32 %v90, %v529
  %v531 = vpop.f32.mrf.mxu0
  %v532 = vpop.f32.mrf.mxu0
  %v533 = vadd.f32 %v90, %v532
  %v534 = vpop.f32.mrf.mxu0
  %535 = vmatprep.mubr.bf16.mxu0 0
  %536 = vmatmul.mubr.bf16.gmra.mxu0 %v323
  %v537 = vpop.f32.mrf.mxu0
  %v538 = vadd.f32 %v90, %v537
  %v539 = vpop.f32.mrf.mxu0
  %v540 = vpop.f32.mrf.mxu0
  %v541 = vadd.f32 %v90, %v540
  %v542 = vpop.f32.mrf.mxu0
  %543 = vmatprep.mubr.bf16.mxu0 0
  %544 = vmatmul.mubr.bf16.gmra.mxu0 %v326
  %v545 = vpop.f32.mrf.mxu0
  %v546 = vadd.f32 %v90, %v545
  %v547 = vpop.f32.mrf.mxu0
  %v548 = vpop.f32.mrf.mxu0
  %v549 = vadd.f32 %v90, %v548
  %v550 = vpop.f32.mrf.mxu0
  %551 = vmatprep.mubr.bf16.mxu0 0
  %552 = vmatmul.mubr.bf16.gmra.mxu0 %v329
  %v553 = vpop.f32.mrf.mxu0
  %v554 = vadd.f32 %v90, %v553
  %v555 = vpop.f32.mrf.mxu0
  %v556 = vpop.f32.mrf.mxu0
  %v557 = vadd.f32 %v90, %v556
  %v558 = vpop.f32.mrf.mxu0
  %559 = vmatprep.mubr.bf16.mxu0 0
  %560 = vmatmul.mubr.bf16.gmra.mxu0 %v332
  %v561 = vpop.f32.mrf.mxu0
  %v562 = vadd.f32 %v90, %v561
  %v563 = vpop.f32.mrf.mxu0
  %v564 = vpop.f32.mrf.mxu0
  %v565 = vadd.f32 %v90, %v564
  %v566 = vpop.f32.mrf.mxu0
  %567 = vmatprep.mubr.bf16.mxu0 0
  %568 = vmatmul.mubr.bf16.gmra.mxu0 %v335
  %v569 = vpop.f32.mrf.mxu0
  %v570 = vadd.f32 %v90, %v569
  %v571 = vpop.f32.mrf.mxu0
  %v572 = vpop.f32.mrf.mxu0
  %v573 = vadd.f32 %v90, %v572
  %v574 = vpop.f32.mrf.mxu0
  %575 = vmatprep.mubr.bf16.mxu0 0
  %576 = vmatmul.mubr.bf16.gmra.mxu0 %v338
  %v577 = vpop.f32.mrf.mxu0
  %v578 = vadd.f32 %v90, %v577
  %v579 = vpop.f32.mrf.mxu0
  %v580 = vpop.f32.mrf.mxu0
  %v581 = vadd.f32 %v90, %v580
  %v582 = vpop.f32.mrf.mxu0
  %583 = vmatprep.mubr.bf16.mxu0 0
  %584 = vmatmul.mubr.bf16.gmra.mxu0 %v341
  %v585 = vpop.f32.mrf.mxu0
  %v586 = vadd.f32 %v90, %v585
  %v587 = vpop.f32.mrf.mxu0
  %v588 = vpop.f32.mrf.mxu0
  %v589 = vadd.f32 %v90, %v588
  %v590 = vpop.f32.mrf.mxu0
  %591 = vmatprep.mubr.bf16.mxu0 0
  %592 = vmatmul.mubr.bf16.gmra.mxu0 %v344
  %v593 = vpop.f32.mrf.mxu0
  %v594 = vadd.f32 %v90, %v593
  %v595 = vpop.f32.mrf.mxu0
  %v596 = vpop.f32.mrf.mxu0
  %v597 = vadd.f32 %v90, %v596
  %v598 = vpop.f32.mrf.mxu0
  %599 = vmatprep.mubr.bf16.mxu0 0
  %600 = vmatmul.mubr.bf16.gmra.mxu0 %v347
  %v601 = vpop.f32.mrf.mxu0
  %v602 = vadd.f32 %v90, %v601
  %v603 = vpop.f32.mrf.mxu0
  %v604 = vpop.f32.mrf.mxu0
  %v605 = vadd.f32 %v90, %v604
  %v606 = vpop.f32.mrf.mxu0
  %607 = vmatprep.mubr.bf16.mxu0 0
  %608 = vmatmul.mubr.bf16.gmra.mxu0 %v350
  %v609 = vpop.f32.mrf.mxu0
  %v610 = vadd.f32 %v90, %v609
  %v611 = vpop.f32.mrf.mxu0
  %v612 = vpop.f32.mrf.mxu0
  %v613 = vadd.f32 %v90, %v612
  %v614 = vpop.f32.mrf.mxu0
  %615 = vmatprep.mubr.bf16.mxu0 0
  %616 = vmatmul.mubr.bf16.gmra.mxu0 %v353
  %v617 = vpop.f32.mrf.mxu0
  %v618 = vadd.f32 %v90, %v617
  %v619 = vpop.f32.mrf.mxu0
  %v620 = vpop.f32.mrf.mxu0
  %v621 = vadd.f32 %v90, %v620
  %v622 = vpop.f32.mrf.mxu0
  %623 = vmatprep.mubr.bf16.mxu0 0
  %624 = vmatmul.mubr.bf16.gmra.mxu0 %v356
  %v625 = vpop.f32.mrf.mxu0
  %v626 = vadd.f32 %v90, %v625
  %v627 = vpop.f32.mrf.mxu0
  %v628 = vpop.f32.mrf.mxu0
  %v629 = vadd.f32 %v90, %v628
  %v630 = vpop.f32.mrf.mxu0
  %631 = vmatprep.mubr.bf16.mxu0 0
  %632 = vmatmul.mubr.bf16.gmra.mxu0 %v359
  %v633 = vpop.f32.mrf.mxu0
  %v634 = vadd.f32 %v90, %v633
  %v635 = vpop.f32.mrf.mxu0
  %v636 = vpop.f32.mrf.mxu0
  %v637 = vadd.f32 %v90, %v636
  %v638 = vpop.f32.mrf.mxu0
  %639 = vmatprep.mubr.bf16.mxu0 0
  %640 = vmatmul.mubr.bf16.gmra.mxu0 %v362
  %v641 = vpop.f32.mrf.mxu0
  %v642 = vadd.f32 %v90, %v641
  %v643 = vpop.f32.mrf.mxu0
  %v644 = vpop.f32.mrf.mxu0
  %v645 = vadd.f32 %v90, %v644
  %v646 = vpop.f32.mrf.mxu0
  %647 = vmatprep.mubr.bf16.mxu0 0
  %648 = vmatmul.mubr.bf16.gmra.mxu0 %v365
  %v649 = vpop.f32.mrf.mxu0
  %v650 = vadd.f32 %v90, %v649
  %v651 = vpop.f32.mrf.mxu0
  %v652 = vpop.f32.mrf.mxu0
  %v653 = vadd.f32 %v90, %v652
  %v654 = vpop.f32.mrf.mxu0
  %655 = vdwg.mxu0
  %vm656 = vcmp.gt.f32.partialorder %v402, 0.0
  %vm657 = vcmp.gt.f32.partialorder %v405, 0.0
  %vm658 = vcmp.gt.f32.partialorder %v410, 0.0
  %vm659 = vcmp.gt.f32.partialorder %v413, 0.0
  %vm660 = vcmp.gt.f32.partialorder %v418, 0.0
  %vm661 = vcmp.gt.f32.partialorder %v421, 0.0
  %vm662 = vcmp.gt.f32.partialorder %v426, 0.0
  %vm663 = vcmp.gt.f32.partialorder %v429, 0.0
  %vm664 = vcmp.gt.f32.partialorder %v434, 0.0
  %vm665 = vcmp.gt.f32.partialorder %v437, 0.0
  %vm666 = vcmp.gt.f32.partialorder %v442, 0.0
  %vm667 = vcmp.gt.f32.partialorder %v445, 0.0
  %vm668 = vcmp.gt.f32.partialorder %v450, 0.0
  %vm669 = vcmp.gt.f32.partialorder %v453, 0.0
  %vm670 = vcmp.gt.f32.partialorder %v458, 0.0
  %vm671 = vcmp.gt.f32.partialorder %v461, 0.0
  %vm672 = vcmp.gt.f32.partialorder %v466, 0.0
  %vm673 = vcmp.gt.f32.partialorder %v469, 0.0
  %vm674 = vcmp.gt.f32.partialorder %v474, 0.0
  %vm675 = vcmp.gt.f32.partialorder %v477, 0.0
  %vm676 = vcmp.gt.f32.partialorder %v482, 0.0
  %vm677 = vcmp.gt.f32.partialorder %v485, 0.0
  %vm678 = vcmp.gt.f32.partialorder %v490, 0.0
  %vm679 = vcmp.gt.f32.partialorder %v493, 0.0
  %vm680 = vcmp.gt.f32.partialorder %v498, 0.0
  %vm681 = vcmp.gt.f32.partialorder %v501, 0.0
  %vm682 = vcmp.gt.f32.partialorder %v506, 0.0
  %vm683 = vcmp.gt.f32.partialorder %v509, 0.0
  %vm684 = vcmp.gt.f32.partialorder %v514, 0.0
  %vm685 = vcmp.gt.f32.partialorder %v517, 0.0
  %vm686 = vcmp.gt.f32.partialorder %v522, 0.0
  %vm687 = vcmp.gt.f32.partialorder %v525, 0.0
  %vm688 = vcmp.gt.f32.partialorder %v530, 0.0
  %vm689 = vcmp.gt.f32.partialorder %v533, 0.0
  %vm690 = vcmp.gt.f32.partialorder %v538, 0.0
  %vm691 = vcmp.gt.f32.partialorder %v541, 0.0
  %vm692 = vcmp.gt.f32.partialorder %v546, 0.0
  %vm693 = vcmp.gt.f32.partialorder %v549, 0.0
  %vm694 = vcmp.gt.f32.partialorder %v554, 0.0
  %vm695 = vcmp.gt.f32.partialorder %v557, 0.0
  %vm696 = vcmp.gt.f32.partialorder %v562, 0.0
  %vm697 = vcmp.gt.f32.partialorder %v565, 0.0
  %vm698 = vcmp.gt.f32.partialorder %v570, 0.0
  %vm699 = vcmp.gt.f32.partialorder %v573, 0.0
  %vm700 = vcmp.gt.f32.partialorder %v578, 0.0
  %vm701 = vcmp.gt.f32.partialorder %v581, 0.0
  %vm702 = vcmp.gt.f32.partialorder %v586, 0.0
  %vm703 = vcmp.gt.f32.partialorder %v589, 0.0
  %vm704 = vcmp.gt.f32.partialorder %v594, 0.0
  %vm705 = vcmp.gt.f32.partialorder %v597, 0.0
  %vm706 = vcmp.gt.f32.partialorder %v602, 0.0
  %vm707 = vcmp.gt.f32.partialorder %v605, 0.0
  %vm708 = vcmp.gt.f32.partialorder %v610, 0.0
  %vm709 = vcmp.gt.f32.partialorder %v613, 0.0
  %vm710 = vcmp.gt.f32.partialorder %v618, 0.0
  %vm711 = vcmp.gt.f32.partialorder %v621, 0.0
  %vm712 = vcmp.gt.f32.partialorder %v626, 0.0
  %vm713 = vcmp.gt.f32.partialorder %v629, 0.0
  %vm714 = vcmp.gt.f32.partialorder %v634, 0.0
  %vm715 = vcmp.gt.f32.partialorder %v637, 0.0
  %vm716 = vcmp.gt.f32.partialorder %v642, 0.0
  %vm717 = vcmp.gt.f32.partialorder %v645, 0.0
  %vm718 = vcmp.gt.f32.partialorder %v650, 0.0
  %vm719 = vcmp.gt.f32.partialorder %v653, 0.0
  %v720 = vmul.f32 %v402, 0.2
  %v721 = vmul.f32 %v405, 0.2
  %v722 = vmul.f32 %v410, 0.2
  %v723 = vmul.f32 %v413, 0.2
  %v724 = vmul.f32 %v418, 0.2
  %v725 = vmul.f32 %v421, 0.2
  %v726 = vmul.f32 %v426, 0.2
  %v727 = vmul.f32 %v429, 0.2
  %v728 = vmul.f32 %v434, 0.2
  %v729 = vmul.f32 %v437, 0.2
  %v730 = vmul.f32 %v442, 0.2
  %v731 = vmul.f32 %v445, 0.2
  %v732 = vmul.f32 %v450, 0.2
  %v733 = vmul.f32 %v453, 0.2
  %v734 = vmul.f32 %v458, 0.2
  %v735 = vmul.f32 %v461, 0.2
  %v736 = vmul.f32 %v466, 0.2
  %v737 = vmul.f32 %v469, 0.2
  %v738 = vmul.f32 %v474, 0.2
  %v739 = vmul.f32 %v477, 0.2
  %v740 = vmul.f32 %v482, 0.2
  %v741 = vmul.f32 %v485, 0.2
  %v742 = vmul.f32 %v490, 0.2
  %v743 = vmul.f32 %v493, 0.2
  %v744 = vmul.f32 %v498, 0.2
  %v745 = vmul.f32 %v501, 0.2
  %v746 = vmul.f32 %v506, 0.2
  %v747 = vmul.f32 %v509, 0.2
  %v748 = vmul.f32 %v514, 0.2
  %v749 = vmul.f32 %v517, 0.2
  %v750 = vmul.f32 %v522, 0.2
  %v751 = vmul.f32 %v525, 0.2
  %v752 = vmul.f32 %v530, 0.2
  %v753 = vmul.f32 %v533, 0.2
  %v754 = vmul.f32 %v538, 0.2
  %v755 = vmul.f32 %v541, 0.2
  %v756 = vmul.f32 %v546, 0.2
  %v757 = vmul.f32 %v549, 0.2
  %v758 = vmul.f32 %v554, 0.2
  %v759 = vmul.f32 %v557, 0.2
  %v760 = vmul.f32 %v562, 0.2
  %v761 = vmul.f32 %v565, 0.2
  %v762 = vmul.f32 %v570, 0.2
  %v763 = vmul.f32 %v573, 0.2
  %v764 = vmul.f32 %v578, 0.2
  %v765 = vmul.f32 %v581, 0.2
  %v766 = vmul.f32 %v586, 0.2
  %v767 = vmul.f32 %v589, 0.2
  %v768 = vmul.f32 %v594, 0.2
  %v769 = vmul.f32 %v597, 0.2
  %v770 = vmul.f32 %v602, 0.2
  %v771 = vmul.f32 %v605, 0.2
  %v772 = vmul.f32 %v610, 0.2
  %v773 = vmul.f32 %v613, 0.2
  %v774 = vmul.f32 %v618, 0.2
  %v775 = vmul.f32 %v621, 0.2
  %v776 = vmul.f32 %v626, 0.2
  %v777 = vmul.f32 %v629, 0.2
  %v778 = vmul.f32 %v634, 0.2
  %v779 = vmul.f32 %v637, 0.2
  %v780 = vmul.f32 %v642, 0.2
  %v781 = vmul.f32 %v645, 0.2
  %v782 = vmul.f32 %v650, 0.2
  %v783 = vmul.f32 %v653, 0.2
  %v784 = vsel %vm656, %v402, %v720
  %v785 = vsel %vm657, %v405, %v721
  %v786 = vsel %vm658, %v410, %v722
  %v787 = vsel %vm659, %v413, %v723
  %v788 = vsel %vm660, %v418, %v724
  %v789 = vsel %vm661, %v421, %v725
  %v790 = vsel %vm662, %v426, %v726
  %v791 = vsel %vm663, %v429, %v727
  %v792 = vsel %vm664, %v434, %v728
  %v793 = vsel %vm665, %v437, %v729
  %v794 = vsel %vm666, %v442, %v730
  %v795 = vsel %vm667, %v445, %v731
  %v796 = vsel %vm668, %v450, %v732
  %v797 = vsel %vm669, %v453, %v733
  %v798 = vsel %vm670, %v458, %v734
  %v799 = vsel %vm671, %v461, %v735
  %v800 = vsel %vm672, %v466, %v736
  %v801 = vsel %vm673, %v469, %v737
  %v802 = vsel %vm674, %v474, %v738
  %v803 = vsel %vm675, %v477, %v739
  %v804 = vsel %vm676, %v482, %v740
  %v805 = vsel %vm677, %v485, %v741
  %v806 = vsel %vm678, %v490, %v742
  %v807 = vsel %vm679, %v493, %v743
  %v808 = vsel %vm680, %v498, %v744
  %v809 = vsel %vm681, %v501, %v745
  %v810 = vsel %vm682, %v506, %v746
  %v811 = vsel %vm683, %v509, %v747
  %v812 = vsel %vm684, %v514, %v748
  %v813 = vsel %vm685, %v517, %v749
  %v814 = vsel %vm686, %v522, %v750
  %v815 = vsel %vm687, %v525, %v751
  %v816 = vsel %vm688, %v530, %v752
  %v817 = vsel %vm689, %v533, %v753
  %v818 = vsel %vm690, %v538, %v754
  %v819 = vsel %vm691, %v541, %v755
  %v820 = vsel %vm692, %v546, %v756
  %v821 = vsel %vm693, %v549, %v757
  %v822 = vsel %vm694, %v554, %v758
  %v823 = vsel %vm695, %v557, %v759
  %v824 = vsel %vm696, %v562, %v760
  %v825 = vsel %vm697, %v565, %v761
  %v826 = vsel %vm698, %v570, %v762
  %v827 = vsel %vm699, %v573, %v763
  %v828 = vsel %vm700, %v578, %v764
  %v829 = vsel %vm701, %v581, %v765
  %v830 = vsel %vm702, %v586, %v766
  %v831 = vsel %vm703, %v589, %v767
  %v832 = vsel %vm704, %v594, %v768
  %v833 = vsel %vm705, %v597, %v769
  %v834 = vsel %vm706, %v602, %v770
  %v835 = vsel %vm707, %v605, %v771
  %v836 = vsel %vm708, %v610, %v772
  %v837 = vsel %vm709, %v613, %v773
  %v838 = vsel %vm710, %v618, %v774
  %v839 = vsel %vm711, %v621, %v775
  %v840 = vsel %vm712, %v626, %v776
  %v841 = vsel %vm713, %v629, %v777
  %v842 = vsel %vm714, %v634, %v778
  %v843 = vsel %vm715, %v637, %v779
  %v844 = vsel %vm716, %v642, %v780
  %v845 = vsel %vm717, %v645, %v781
  %v846 = vsel %vm718, %v650, %v782
  %v847 = vsel %vm719, %v653, %v783
  %v848 = vpack.c.bf16 %v785, %v784
  %v849 = vpack.c.bf16 %v787, %v786
  %v850 = vpack.c.bf16 %v789, %v788
  %v851 = vpack.c.bf16 %v791, %v790
  %v852 = vpack.c.bf16 %v793, %v792
  %v853 = vpack.c.bf16 %v795, %v794
  %v854 = vpack.c.bf16 %v797, %v796
  %v855 = vpack.c.bf16 %v799, %v798
  %v856 = vpack.c.bf16 %v801, %v800
  %v857 = vpack.c.bf16 %v803, %v802
  %v858 = vpack.c.bf16 %v805, %v804
  %v859 = vpack.c.bf16 %v807, %v806
  %v860 = vpack.c.bf16 %v809, %v808
  %v861 = vpack.c.bf16 %v811, %v810
  %v862 = vpack.c.bf16 %v813, %v812
  %v863 = vpack.c.bf16 %v815, %v814
  %v864 = vpack.c.bf16 %v817, %v816
  %v865 = vpack.c.bf16 %v819, %v818
  %v866 = vpack.c.bf16 %v821, %v820
  %v867 = vpack.c.bf16 %v823, %v822
  %v868 = vpack.c.bf16 %v825, %v824
  %v869 = vpack.c.bf16 %v827, %v826
  %v870 = vpack.c.bf16 %v829, %v828
  %v871 = vpack.c.bf16 %v831, %v830
  %v872 = vpack.c.bf16 %v833, %v832
  %v873 = vpack.c.bf16 %v835, %v834
  %v874 = vpack.c.bf16 %v837, %v836
  %v875 = vpack.c.bf16 %v839, %v838
  %v876 = vpack.c.bf16 %v841, %v840
  %v877 = vpack.c.bf16 %v843, %v842
  %v878 = vpack.c.bf16 %v845, %v844
  %v879 = vpack.c.bf16 %v847, %v846
  %v912 = vunpack.c.l.b16 %v848
  %v913 = vunpack.c.h.b16 %v848
  %v914 = vunpack.c.l.b16 %v849
  %v915 = vunpack.c.h.b16 %v849
  %v916 = vunpack.c.l.b16 %v850
  %v917 = vunpack.c.h.b16 %v850
  %v918 = vunpack.c.l.b16 %v851
  %v919 = vunpack.c.h.b16 %v851
  %v920 = vunpack.c.l.b16 %v852
  %v921 = vunpack.c.h.b16 %v852
  %v922 = vunpack.c.l.b16 %v853
  %v923 = vunpack.c.h.b16 %v853
  %v924 = vunpack.c.l.b16 %v854
  %v925 = vunpack.c.h.b16 %v854
  %v926 = vunpack.c.l.b16 %v855
  %v927 = vunpack.c.h.b16 %v855
  %v928 = vunpack.c.l.b16 %v856
  %v929 = vunpack.c.h.b16 %v856
  %v930 = vunpack.c.l.b16 %v857
  %v931 = vunpack.c.h.b16 %v857
  %v932 = vunpack.c.l.b16 %v858
  %v933 = vunpack.c.h.b16 %v858
  %v934 = vunpack.c.l.b16 %v859
  %v935 = vunpack.c.h.b16 %v859
  %v936 = vunpack.c.l.b16 %v860
  %v937 = vunpack.c.h.b16 %v860
  %v938 = vunpack.c.l.b16 %v861
  %v939 = vunpack.c.h.b16 %v861
  %v940 = vunpack.c.l.b16 %v862
  %v941 = vunpack.c.h.b16 %v862
  %v942 = vunpack.c.l.b16 %v863
  %v943 = vunpack.c.h.b16 %v863
  %v944 = vunpack.c.l.b16 %v864
  %v945 = vunpack.c.h.b16 %v864
  %v946 = vunpack.c.l.b16 %v865
  %v947 = vunpack.c.h.b16 %v865
  %v948 = vunpack.c.l.b16 %v866
  %v949 = vunpack.c.h.b16 %v866
  %v950 = vunpack.c.l.b16 %v867
  %v951 = vunpack.c.h.b16 %v867
  %v952 = vunpack.c.l.b16 %v868
  %v953 = vunpack.c.h.b16 %v868
  %v954 = vunpack.c.l.b16 %v869
  %v955 = vunpack.c.h.b16 %v869
  %v956 = vunpack.c.l.b16 %v870
  %v957 = vunpack.c.h.b16 %v870
  %v958 = vunpack.c.l.b16 %v871
  %v959 = vunpack.c.h.b16 %v871
  %v960 = vunpack.c.l.b16 %v872
  %v961 = vunpack.c.h.b16 %v872
  %v962 = vunpack.c.l.b16 %v873
  %v963 = vunpack.c.h.b16 %v873
  %v964 = vunpack.c.l.b16 %v874
  %v965 = vunpack.c.h.b16 %v874
  %v966 = vunpack.c.l.b16 %v875
  %v967 = vunpack.c.h.b16 %v875
  %v968 = vunpack.c.l.b16 %v876
  %v969 = vunpack.c.h.b16 %v876
  %v970 = vunpack.c.l.b16 %v877
  %v971 = vunpack.c.h.b16 %v877
  %v972 = vunpack.c.l.b16 %v878
  %v973 = vunpack.c.h.b16 %v878
  %v974 = vunpack.c.l.b16 %v879
  %v975 = vunpack.c.h.b16 %v879
  %v976 = vpack.c.b16 %v912, %v912
  %v977 = vpack.c.b16 %v913, %v913
  %v978 = vpack.c.b16 %v914, %v914
  %v979 = vpack.c.b16 %v915, %v915
  %v980 = vpack.c.b16 %v916, %v916
  %v981 = vpack.c.b16 %v917, %v917
  %v982 = vpack.c.b16 %v918, %v918
  %v983 = vpack.c.b16 %v919, %v919
  %v984 = vpack.c.b16 %v920, %v920
  %v985 = vpack.c.b16 %v921, %v921
  %v986 = vpack.c.b16 %v922, %v922
  %v987 = vpack.c.b16 %v923, %v923
  %v988 = vpack.c.b16 %v924, %v924
  %v989 = vpack.c.b16 %v925, %v925
  %v990 = vpack.c.b16 %v926, %v926
  %v991 = vpack.c.b16 %v927, %v927
  %v992 = vpack.c.b16 %v928, %v928
  %v993 = vpack.c.b16 %v929, %v929
  %v994 = vpack.c.b16 %v930, %v930
  %v995 = vpack.c.b16 %v931, %v931
  %v996 = vpack.c.b16 %v932, %v932
  %v997 = vpack.c.b16 %v933, %v933
  %v998 = vpack.c.b16 %v934, %v934
  %v999 = vpack.c.b16 %v935, %v935
  %v1000 = vpack.c.b16 %v936, %v936
  %v1001 = vpack.c.b16 %v937, %v937
  %v1002 = vpack.c.b16 %v938, %v938
  %v1003 = vpack.c.b16 %v939, %v939
  %v1004 = vpack.c.b16 %v940, %v940
  %v1005 = vpack.c.b16 %v941, %v941
  %v1006 = vpack.c.b16 %v942, %v942
  %v1007 = vpack.c.b16 %v943, %v943
  %v1008 = vpack.c.b16 %v944, %v944
  %v1009 = vpack.c.b16 %v945, %v945
  %v1010 = vpack.c.b16 %v946, %v946
  %v1011 = vpack.c.b16 %v947, %v947
  %v1012 = vpack.c.b16 %v948, %v948
  %v1013 = vpack.c.b16 %v949, %v949
  %v1014 = vpack.c.b16 %v950, %v950
  %v1015 = vpack.c.b16 %v951, %v951
  %v1016 = vpack.c.b16 %v952, %v952
  %v1017 = vpack.c.b16 %v953, %v953
  %v1018 = vpack.c.b16 %v954, %v954
  %v1019 = vpack.c.b16 %v955, %v955
  %v1020 = vpack.c.b16 %v956, %v956
  %v1021 = vpack.c.b16 %v957, %v957
  %v1022 = vpack.c.b16 %v958, %v958
  %v1023 = vpack.c.b16 %v959, %v959
  %v1024 = vpack.c.b16 %v960, %v960
  %v1025 = vpack.c.b16 %v961, %v961
  %v1026 = vpack.c.b16 %v962, %v962
  %v1027 = vpack.c.b16 %v963, %v963
  %v1028 = vpack.c.b16 %v964, %v964
  %v1029 = vpack.c.b16 %v965, %v965
  %v1030 = vpack.c.b16 %v966, %v966
  %v1031 = vpack.c.b16 %v967, %v967
  %v1032 = vpack.c.b16 %v968, %v968
  %v1033 = vpack.c.b16 %v969, %v969
  %v1034 = vpack.c.b16 %v970, %v970
  %v1035 = vpack.c.b16 %v971, %v971
  %v1036 = vpack.c.b16 %v972, %v972
  %v1037 = vpack.c.b16 %v973, %v973
  %v1038 = vpack.c.b16 %v974, %v974
  %v1039 = vpack.c.b16 %v975, %v975
  %vm1104 = vcmask 257024
  %1105 = vst.msk [vmem:[%s3] sm:$0xf] %vm1104, %v976
  %1106 = vst.msk [vmem:[%s3 + $0x4] sm:$0xf] %vm1104, %v977
  %1107 = vst.msk [vmem:[%s3 + $0x8] sm:$0xf] %vm1104, %v978
  %1108 = vst.msk [vmem:[%s3 + $0xc] sm:$0xf] %vm1104, %v979
  %1109 = vst.msk [vmem:[%s3 + $0x10] sm:$0xf] %vm1104, %v980
  %1110 = vst.msk [vmem:[%s3 + $0x14] sm:$0xf] %vm1104, %v981
  %1111 = vst.msk [vmem:[%s3 + $0x18] sm:$0xf] %vm1104, %v982
  %1112 = vst.msk [vmem:[%s3 + $0x1c] sm:$0xf] %vm1104, %v983
  %1113 = vst.msk [vmem:[%s3 + $0x20] sm:$0xf] %vm1104, %v984
  %1114 = vst.msk [vmem:[%s3 + $0x24] sm:$0xf] %vm1104, %v985
  %1115 = vst.msk [vmem:[%s3 + $0x28] sm:$0xf] %vm1104, %v986
  %1116 = vst.msk [vmem:[%s3 + $0x2c] sm:$0xf] %vm1104, %v987
  %1117 = vst.msk [vmem:[%s3 + $0x30] sm:$0xf] %vm1104, %v988
  %1118 = vst.msk [vmem:[%s3 + $0x34] sm:$0xf] %vm1104, %v989
  %1119 = vst.msk [vmem:[%s3 + $0x38] sm:$0xf] %vm1104, %v990
  %1120 = vst.msk [vmem:[%s3 + $0x3c] sm:$0xf] %vm1104, %v991
  %1121 = vst.msk [vmem:[%s3 + $0x40] sm:$0xf] %vm1104, %v992
  %1122 = vst.msk [vmem:[%s3 + $0x44] sm:$0xf] %vm1104, %v993
  %1123 = vst.msk [vmem:[%s3 + $0x48] sm:$0xf] %vm1104, %v994
  %1124 = vst.msk [vmem:[%s3 + $0x4c] sm:$0xf] %vm1104, %v995
  %1125 = vst.msk [vmem:[%s3 + $0x50] sm:$0xf] %vm1104, %v996
  %1126 = vst.msk [vmem:[%s3 + $0x54] sm:$0xf] %vm1104, %v997
  %1127 = vst.msk [vmem:[%s3 + $0x58] sm:$0xf] %vm1104, %v998
  %1128 = vst.msk [vmem:[%s3 + $0x5c] sm:$0xf] %vm1104, %v999
  %1129 = vst.msk [vmem:[%s3 + $0x60] sm:$0xf] %vm1104, %v1000
  %1130 = vst.msk [vmem:[%s3 + $0x64] sm:$0xf] %vm1104, %v1001
  %1131 = vst.msk [vmem:[%s3 + $0x68] sm:$0xf] %vm1104, %v1002
  %1132 = vst.msk [vmem:[%s3 + $0x6c] sm:$0xf] %vm1104, %v1003
  %1133 = vst.msk [vmem:[%s3 + $0x70] sm:$0xf] %vm1104, %v1004
  %1134 = vst.msk [vmem:[%s3 + $0x74] sm:$0xf] %vm1104, %v1005
  %1135 = vst.msk [vmem:[%s3 + $0x78] sm:$0xf] %vm1104, %v1006
  %1136 = vst.msk [vmem:[%s3 + $0x7c] sm:$0xf] %vm1104, %v1007
  %1137 = vst.msk [vmem:[%s3 + $0x80] sm:$0xf] %vm1104, %v1008
  %1138 = vst.msk [vmem:[%s3 + $0x84] sm:$0xf] %vm1104, %v1009
  %1139 = vst.msk [vmem:[%s3 + $0x88] sm:$0xf] %vm1104, %v1010
  %1140 = vst.msk [vmem:[%s3 + $0x8c] sm:$0xf] %vm1104, %v1011
  %1141 = vst.msk [vmem:[%s3 + $0x90] sm:$0xf] %vm1104, %v1012
  %1142 = vst.msk [vmem:[%s3 + $0x94] sm:$0xf] %vm1104, %v1013
  %1143 = vst.msk [vmem:[%s3 + $0x98] sm:$0xf] %vm1104, %v1014
  %1144 = vst.msk [vmem:[%s3 + $0x9c] sm:$0xf] %vm1104, %v1015
  %1145 = vst.msk [vmem:[%s3 + $0xa0] sm:$0xf] %vm1104, %v1016
  %1146 = vst.msk [vmem:[%s3 + $0xa4] sm:$0xf] %vm1104, %v1017
  %1147 = vst.msk [vmem:[%s3 + $0xa8] sm:$0xf] %vm1104, %v1018
  %1148 = vst.msk [vmem:[%s3 + $0xac] sm:$0xf] %vm1104, %v1019
  %1149 = vst.msk [vmem:[%s3 + $0xb0] sm:$0xf] %vm1104, %v1020
  %1150 = vst.msk [vmem:[%s3 + $0xb4] sm:$0xf] %vm1104, %v1021
  %1151 = vst.msk [vmem:[%s3 + $0xb8] sm:$0xf] %vm1104, %v1022
  %1152 = vst.msk [vmem:[%s3 + $0xbc] sm:$0xf] %vm1104, %v1023
  %1153 = vst.msk [vmem:[%s3 + $0xc0] sm:$0xf] %vm1104, %v1024
  %1154 = vst.msk [vmem:[%s3 + $0xc4] sm:$0xf] %vm1104, %v1025
  %1155 = vst.msk [vmem:[%s3 + $0xc8] sm:$0xf] %vm1104, %v1026
  %1156 = vst.msk [vmem:[%s3 + $0xcc] sm:$0xf] %vm1104, %v1027
  %1157 = vst.msk [vmem:[%s3 + $0xd0] sm:$0xf] %vm1104, %v1028
  %1158 = vst.msk [vmem:[%s3 + $0xd4] sm:$0xf] %vm1104, %v1029
  %1159 = vst.msk [vmem:[%s3 + $0xd8] sm:$0xf] %vm1104, %v1030
  %1160 = vst.msk [vmem:[%s3 + $0xdc] sm:$0xf] %vm1104, %v1031
  %1161 = vst.msk [vmem:[%s3 + $0xe0] sm:$0xf] %vm1104, %v1032
  %1162 = vst.msk [vmem:[%s3 + $0xe4] sm:$0xf] %vm1104, %v1033
  %1163 = vst.msk [vmem:[%s3 + $0xe8] sm:$0xf] %vm1104, %v1034
  %1164 = vst.msk [vmem:[%s3 + $0xec] sm:$0xf] %vm1104, %v1035
  %1165 = vst.msk [vmem:[%s3 + $0xf0] sm:$0xf] %vm1104, %v1036
  %1166 = vst.msk [vmem:[%s3 + $0xf4] sm:$0xf] %vm1104, %v1037
  %1167 = vst.msk [vmem:[%s3 + $0xf8] sm:$0xf] %vm1104, %v1038
  %1168 = vst.msk [vmem:[%s3 + $0xfc] sm:$0xf] %vm1104, %v1039
  // Predicated region
  $region14: #{transport_t_forward.5} parent=0 // pred_check
    _
  $region15: #{transport_t_forward.5} parent=0 // pred_check_branch
    %1170 = sbr.rel (0) target = $region17
  $region16: #{transport_t_forward.5} parent=0 // pred_region
    _
  $region17: #{transport_t_forward.5} parent=0 // pred_fallthru
    _
  // Predicated region
  $region18: #{transport_t_forward.5} parent=0 // pred_check
    _
  $region19: #{transport_t_forward.5} parent=0 // pred_check_branch
    %1172 = sbr.rel (0) target = $region21
  $region20: #{transport_t_forward.5} parent=0 // pred_region
    _
  $region21: #{transport_t_forward.5} parent=0 // pred_fallthru
    _

// kernel: transport_t_forward.6
$region0: #{transport_t_forward.6}
  #allocation0 [shape = 'u32[]', space=smem, size = 0x4, offset = 0x4, fixed_abs, tag = 'smem constant byte address 0x4 - core index']
  #allocation1 [shape = 'u32[144,128]{1,0:T(1,128)}', space=vmem, size = 0x12000, scoped, tag = 'internal scratch']
  %s0 = inlined_call_operand.vmem [shape: bf16[128,512], index: 0, kind: input, shape index: {}]
  %s1 = inlined_call_operand.vmem [shape: bf16[512,64], index: 1, kind: input, shape index: {}]
  %s2 = inlined_call_operand.vmem [shape: f32[1,64], index: 2, kind: input, shape index: {}]
  %s3 = inlined_call_operand.vmem [shape: bf16[128,64], index: 3, kind: output, shape index: {}]
  %s4 = sld [smem:[#allocation0]]
  $region22: #{transport_t_forward.6} parent=0
    _
  %s6 = ssub.s32 1, %s4
  %s7 = scalar_select 0, %s6, %s4
  // Predicated region
  $region2: #{transport_t_forward.6} parent=0 // pred_check
    _
  $region3: #{transport_t_forward.6} parent=0 // pred_check_branch
    %9 = sbr.rel (0) target = $region5
  $region4: #{transport_t_forward.6} parent=0 // pred_region
    _
  $region5: #{transport_t_forward.6} parent=0 // pred_fallthru
    _
  // Predicated region
  $region6: #{transport_t_forward.6} parent=0 // pred_check
    _
  $region7: #{transport_t_forward.6} parent=0 // pred_check_branch
    %11 = sbr.rel (0) target = $region9
  $region8: #{transport_t_forward.6} parent=0 // pred_region
    _
  $region9: #{transport_t_forward.6} parent=0 // pred_fallthru
    _
  // Predicated region
  $region10: #{transport_t_forward.6} parent=0 // pred_check
    _
  $region11: #{transport_t_forward.6} parent=0 // pred_check_branch
    %13 = sbr.rel (0) target = $region13
  $region12: #{transport_t_forward.6} parent=0 // pred_region
    _
  $region13: #{transport_t_forward.6} parent=0 // pred_fallthru
    _
  %v15 = vld [vmem:[%s0] sm:$0xff]
  %v16 = vld [vmem:[%s0 + $0x8] sm:$0xff]
  %v17 = vld [vmem:[%s0 + $0x10] sm:$0xff]
  %v18 = vld [vmem:[%s0 + $0x18] sm:$0xff]
  %v19 = vld [vmem:[%s0 + $0x20] sm:$0xff]
  %v20 = vld [vmem:[%s0 + $0x28] sm:$0xff]
  %v21 = vld [vmem:[%s0 + $0x30] sm:$0xff]
  %v22 = vld [vmem:[%s0 + $0x38] sm:$0xff]
  %v23 = vld [vmem:[%s0 + $0x40] sm:$0xff]
  %v24 = vld [vmem:[%s0 + $0x48] sm:$0xff]
  %v25 = vld [vmem:[%s0 + $0x50] sm:$0xff]
  %v26 = vld [vmem:[%s0 + $0x58] sm:$0xff]
  %v27 = vld [vmem:[%s0 + $0x60] sm:$0xff]
  %v28 = vld [vmem:[%s0 + $0x68] sm:$0xff]
  %v29 = vld [vmem:[%s0 + $0x70] sm:$0xff]
  %v30 = vld [vmem:[%s0 + $0x78] sm:$0xff]
  %v31 = vld [vmem:[%s0 + $0x80] sm:$0xff]
  %v32 = vld [vmem:[%s0 + $0x88] sm:$0xff]
  %v33 = vld [vmem:[%s0 + $0x90] sm:$0xff]
  %v34 = vld [vmem:[%s0 + $0x98] sm:$0xff]
  %v35 = vld [vmem:[%s0 + $0xa0] sm:$0xff]
  %v36 = vld [vmem:[%s0 + $0xa8] sm:$0xff]
  %v37 = vld [vmem:[%s0 + $0xb0] sm:$0xff]
  %v38 = vld [vmem:[%s0 + $0xb8] sm:$0xff]
  %v39 = vld [vmem:[%s0 + $0xc0] sm:$0xff]
  %v40 = vld [vmem:[%s0 + $0xc8] sm:$0xff]
  %v41 = vld [vmem:[%s0 + $0xd0] sm:$0xff]
  %v42 = vld [vmem:[%s0 + $0xd8] sm:$0xff]
  %v43 = vld [vmem:[%s0 + $0xe0] sm:$0xff]
  %v44 = vld [vmem:[%s0 + $0xe8] sm:$0xff]
  %v45 = vld [vmem:[%s0 + $0xf0] sm:$0xff]
  %v46 = vld [vmem:[%s0 + $0xf8] sm:$0xff]
  %v47 = vld [vmem:[%s1] sm:$0xf]
  %v48 = vld [vmem:[%s1 + $0x4] sm:$0xf]
  %v49 = vld [vmem:[%s1 + $0x8] sm:$0xf]
  %v50 = vld [vmem:[%s1 + $0xc] sm:$0xf]
  %v51 = vld [vmem:[%s1 + $0x10] sm:$0xf]
  %v52 = vld [vmem:[%s1 + $0x14] sm:$0xf]
  %v53 = vld [vmem:[%s1 + $0x18] sm:$0xf]
  %v54 = vld [vmem:[%s1 + $0x1c] sm:$0xf]
  %v55 = vld [vmem:[%s1 + $0x20] sm:$0xf]
  %v56 = vld [vmem:[%s1 + $0x24] sm:$0xf]
  %v57 = vld [vmem:[%s1 + $0x28] sm:$0xf]
  %v58 = vld [vmem:[%s1 + $0x2c] sm:$0xf]
  %v59 = vld [vmem:[%s1 + $0x30] sm:$0xf]
  %v60 = vld [vmem:[%s1 + $0x34] sm:$0xf]
  %v61 = vld [vmem:[%s1 + $0x38] sm:$0xf]
  %v62 = vld [vmem:[%s1 + $0x3c] sm:$0xf]
  %v63 = vld [vmem:[%s1 + $0x40] sm:$0xf]
  %v64 = vld [vmem:[%s1 + $0x44] sm:$0xf]
  %v65 = vld [vmem:[%s1 + $0x48] sm:$0xf]
  %v66 = vld [vmem:[%s1 + $0x4c] sm:$0xf]
  %v67 = vld [vmem:[%s1 + $0x50] sm:$0xf]
  %v68 = vld [vmem:[%s1 + $0x54] sm:$0xf]
  %v69 = vld [vmem:[%s1 + $0x58] sm:$0xf]
  %v70 = vld [vmem:[%s1 + $0x5c] sm:$0xf]
  %v71 = vld [vmem:[%s1 + $0x60] sm:$0xf]
  %v72 = vld [vmem:[%s1 + $0x64] sm:$0xf]
  %v73 = vld [vmem:[%s1 + $0x68] sm:$0xf]
  %v74 = vld [vmem:[%s1 + $0x6c] sm:$0xf]
  %v75 = vld [vmem:[%s1 + $0x70] sm:$0xf]
  %v76 = vld [vmem:[%s1 + $0x74] sm:$0xf]
  %v77 = vld [vmem:[%s1 + $0x78] sm:$0xf]
  %v78 = vld [vmem:[%s1 + $0x7c] sm:$0xf]
  %v79 = vld [vmem:[%s1 + $0x80] sm:$0xf]
  %v80 = vld [vmem:[%s1 + $0x84] sm:$0xf]
  %v81 = vld [vmem:[%s1 + $0x88] sm:$0xf]
  %v82 = vld [vmem:[%s1 + $0x8c] sm:$0xf]
  %v83 = vld [vmem:[%s1 + $0x90] sm:$0xf]
  %v84 = vld [vmem:[%s1 + $0x94] sm:$0xf]
  %v85 = vld [vmem:[%s1 + $0x98] sm:$0xf]
  %v86 = vld [vmem:[%s1 + $0x9c] sm:$0xf]
  %v87 = vld [vmem:[%s1 + $0xa0] sm:$0xf]
  %v88 = vld [vmem:[%s1 + $0xa4] sm:$0xf]
  %v89 = vld [vmem:[%s1 + $0xa8] sm:$0xf]
  %v90 = vld [vmem:[%s1 + $0xac] sm:$0xf]
  %v91 = vld [vmem:[%s1 + $0xb0] sm:$0xf]
  %v92 = vld [vmem:[%s1 + $0xb4] sm:$0xf]
  %v93 = vld [vmem:[%s1 + $0xb8] sm:$0xf]
  %v94 = vld [vmem:[%s1 + $0xbc] sm:$0xf]
  %v95 = vld [vmem:[%s1 + $0xc0] sm:$0xf]
  %v96 = vld [vmem:[%s1 + $0xc4] sm:$0xf]
  %v97 = vld [vmem:[%s1 + $0xc8] sm:$0xf]
  %v98 = vld [vmem:[%s1 + $0xcc] sm:$0xf]
  %v99 = vld [vmem:[%s1 + $0xd0] sm:$0xf]
  %v100 = vld [vmem:[%s1 + $0xd4] sm:$0xf]
  %v101 = vld [vmem:[%s1 + $0xd8] sm:$0xf]
  %v102 = vld [vmem:[%s1 + $0xdc] sm:$0xf]
  %v103 = vld [vmem:[%s1 + $0xe0] sm:$0xf]
  %v104 = vld [vmem:[%s1 + $0xe4] sm:$0xf]
  %v105 = vld [vmem:[%s1 + $0xe8] sm:$0xf]
  %v106 = vld [vmem:[%s1 + $0xec] sm:$0xf]
  %v107 = vld [vmem:[%s1 + $0xf0] sm:$0xf]
  %v108 = vld [vmem:[%s1 + $0xf4] sm:$0xf]
  %v109 = vld [vmem:[%s1 + $0xf8] sm:$0xf]
  %v110 = vld [vmem:[%s1 + $0xfc] sm:$0xf]
  %v111 = vld [vmem:[%s2] sm:$0x1]
  %v113 = vlaneseq
  %v114 = vshrl.u32 %v113, 7
  %v115 = vsub.s32 0, %v114
  %v116 = vrot.slane %v111, %v115
  %v150 = vunpack.c.l.b16 %v15
  %v151 = vunpack.c.h.b16 %v15
  %v152 = vunpack.c.l.b16 %v16
  %v153 = vunpack.c.h.b16 %v16
  %v154 = vunpack.c.l.b16 %v17
  %v155 = vunpack.c.h.b16 %v17
  %v156 = vunpack.c.l.b16 %v18
  %v157 = vunpack.c.h.b16 %v18
  %v158 = vunpack.c.l.b16 %v19
  %v159 = vunpack.c.h.b16 %v19
  %v160 = vunpack.c.l.b16 %v20
  %v161 = vunpack.c.h.b16 %v20
  %v162 = vunpack.c.l.b16 %v21
  %v163 = vunpack.c.h.b16 %v21
  %v164 = vunpack.c.l.b16 %v22
  %v165 = vunpack.c.h.b16 %v22
  %v166 = vunpack.c.l.b16 %v23
  %v167 = vunpack.c.h.b16 %v23
  %v168 = vunpack.c.l.b16 %v24
  %v169 = vunpack.c.h.b16 %v24
  %v170 = vunpack.c.l.b16 %v25
  %v171 = vunpack.c.h.b16 %v25
  %v172 = vunpack.c.l.b16 %v26
  %v173 = vunpack.c.h.b16 %v26
  %v174 = vunpack.c.l.b16 %v27
  %v175 = vunpack.c.h.b16 %v27
  %v176 = vunpack.c.l.b16 %v28
  %v177 = vunpack.c.h.b16 %v28
  %v178 = vunpack.c.l.b16 %v29
  %v179 = vunpack.c.h.b16 %v29
  %v180 = vunpack.c.l.b16 %v30
  %v181 = vunpack.c.h.b16 %v30
  %v182 = vunpack.c.l.b16 %v31
  %v183 = vunpack.c.h.b16 %v31
  %v184 = vunpack.c.l.b16 %v32
  %v185 = vunpack.c.h.b16 %v32
  %v186 = vunpack.c.l.b16 %v33
  %v187 = vunpack.c.h.b16 %v33
  %v188 = vunpack.c.l.b16 %v34
  %v189 = vunpack.c.h.b16 %v34
  %v190 = vunpack.c.l.b16 %v35
  %v191 = vunpack.c.h.b16 %v35
  %v192 = vunpack.c.l.b16 %v36
  %v193 = vunpack.c.h.b16 %v36
  %v194 = vunpack.c.l.b16 %v37
  %v195 = vunpack.c.h.b16 %v37
  %v196 = vunpack.c.l.b16 %v38
  %v197 = vunpack.c.h.b16 %v38
  %v198 = vunpack.c.l.b16 %v39
  %v199 = vunpack.c.h.b16 %v39
  %v200 = vunpack.c.l.b16 %v40
  %v201 = vunpack.c.h.b16 %v40
  %v202 = vunpack.c.l.b16 %v41
  %v203 = vunpack.c.h.b16 %v41
  %v204 = vunpack.c.l.b16 %v42
  %v205 = vunpack.c.h.b16 %v42
  %v206 = vunpack.c.l.b16 %v43
  %v207 = vunpack.c.h.b16 %v43
  %v208 = vunpack.c.l.b16 %v44
  %v209 = vunpack.c.h.b16 %v44
  %v210 = vunpack.c.l.b16 %v45
  %v211 = vunpack.c.h.b16 %v45
  %v212 = vunpack.c.l.b16 %v46
  %v213 = vunpack.c.h.b16 %v46
  %v214 = vpack.c.b16 %v154, %v150
  %v215 = vpack.c.b16 %v155, %v151
  %v216 = vpack.c.b16 %v156, %v152
  %v217 = vpack.c.b16 %v157, %v153
  %v218 = vpack.c.b16 %v162, %v158
  %v219 = vpack.c.b16 %v163, %v159
  %v220 = vpack.c.b16 %v164, %v160
  %v221 = vpack.c.b16 %v165, %v161
  %v222 = vpack.c.b16 %v170, %v166
  %v223 = vpack.c.b16 %v171, %v167
  %v224 = vpack.c.b16 %v172, %v168
  %v225 = vpack.c.b16 %v173, %v169
  %v226 = vpack.c.b16 %v178, %v174
  %v227 = vpack.c.b16 %v179, %v175
  %v228 = vpack.c.b16 %v180, %v176
  %v229 = vpack.c.b16 %v181, %v177
  %v230 = vpack.c.b16 %v186, %v182
  %v231 = vpack.c.b16 %v187, %v183
  %v232 = vpack.c.b16 %v188, %v184
  %v233 = vpack.c.b16 %v189, %v185
  %v234 = vpack.c.b16 %v194, %v190
  %v235 = vpack.c.b16 %v195, %v191
  %v236 = vpack.c.b16 %v196, %v192
  %v237 = vpack.c.b16 %v197, %v193
  %v238 = vpack.c.b16 %v202, %v198
  %v239 = vpack.c.b16 %v203, %v199
  %v240 = vpack.c.b16 %v204, %v200
  %v241 = vpack.c.b16 %v205, %v201
  %v242 = vpack.c.b16 %v210, %v206
  %v243 = vpack.c.b16 %v211, %v207
  %v244 = vpack.c.b16 %v212, %v208
  %v245 = vpack.c.b16 %v213, %v209
  %v342 = vunpack.c.l.b16 %v47
  %v343 = vunpack.c.l.b16 %v48
  %v344 = vunpack.c.l.b16 %v49
  %v345 = vunpack.c.l.b16 %v50
  %v346 = vunpack.c.l.b16 %v51
  %v347 = vunpack.c.l.b16 %v52
  %v348 = vunpack.c.l.b16 %v53
  %v349 = vunpack.c.l.b16 %v54
  %v350 = vunpack.c.l.b16 %v55
  %v351 = vunpack.c.l.b16 %v56
  %v352 = vunpack.c.l.b16 %v57
  %v353 = vunpack.c.l.b16 %v58
  %v354 = vunpack.c.l.b16 %v59
  %v355 = vunpack.c.l.b16 %v60
  %v356 = vunpack.c.l.b16 %v61
  %v357 = vunpack.c.l.b16 %v62
  %v358 = vunpack.c.l.b16 %v63
  %v359 = vunpack.c.l.b16 %v64
  %v360 = vunpack.c.l.b16 %v65
  %v361 = vunpack.c.l.b16 %v66
  %v362 = vunpack.c.l.b16 %v67
  %v363 = vunpack.c.l.b16 %v68
  %v364 = vunpack.c.l.b16 %v69
  %v365 = vunpack.c.l.b16 %v70
  %v366 = vunpack.c.l.b16 %v71
  %v367 = vunpack.c.l.b16 %v72
  %v368 = vunpack.c.l.b16 %v73
  %v369 = vunpack.c.l.b16 %v74
  %v370 = vunpack.c.l.b16 %v75
  %v371 = vunpack.c.l.b16 %v76
  %v372 = vunpack.c.l.b16 %v77
  %v373 = vunpack.c.l.b16 %v78
  %v374 = vunpack.c.l.b16 %v79
  %v375 = vunpack.c.l.b16 %v80
  %v376 = vunpack.c.l.b16 %v81
  %v377 = vunpack.c.l.b16 %v82
  %v378 = vunpack.c.l.b16 %v83
  %v379 = vunpack.c.l.b16 %v84
  %v380 = vunpack.c.l.b16 %v85
  %v381 = vunpack.c.l.b16 %v86
  %v382 = vunpack.c.l.b16 %v87
  %v383 = vunpack.c.l.b16 %v88
  %v384 = vunpack.c.l.b16 %v89
  %v385 = vunpack.c.l.b16 %v90
  %v386 = vunpack.c.l.b16 %v91
  %v387 = vunpack.c.l.b16 %v92
  %v388 = vunpack.c.l.b16 %v93
  %v389 = vunpack.c.l.b16 %v94
  %v390 = vunpack.c.l.b16 %v95
  %v391 = vunpack.c.l.b16 %v96
  %v392 = vunpack.c.l.b16 %v97
  %v393 = vunpack.c.l.b16 %v98
  %v394 = vunpack.c.l.b16 %v99
  %v395 = vunpack.c.l.b16 %v100
  %v396 = vunpack.c.l.b16 %v101
  %v397 = vunpack.c.l.b16 %v102
  %v398 = vunpack.c.l.b16 %v103
  %v399 = vunpack.c.l.b16 %v104
  %v400 = vunpack.c.l.b16 %v105
  %v401 = vunpack.c.l.b16 %v106
  %v402 = vunpack.c.l.b16 %v107
  %v403 = vunpack.c.l.b16 %v108
  %v404 = vunpack.c.l.b16 %v109
  %v405 = vunpack.c.l.b16 %v110
  %v406 = vpack.c.b16 %v343, %v342
  %v407 = vpack.c.b16 %v345, %v344
  %v408 = vpack.c.b16 %v347, %v346
  %v409 = vpack.c.b16 %v349, %v348
  %v410 = vpack.c.b16 %v351, %v350
  %v411 = vpack.c.b16 %v353, %v352
  %v412 = vpack.c.b16 %v355, %v354
  %v413 = vpack.c.b16 %v357, %v356
  %v414 = vpack.c.b16 %v359, %v358
  %v415 = vpack.c.b16 %v361, %v360
  %v416 = vpack.c.b16 %v363, %v362
  %v417 = vpack.c.b16 %v365, %v364
  %v418 = vpack.c.b16 %v367, %v366
  %v419 = vpack.c.b16 %v369, %v368
  %v420 = vpack.c.b16 %v371, %v370
  %v421 = vpack.c.b16 %v373, %v372
  %v422 = vpack.c.b16 %v375, %v374
  %v423 = vpack.c.b16 %v377, %v376
  %v424 = vpack.c.b16 %v379, %v378
  %v425 = vpack.c.b16 %v381, %v380
  %v426 = vpack.c.b16 %v383, %v382
  %v427 = vpack.c.b16 %v385, %v384
  %v428 = vpack.c.b16 %v387, %v386
  %v429 = vpack.c.b16 %v389, %v388
  %v430 = vpack.c.b16 %v391, %v390
  %v431 = vpack.c.b16 %v393, %v392
  %v432 = vpack.c.b16 %v395, %v394
  %v433 = vpack.c.b16 %v397, %v396
  %v434 = vpack.c.b16 %v399, %v398
  %v435 = vpack.c.b16 %v401, %v400
  %v436 = vpack.c.b16 %v403, %v402
  %v437 = vpack.c.b16 %v405, %v404
  %470 = vmatprep.subr.bf16.mxu0 0
  %471 = vmatpush1.bf16.msra.mxu0 %v413
  %472 = vmatprep.subr.bf16.mxu0 0
  %473 = vmatpush1.bf16.msra.mxu0 %v412
  %474 = vmatprep.subr.bf16.mxu0 0
  %475 = vmatpush1.bf16.msra.mxu0 %v411
  %476 = vmatprep.subr.bf16.mxu0 0
  %477 = vmatpush1.bf16.msra.mxu0 %v410
  %478 = vmatprep.subr.bf16.mxu0 0
  %479 = vmatpush1.bf16.msra.mxu0 %v409
  %480 = vmatprep.subr.bf16.mxu0 0
  %481 = vmatpush1.bf16.msra.mxu0 %v408
  %482 = vmatprep.subr.bf16.mxu0 0
  %483 = vmatpush1.bf16.msra.mxu0 %v407
  %484 = vmatprep.subr.bf16.mxu0 0
  %485 = vmatpush1.bf16.msra.mxu0 %v406
  %486 = vmatprep.subr.bf16.mxu0 0
  %487 = vmatpush2.bf16.msra.mxu0 %v421
  %488 = vmatprep.subr.bf16.mxu0 0
  %489 = vmatpush2.bf16.msra.mxu0 %v420
  %490 = vmatprep.subr.bf16.mxu0 0
  %491 = vmatpush2.bf16.msra.mxu0 %v419
  %492 = vmatprep.subr.bf16.mxu0 0
  %493 = vmatpush2.bf16.msra.mxu0 %v418
  %494 = vmatprep.subr.bf16.mxu0 0
  %495 = vmatpush2.bf16.msra.mxu0 %v417
  %496 = vmatprep.subr.bf16.mxu0 0
  %497 = vmatpush2.bf16.msra.mxu0 %v416
  %498 = vmatprep.subr.bf16.mxu0 0
  %499 = vmatpush2.bf16.msra.mxu0 %v415
  %500 = vmatprep.subr.bf16.mxu0 0
  %501 = vmatpush2.bf16.msra.mxu0 %v414
  %502 = vmatprep.mubr.bf16.mxu0 %v215
  %503 = vmatmul.mubr.bf16.gmra.mxu0 %v214
  %v504 = vpop.f32.mrf.mxu0
  %v505 = vadd.f32 %v116, %v504
  %v506 = vpop.f32.mrf.mxu0
  %v507 = vpop.f32.mrf.mxu0
  %v508 = vadd.f32 %v116, %v507
  %v509 = vpop.f32.mrf.mxu0
  %510 = vmatprep.mubr.bf16.mxu0 %v219
  %511 = vmatmul.mubr.bf16.gmra.mxu0 %v218
  %v512 = vpop.f32.mrf.mxu0
  %v513 = vadd.f32 %v116, %v512
  %v514 = vpop.f32.mrf.mxu0
  %v515 = vpop.f32.mrf.mxu0
  %v516 = vadd.f32 %v116, %v515
  %v517 = vpop.f32.mrf.mxu0
  %518 = vmatprep.mubr.bf16.mxu0 %v223
  %519 = vmatmul.mubr.bf16.gmra.mxu0 %v222
  %v520 = vpop.f32.mrf.mxu0
  %v521 = vadd.f32 %v116, %v520
  %v522 = vpop.f32.mrf.mxu0
  %v523 = vpop.f32.mrf.mxu0
  %v524 = vadd.f32 %v116, %v523
  %v525 = vpop.f32.mrf.mxu0
  %526 = vmatprep.mubr.bf16.mxu0 %v227
  %527 = vmatmul.mubr.bf16.gmra.mxu0 %v226
  %v528 = vpop.f32.mrf.mxu0
  %v529 = vadd.f32 %v116, %v528
  %v530 = vpop.f32.mrf.mxu0
  %v531 = vpop.f32.mrf.mxu0
  %v532 = vadd.f32 %v116, %v531
  %v533 = vpop.f32.mrf.mxu0
  %534 = vmatprep.mubr.bf16.mxu0 %v231
  %535 = vmatmul.mubr.bf16.gmra.mxu0 %v230
  %v536 = vpop.f32.mrf.mxu0
  %v537 = vadd.f32 %v116, %v536
  %v538 = vpop.f32.mrf.mxu0
  %v539 = vpop.f32.mrf.mxu0
  %v540 = vadd.f32 %v116, %v539
  %v541 = vpop.f32.mrf.mxu0
  %542 = vmatprep.mubr.bf16.mxu0 %v235
  %543 = vmatmul.mubr.bf16.gmra.mxu0 %v234
  %v544 = vpop.f32.mrf.mxu0
  %v545 = vadd.f32 %v116, %v544
  %v546 = vpop.f32.mrf.mxu0
  %v547 = vpop.f32.mrf.mxu0
  %v548 = vadd.f32 %v116, %v547
  %v549 = vpop.f32.mrf.mxu0
  %550 = vmatprep.mubr.bf16.mxu0 %v239
  %551 = vmatmul.mubr.bf16.gmra.mxu0 %v238
  %v552 = vpop.f32.mrf.mxu0
  %v553 = vadd.f32 %v116, %v552
  %v554 = vpop.f32.mrf.mxu0
  %v555 = vpop.f32.mrf.mxu0
  %v556 = vadd.f32 %v116, %v555
  %v557 = vpop.f32.mrf.mxu0
  %558 = vmatprep.mubr.bf16.mxu0 %v243
  %559 = vmatmul.mubr.bf16.gmra.mxu0 %v242
  %v560 = vpop.f32.mrf.mxu0
  %v561 = vadd.f32 %v116, %v560
  %v562 = vpop.f32.mrf.mxu0
  %v563 = vpop.f32.mrf.mxu0
  %v564 = vadd.f32 %v116, %v563
  %v565 = vpop.f32.mrf.mxu0
  %566 = vdwg.mxu0
  %567 = vmatprep.subr.bf16.mxu0 0
  %568 = vmatpush1.bf16.msra.mxu0 %v429
  %569 = vmatprep.subr.bf16.mxu0 0
  %570 = vmatpush1.bf16.msra.mxu0 %v428
  %571 = vmatprep.subr.bf16.mxu0 0
  %572 = vmatpush1.bf16.msra.mxu0 %v427
  %573 = vmatprep.subr.bf16.mxu0 0
  %574 = vmatpush1.bf16.msra.mxu0 %v426
  %575 = vmatprep.subr.bf16.mxu0 0
  %576 = vmatpush1.bf16.msra.mxu0 %v425
  %577 = vmatprep.subr.bf16.mxu0 0
  %578 = vmatpush1.bf16.msra.mxu0 %v424
  %579 = vmatprep.subr.bf16.mxu0 0
  %580 = vmatpush1.bf16.msra.mxu0 %v423
  %581 = vmatprep.subr.bf16.mxu0 0
  %582 = vmatpush1.bf16.msra.mxu0 %v422
  %583 = vmatprep.subr.bf16.mxu0 0
  %584 = vmatpush2.bf16.msra.mxu0 %v437
  %585 = vmatprep.subr.bf16.mxu0 0
  %586 = vmatpush2.bf16.msra.mxu0 %v436
  %587 = vmatprep.subr.bf16.mxu0 0
  %588 = vmatpush2.bf16.msra.mxu0 %v435
  %589 = vmatprep.subr.bf16.mxu0 0
  %590 = vmatpush2.bf16.msra.mxu0 %v434
  %591 = vmatprep.subr.bf16.mxu0 0
  %592 = vmatpush2.bf16.msra.mxu0 %v433
  %593 = vmatprep.subr.bf16.mxu0 0
  %594 = vmatpush2.bf16.msra.mxu0 %v432
  %595 = vmatprep.subr.bf16.mxu0 0
  %596 = vmatpush2.bf16.msra.mxu0 %v431
  %597 = vmatprep.subr.bf16.mxu0 0
  %598 = vmatpush2.bf16.msra.mxu0 %v430
  %599 = vmatprep.mubr.bf16.mxu0 %v217
  %600 = vmatmul.mubr.bf16.gmra.mxu0 %v216
  %v601 = vpop.f32.mrf.mxu0
  %v602 = vadd.f32 %v505, %v601
  %v603 = vpop.f32.mrf.mxu0
  %v604 = vpop.f32.mrf.mxu0
  %v605 = vadd.f32 %v508, %v604
  %v606 = vpop.f32.mrf.mxu0
  %607 = vmatprep.mubr.bf16.mxu0 %v221
  %608 = vmatmul.mubr.bf16.gmra.mxu0 %v220
  %v609 = vpop.f32.mrf.mxu0
  %v610 = vadd.f32 %v513, %v609
  %v611 = vpop.f32.mrf.mxu0
  %v612 = vpop.f32.mrf.mxu0
  %v613 = vadd.f32 %v516, %v612
  %v614 = vpop.f32.mrf.mxu0
  %615 = vmatprep.mubr.bf16.mxu0 %v225
  %616 = vmatmul.mubr.bf16.gmra.mxu0 %v224
  %v617 = vpop.f32.mrf.mxu0
  %v618 = vadd.f32 %v521, %v617
  %v619 = vpop.f32.mrf.mxu0
  %v620 = vpop.f32.mrf.mxu0
  %v621 = vadd.f32 %v524, %v620
  %v622 = vpop.f32.mrf.mxu0
  %623 = vmatprep.mubr.bf16.mxu0 %v229
  %624 = vmatmul.mubr.bf16.gmra.mxu0 %v228
  %v625 = vpop.f32.mrf.mxu0
  %v626 = vadd.f32 %v529, %v625
  %v627 = vpop.f32.mrf.mxu0
  %v628 = vpop.f32.mrf.mxu0
  %v629 = vadd.f32 %v532, %v628
  %v630 = vpop.f32.mrf.mxu0
  %631 = vmatprep.mubr.bf16.mxu0 %v233
  %632 = vmatmul.mubr.bf16.gmra.mxu0 %v232
  %v633 = vpop.f32.mrf.mxu0
  %v634 = vadd.f32 %v537, %v633
  %v635 = vpop.f32.mrf.mxu0
  %v636 = vpop.f32.mrf.mxu0
  %v637 = vadd.f32 %v540, %v636
  %v638 = vpop.f32.mrf.mxu0
  %639 = vmatprep.mubr.bf16.mxu0 %v237
  %640 = vmatmul.mubr.bf16.gmra.mxu0 %v236
  %v641 = vpop.f32.mrf.mxu0
  %v642 = vadd.f32 %v545, %v641
  %v643 = vpop.f32.mrf.mxu0
  %v644 = vpop.f32.mrf.mxu0
  %v645 = vadd.f32 %v548, %v644
  %v646 = vpop.f32.mrf.mxu0
  %647 = vmatprep.mubr.bf16.mxu0 %v241
  %648 = vmatmul.mubr.bf16.gmra.mxu0 %v240
  %v649 = vpop.f32.mrf.mxu0
  %v650 = vadd.f32 %v553, %v649
  %v651 = vpop.f32.mrf.mxu0
  %v652 = vpop.f32.mrf.mxu0
  %v653 = vadd.f32 %v556, %v652
  %v654 = vpop.f32.mrf.mxu0
  %655 = vmatprep.mubr.bf16.mxu0 %v245
  %656 = vmatmul.mubr.bf16.gmra.mxu0 %v244
  %v657 = vpop.f32.mrf.mxu0
  %v658 = vadd.f32 %v561, %v657
  %v659 = vpop.f32.mrf.mxu0
  %v660 = vpop.f32.mrf.mxu0
  %v661 = vadd.f32 %v564, %v660
  %v662 = vpop.f32.mrf.mxu0
  %663 = vdwg.mxu0
  %vm664 = vcmp.gt.f32.partialorder %v602, 0.0
  %vm665 = vcmp.gt.f32.partialorder %v605, 0.0
  %vm666 = vcmp.gt.f32.partialorder %v610, 0.0
  %vm667 = vcmp.gt.f32.partialorder %v613, 0.0
  %vm668 = vcmp.gt.f32.partialorder %v618, 0.0
  %vm669 = vcmp.gt.f32.partialorder %v621, 0.0
  %vm670 = vcmp.gt.f32.partialorder %v626, 0.0
  %vm671 = vcmp.gt.f32.partialorder %v629, 0.0
  %vm672 = vcmp.gt.f32.partialorder %v634, 0.0
  %vm673 = vcmp.gt.f32.partialorder %v637, 0.0
  %vm674 = vcmp.gt.f32.partialorder %v642, 0.0
  %vm675 = vcmp.gt.f32.partialorder %v645, 0.0
  %vm676 = vcmp.gt.f32.partialorder %v650, 0.0
  %vm677 = vcmp.gt.f32.partialorder %v653, 0.0
  %vm678 = vcmp.gt.f32.partialorder %v658, 0.0
  %vm679 = vcmp.gt.f32.partialorder %v661, 0.0
  %v680 = vmul.f32 %v602, 0.2
  %v681 = vmul.f32 %v605, 0.2
  %v682 = vmul.f32 %v610, 0.2
  %v683 = vmul.f32 %v613, 0.2
  %v684 = vmul.f32 %v618, 0.2
  %v685 = vmul.f32 %v621, 0.2
  %v686 = vmul.f32 %v626, 0.2
  %v687 = vmul.f32 %v629, 0.2
  %v688 = vmul.f32 %v634, 0.2
  %v689 = vmul.f32 %v637, 0.2
  %v690 = vmul.f32 %v642, 0.2
  %v691 = vmul.f32 %v645, 0.2
  %v692 = vmul.f32 %v650, 0.2
  %v693 = vmul.f32 %v653, 0.2
  %v694 = vmul.f32 %v658, 0.2
  %v695 = vmul.f32 %v661, 0.2
  %v696 = vsel %vm664, %v602, %v680
  %v697 = vsel %vm665, %v605, %v681
  %v698 = vsel %vm666, %v610, %v682
  %v699 = vsel %vm667, %v613, %v683
  %v700 = vsel %vm668, %v618, %v684
  %v701 = vsel %vm669, %v621, %v685
  %v702 = vsel %vm670, %v626, %v686
  %v703 = vsel %vm671, %v629, %v687
  %v704 = vsel %vm672, %v634, %v688
  %v705 = vsel %vm673, %v637, %v689
  %v706 = vsel %vm674, %v642, %v690
  %v707 = vsel %vm675, %v645, %v691
  %v708 = vsel %vm676, %v650, %v692
  %v709 = vsel %vm677, %v653, %v693
  %v710 = vsel %vm678, %v658, %v694
  %v711 = vsel %vm679, %v661, %v695
  %v712 = vpack.c.bf16 %v697, %v696
  %v713 = vpack.c.bf16 %v699, %v698
  %v714 = vpack.c.bf16 %v701, %v700
  %v715 = vpack.c.bf16 %v703, %v702
  %v716 = vpack.c.bf16 %v705, %v704
  %v717 = vpack.c.bf16 %v707, %v706
  %v718 = vpack.c.bf16 %v709, %v708
  %v719 = vpack.c.bf16 %v711, %v710
  %v728 = vunpack.c.l.b16 %v712
  %v729 = vunpack.c.h.b16 %v712
  %v730 = vunpack.c.l.b16 %v713
  %v731 = vunpack.c.h.b16 %v713
  %v732 = vunpack.c.l.b16 %v714
  %v733 = vunpack.c.h.b16 %v714
  %v734 = vunpack.c.l.b16 %v715
  %v735 = vunpack.c.h.b16 %v715
  %v736 = vunpack.c.l.b16 %v716
  %v737 = vunpack.c.h.b16 %v716
  %v738 = vunpack.c.l.b16 %v717
  %v739 = vunpack.c.h.b16 %v717
  %v740 = vunpack.c.l.b16 %v718
  %v741 = vunpack.c.h.b16 %v718
  %v742 = vunpack.c.l.b16 %v719
  %v743 = vunpack.c.h.b16 %v719
  %v744 = vpack.c.b16 %v728, %v728
  %v745 = vpack.c.b16 %v729, %v729
  %v746 = vpack.c.b16 %v730, %v730
  %v747 = vpack.c.b16 %v731, %v731
  %v748 = vpack.c.b16 %v732, %v732
  %v749 = vpack.c.b16 %v733, %v733
  %v750 = vpack.c.b16 %v734, %v734
  %v751 = vpack.c.b16 %v735, %v735
  %v752 = vpack.c.b16 %v736, %v736
  %v753 = vpack.c.b16 %v737, %v737
  %v754 = vpack.c.b16 %v738, %v738
  %v755 = vpack.c.b16 %v739, %v739
  %v756 = vpack.c.b16 %v740, %v740
  %v757 = vpack.c.b16 %v741, %v741
  %v758 = vpack.c.b16 %v742, %v742
  %v759 = vpack.c.b16 %v743, %v743
  %vm776 = vcmask 519168
  %777 = vst.msk [vmem:[%s3] sm:$0xf] %vm776, %v744
  %778 = vst.msk [vmem:[%s3 + $0x4] sm:$0xf] %vm776, %v745
  %779 = vst.msk [vmem:[%s3 + $0x8] sm:$0xf] %vm776, %v746
  %780 = vst.msk [vmem:[%s3 + $0xc] sm:$0xf] %vm776, %v747
  %781 = vst.msk [vmem:[%s3 + $0x10] sm:$0xf] %vm776, %v748
  %782 = vst.msk [vmem:[%s3 + $0x14] sm:$0xf] %vm776, %v749
  %783 = vst.msk [vmem:[%s3 + $0x18] sm:$0xf] %vm776, %v750
  %784 = vst.msk [vmem:[%s3 + $0x1c] sm:$0xf] %vm776, %v751
  %785 = vst.msk [vmem:[%s3 + $0x20] sm:$0xf] %vm776, %v752
  %786 = vst.msk [vmem:[%s3 + $0x24] sm:$0xf] %vm776, %v753
  %787 = vst.msk [vmem:[%s3 + $0x28] sm:$0xf] %vm776, %v754
  %788 = vst.msk [vmem:[%s3 + $0x2c] sm:$0xf] %vm776, %v755
  %789 = vst.msk [vmem:[%s3 + $0x30] sm:$0xf] %vm776, %v756
  %790 = vst.msk [vmem:[%s3 + $0x34] sm:$0xf] %vm776, %v757
  %791 = vst.msk [vmem:[%s3 + $0x38] sm:$0xf] %vm776, %v758
  %792 = vst.msk [vmem:[%s3 + $0x3c] sm:$0xf] %vm776, %v759
  // Predicated region
  $region14: #{transport_t_forward.6} parent=0 // pred_check
    _
  $region15: #{transport_t_forward.6} parent=0 // pred_check_branch
    %794 = sbr.rel (0) target = $region17
  $region16: #{transport_t_forward.6} parent=0 // pred_region
    _
  $region17: #{transport_t_forward.6} parent=0 // pred_fallthru
    _
  // Predicated region
  $region18: #{transport_t_forward.6} parent=0 // pred_check
    _
  $region19: #{transport_t_forward.6} parent=0 // pred_check_branch
    %796 = sbr.rel (0) target = $region21
  $region20: #{transport_t_forward.6} parent=0 // pred_region
    _
  $region21: #{transport_t_forward.6} parent=0 // pred_fallthru
    _

// kernel: transport_t_forward.7
$region0: #{transport_t_forward.7}
  #allocation0 [shape = 'u32[]', space=smem, size = 0x4, offset = 0x4, fixed_abs, tag = 'smem constant byte address 0x4 - core index']
  #allocation1 [shape = 'u32[144,128]{1,0:T(1,128)}', space=vmem, size = 0x12000, scoped, tag = 'internal scratch']
  %s0 = inlined_call_operand.vmem [shape: bf16[32,1024], index: 0, kind: input, shape index: {}]
  %s1 = inlined_call_operand.vmem [shape: bf16[1024,128], index: 1, kind: input, shape index: {}]
  %s2 = inlined_call_operand.vmem [shape: f32[1,128], index: 2, kind: input, shape index: {}]
  %s3 = inlined_call_operand.vmem [shape: bf16[32,128], index: 3, kind: output, shape index: {}]
  %s4 = sld [smem:[#allocation0]]
  $region22: #{transport_t_forward.7} parent=0
    _
  %s6 = ssub.s32 1, %s4
  %s7 = scalar_select 0, %s6, %s4
  // Predicated region
  $region2: #{transport_t_forward.7} parent=0 // pred_check
    _
  $region3: #{transport_t_forward.7} parent=0 // pred_check_branch
    %9 = sbr.rel (0) target = $region5
  $region4: #{transport_t_forward.7} parent=0 // pred_region
    _
  $region5: #{transport_t_forward.7} parent=0 // pred_fallthru
    _
  // Predicated region
  $region6: #{transport_t_forward.7} parent=0 // pred_check
    _
  $region7: #{transport_t_forward.7} parent=0 // pred_check_branch
    %11 = sbr.rel (0) target = $region9
  $region8: #{transport_t_forward.7} parent=0 // pred_region
    _
  $region9: #{transport_t_forward.7} parent=0 // pred_fallthru
    _
  // Predicated region
  $region10: #{transport_t_forward.7} parent=0 // pred_check
    _
  $region11: #{transport_t_forward.7} parent=0 // pred_check_branch
    %13 = sbr.rel (0) target = $region13
  $region12: #{transport_t_forward.7} parent=0 // pred_region
    _
  $region13: #{transport_t_forward.7} parent=0 // pred_fallthru
    _
  %v15 = vld [vmem:[%s0] sm:$0xff]
  %v16 = vld [vmem:[%s0 + $0x8] sm:$0xff]
  %v17 = vld [vmem:[%s0 + $0x10] sm:$0xff]
  %v18 = vld [vmem:[%s0 + $0x18] sm:$0xff]
  %v19 = vld [vmem:[%s0 + $0x20] sm:$0xff]
  %v20 = vld [vmem:[%s0 + $0x28] sm:$0xff]
  %v21 = vld [vmem:[%s0 + $0x30] sm:$0xff]
  %v22 = vld [vmem:[%s0 + $0x38] sm:$0xff]
  %v23 = vld [vmem:[%s0 + $0x40] sm:$0xff]
  %v24 = vld [vmem:[%s0 + $0x48] sm:$0xff]
  %v25 = vld [vmem:[%s0 + $0x50] sm:$0xff]
  %v26 = vld [vmem:[%s0 + $0x58] sm:$0xff]
  %v27 = vld [vmem:[%s0 + $0x60] sm:$0xff]
  %v28 = vld [vmem:[%s0 + $0x68] sm:$0xff]
  %v29 = vld [vmem:[%s0 + $0x70] sm:$0xff]
  %v30 = vld [vmem:[%s0 + $0x78] sm:$0xff]
  %v31 = vld [vmem:[%s1] sm:$0xf]
  %v32 = vld [vmem:[%s1 + $0x4] sm:$0xf]
  %v33 = vld [vmem:[%s1 + $0x8] sm:$0xf]
  %v34 = vld [vmem:[%s1 + $0xc] sm:$0xf]
  %v35 = vld [vmem:[%s1 + $0x10] sm:$0xf]
  %v36 = vld [vmem:[%s1 + $0x14] sm:$0xf]
  %v37 = vld [vmem:[%s1 + $0x18] sm:$0xf]
  %v38 = vld [vmem:[%s1 + $0x1c] sm:$0xf]
  %v39 = vld [vmem:[%s1 + $0x20] sm:$0xf]
  %v40 = vld [vmem:[%s1 + $0x24] sm:$0xf]
  %v41 = vld [vmem:[%s1 + $0x28] sm:$0xf]
  %v42 = vld [vmem:[%s1 + $0x2c] sm:$0xf]
  %v43 = vld [vmem:[%s1 + $0x30] sm:$0xf]
  %v44 = vld [vmem:[%s1 + $0x34] sm:$0xf]
  %v45 = vld [vmem:[%s1 + $0x38] sm:$0xf]
  %v46 = vld [vmem:[%s1 + $0x3c] sm:$0xf]
  %v47 = vld [vmem:[%s1 + $0x40] sm:$0xf]
  %v48 = vld [vmem:[%s1 + $0x44] sm:$0xf]
  %v49 = vld [vmem:[%s1 + $0x48] sm:$0xf]
  %v50 = vld [vmem:[%s1 + $0x4c] sm:$0xf]
  %v51 = vld [vmem:[%s1 + $0x50] sm:$0xf]
  %v52 = vld [vmem:[%s1 + $0x54] sm:$0xf]
  %v53 = vld [vmem:[%s1 + $0x58] sm:$0xf]
  %v54 = vld [vmem:[%s1 + $0x5c] sm:$0xf]
  %v55 = vld [vmem:[%s1 + $0x60] sm:$0xf]
  %v56 = vld [vmem:[%s1 + $0x64] sm:$0xf]
  %v57 = vld [vmem:[%s1 + $0x68] sm:$0xf]
  %v58 = vld [vmem:[%s1 + $0x6c] sm:$0xf]
  %v59 = vld [vmem:[%s1 + $0x70] sm:$0xf]
  %v60 = vld [vmem:[%s1 + $0x74] sm:$0xf]
  %v61 = vld [vmem:[%s1 + $0x78] sm:$0xf]
  %v62 = vld [vmem:[%s1 + $0x7c] sm:$0xf]
  %v63 = vld [vmem:[%s1 + $0x80] sm:$0xf]
  %v64 = vld [vmem:[%s1 + $0x84] sm:$0xf]
  %v65 = vld [vmem:[%s1 + $0x88] sm:$0xf]
  %v66 = vld [vmem:[%s1 + $0x8c] sm:$0xf]
  %v67 = vld [vmem:[%s1 + $0x90] sm:$0xf]
  %v68 = vld [vmem:[%s1 + $0x94] sm:$0xf]
  %v69 = vld [vmem:[%s1 + $0x98] sm:$0xf]
  %v70 = vld [vmem:[%s1 + $0x9c] sm:$0xf]
  %v71 = vld [vmem:[%s1 + $0xa0] sm:$0xf]
  %v72 = vld [vmem:[%s1 + $0xa4] sm:$0xf]
  %v73 = vld [vmem:[%s1 + $0xa8] sm:$0xf]
  %v74 = vld [vmem:[%s1 + $0xac] sm:$0xf]
  %v75 = vld [vmem:[%s1 + $0xb0] sm:$0xf]
  %v76 = vld [vmem:[%s1 + $0xb4] sm:$0xf]
  %v77 = vld [vmem:[%s1 + $0xb8] sm:$0xf]
  %v78 = vld [vmem:[%s1 + $0xbc] sm:$0xf]
  %v79 = vld [vmem:[%s1 + $0xc0] sm:$0xf]
  %v80 = vld [vmem:[%s1 + $0xc4] sm:$0xf]
  %v81 = vld [vmem:[%s1 + $0xc8] sm:$0xf]
  %v82 = vld [vmem:[%s1 + $0xcc] sm:$0xf]
  %v83 = vld [vmem:[%s1 + $0xd0] sm:$0xf]
  %v84 = vld [vmem:[%s1 + $0xd4] sm:$0xf]
  %v85 = vld [vmem:[%s1 + $0xd8] sm:$0xf]
  %v86 = vld [vmem:[%s1 + $0xdc] sm:$0xf]
  %v87 = vld [vmem:[%s1 + $0xe0] sm:$0xf]
  %v88 = vld [vmem:[%s1 + $0xe4] sm:$0xf]
  %v89 = vld [vmem:[%s1 + $0xe8] sm:$0xf]
  %v90 = vld [vmem:[%s1 + $0xec] sm:$0xf]
  %v91 = vld [vmem:[%s1 + $0xf0] sm:$0xf]
  %v92 = vld [vmem:[%s1 + $0xf4] sm:$0xf]
  %v93 = vld [vmem:[%s1 + $0xf8] sm:$0xf]
  %v94 = vld [vmem:[%s1 + $0xfc] sm:$0xf]
  %v95 = vld [vmem:[%s1 + $0x100] sm:$0xf]
  %v96 = vld [vmem:[%s1 + $0x104] sm:$0xf]
  %v97 = vld [vmem:[%s1 + $0x108] sm:$0xf]
  %v98 = vld [vmem:[%s1 + $0x10c] sm:$0xf]
  %v99 = vld [vmem:[%s1 + $0x110] sm:$0xf]
  %v100 = vld [vmem:[%s1 + $0x114] sm:$0xf]
  %v101 = vld [vmem:[%s1 + $0x118] sm:$0xf]
  %v102 = vld [vmem:[%s1 + $0x11c] sm:$0xf]
  %v103 = vld [vmem:[%s1 + $0x120] sm:$0xf]
  %v104 = vld [vmem:[%s1 + $0x124] sm:$0xf]
  %v105 = vld [vmem:[%s1 + $0x128] sm:$0xf]
  %v106 = vld [vmem:[%s1 + $0x12c] sm:$0xf]
  %v107 = vld [vmem:[%s1 + $0x130] sm:$0xf]
  %v108 = vld [vmem:[%s1 + $0x134] sm:$0xf]
  %v109 = vld [vmem:[%s1 + $0x138] sm:$0xf]
  %v110 = vld [vmem:[%s1 + $0x13c] sm:$0xf]
  %v111 = vld [vmem:[%s1 + $0x140] sm:$0xf]
  %v112 = vld [vmem:[%s1 + $0x144] sm:$0xf]
  %v113 = vld [vmem:[%s1 + $0x148] sm:$0xf]
  %v114 = vld [vmem:[%s1 + $0x14c] sm:$0xf]
  %v115 = vld [vmem:[%s1 + $0x150] sm:$0xf]
  %v116 = vld [vmem:[%s1 + $0x154] sm:$0xf]
  %v117 = vld [vmem:[%s1 + $0x158] sm:$0xf]
  %v118 = vld [vmem:[%s1 + $0x15c] sm:$0xf]
  %v119 = vld [vmem:[%s1 + $0x160] sm:$0xf]
  %v120 = vld [vmem:[%s1 + $0x164] sm:$0xf]
  %v121 = vld [vmem:[%s1 + $0x168] sm:$0xf]
  %v122 = vld [vmem:[%s1 + $0x16c] sm:$0xf]
  %v123 = vld [vmem:[%s1 + $0x170] sm:$0xf]
  %v124 = vld [vmem:[%s1 + $0x174] sm:$0xf]
  %v125 = vld [vmem:[%s1 + $0x178] sm:$0xf]
  %v126 = vld [vmem:[%s1 + $0x17c] sm:$0xf]
  %v127 = vld [vmem:[%s1 + $0x180] sm:$0xf]
  %v128 = vld [vmem:[%s1 + $0x184] sm:$0xf]
  %v129 = vld [vmem:[%s1 + $0x188] sm:$0xf]
  %v130 = vld [vmem:[%s1 + $0x18c] sm:$0xf]
  %v131 = vld [vmem:[%s1 + $0x190] sm:$0xf]
  %v132 = vld [vmem:[%s1 + $0x194] sm:$0xf]
  %v133 = vld [vmem:[%s1 + $0x198] sm:$0xf]
  %v134 = vld [vmem:[%s1 + $0x19c] sm:$0xf]
  %v135 = vld [vmem:[%s1 + $0x1a0] sm:$0xf]
  %v136 = vld [vmem:[%s1 + $0x1a4] sm:$0xf]
  %v137 = vld [vmem:[%s1 + $0x1a8] sm:$0xf]
  %v138 = vld [vmem:[%s1 + $0x1ac] sm:$0xf]
  %v139 = vld [vmem:[%s1 + $0x1b0] sm:$0xf]
  %v140 = vld [vmem:[%s1 + $0x1b4] sm:$0xf]
  %v141 = vld [vmem:[%s1 + $0x1b8] sm:$0xf]
  %v142 = vld [vmem:[%s1 + $0x1bc] sm:$0xf]
  %v143 = vld [vmem:[%s1 + $0x1c0] sm:$0xf]
  %v144 = vld [vmem:[%s1 + $0x1c4] sm:$0xf]
  %v145 = vld [vmem:[%s1 + $0x1c8] sm:$0xf]
  %v146 = vld [vmem:[%s1 + $0x1cc] sm:$0xf]
  %v147 = vld [vmem:[%s1 + $0x1d0] sm:$0xf]
  %v148 = vld [vmem:[%s1 + $0x1d4] sm:$0xf]
  %v149 = vld [vmem:[%s1 + $0x1d8] sm:$0xf]
  %v150 = vld [vmem:[%s1 + $0x1dc] sm:$0xf]
  %v151 = vld [vmem:[%s1 + $0x1e0] sm:$0xf]
  %v152 = vld [vmem:[%s1 + $0x1e4] sm:$0xf]
  %v153 = vld [vmem:[%s1 + $0x1e8] sm:$0xf]
  %v154 = vld [vmem:[%s1 + $0x1ec] sm:$0xf]
  %v155 = vld [vmem:[%s1 + $0x1f0] sm:$0xf]
  %v156 = vld [vmem:[%s1 + $0x1f4] sm:$0xf]
  %v157 = vld [vmem:[%s1 + $0x1f8] sm:$0xf]
  %v158 = vld [vmem:[%s1 + $0x1fc] sm:$0xf]
  %v159 = vld [vmem:[%s2] sm:$0x1]
  %v161 = vlaneseq
  %v162 = vshrl.u32 %v161, 7
  %v163 = vsub.s32 0, %v162
  %v164 = vrot.slane %v159, %v163
  %v182 = vunpack.c.l.b16 %v15
  %v183 = vunpack.c.h.b16 %v15
  %v184 = vunpack.c.l.b16 %v16
  %v185 = vunpack.c.h.b16 %v16
  %v186 = vunpack.c.l.b16 %v17
  %v187 = vunpack.c.h.b16 %v17
  %v188 = vunpack.c.l.b16 %v18
  %v189 = vunpack.c.h.b16 %v18
  %v190 = vunpack.c.l.b16 %v19
  %v191 = vunpack.c.h.b16 %v19
  %v192 = vunpack.c.l.b16 %v20
  %v193 = vunpack.c.h.b16 %v20
  %v194 = vunpack.c.l.b16 %v21
  %v195 = vunpack.c.h.b16 %v21
  %v196 = vunpack.c.l.b16 %v22
  %v197 = vunpack.c.h.b16 %v22
  %v198 = vunpack.c.l.b16 %v23
  %v199 = vunpack.c.h.b16 %v23
  %v200 = vunpack.c.l.b16 %v24
  %v201 = vunpack.c.h.b16 %v24
  %v202 = vunpack.c.l.b16 %v25
  %v203 = vunpack.c.h.b16 %v25
  %v204 = vunpack.c.l.b16 %v26
  %v205 = vunpack.c.h.b16 %v26
  %v206 = vunpack.c.l.b16 %v27
  %v207 = vunpack.c.h.b16 %v27
  %v208 = vunpack.c.l.b16 %v28
  %v209 = vunpack.c.h.b16 %v28
  %v210 = vunpack.c.l.b16 %v29
  %v211 = vunpack.c.h.b16 %v29
  %v212 = vunpack.c.l.b16 %v30
  %v213 = vunpack.c.h.b16 %v30
  %v214 = vpack.c.b16 %v190, %v182
  %v215 = vpack.c.b16 %v191, %v183
  %v216 = vpack.c.b16 %v192, %v184
  %v217 = vpack.c.b16 %v193, %v185
  %v218 = vpack.c.b16 %v194, %v186
  %v219 = vpack.c.b16 %v195, %v187
  %v220 = vpack.c.b16 %v196, %v188
  %v221 = vpack.c.b16 %v197, %v189
  %v222 = vpack.c.b16 %v206, %v198
  %v223 = vpack.c.b16 %v207, %v199
  %v224 = vpack.c.b16 %v208, %v200
  %v225 = vpack.c.b16 %v209, %v201
  %v226 = vpack.c.b16 %v210, %v202
  %v227 = vpack.c.b16 %v211, %v203
  %v228 = vpack.c.b16 %v212, %v204
  %v229 = vpack.c.b16 %v213, %v205
  %v374 = vunpack.c.l.b16 %v31
  %v375 = vunpack.c.l.b16 %v32
  %v376 = vunpack.c.l.b16 %v33
  %v377 = vunpack.c.l.b16 %v34
  %v378 = vunpack.c.l.b16 %v35
  %v379 = vunpack.c.l.b16 %v36
  %v380 = vunpack.c.l.b16 %v37
  %v381 = vunpack.c.l.b16 %v38
  %v382 = vunpack.c.l.b16 %v39
  %v383 = vunpack.c.l.b16 %v40
  %v384 = vunpack.c.l.b16 %v41
  %v385 = vunpack.c.l.b16 %v42
  %v386 = vunpack.c.l.b16 %v43
  %v387 = vunpack.c.l.b16 %v44
  %v388 = vunpack.c.l.b16 %v45
  %v389 = vunpack.c.l.b16 %v46
  %v390 = vunpack.c.l.b16 %v47
  %v391 = vunpack.c.l.b16 %v48
  %v392 = vunpack.c.l.b16 %v49
  %v393 = vunpack.c.l.b16 %v50
  %v394 = vunpack.c.l.b16 %v51
  %v395 = vunpack.c.l.b16 %v52
  %v396 = vunpack.c.l.b16 %v53
  %v397 = vunpack.c.l.b16 %v54
  %v398 = vunpack.c.l.b16 %v55
  %v399 = vunpack.c.l.b16 %v56
  %v400 = vunpack.c.l.b16 %v57
  %v401 = vunpack.c.l.b16 %v58
  %v402 = vunpack.c.l.b16 %v59
  %v403 = vunpack.c.l.b16 %v60
  %v404 = vunpack.c.l.b16 %v61
  %v405 = vunpack.c.l.b16 %v62
  %v406 = vunpack.c.l.b16 %v63
  %v407 = vunpack.c.l.b16 %v64
  %v408 = vunpack.c.l.b16 %v65
  %v409 = vunpack.c.l.b16 %v66
  %v410 = vunpack.c.l.b16 %v67
  %v411 = vunpack.c.l.b16 %v68
  %v412 = vunpack.c.l.b16 %v69
  %v413 = vunpack.c.l.b16 %v70
  %v414 = vunpack.c.l.b16 %v71
  %v415 = vunpack.c.l.b16 %v72
  %v416 = vunpack.c.l.b16 %v73
  %v417 = vunpack.c.l.b16 %v74
  %v418 = vunpack.c.l.b16 %v75
  %v419 = vunpack.c.l.b16 %v76
  %v420 = vunpack.c.l.b16 %v77
  %v421 = vunpack.c.l.b16 %v78
  %v422 = vunpack.c.l.b16 %v79
  %v423 = vunpack.c.l.b16 %v80
  %v424 = vunpack.c.l.b16 %v81
  %v425 = vunpack.c.l.b16 %v82
  %v426 = vunpack.c.l.b16 %v83
  %v427 = vunpack.c.l.b16 %v84
  %v428 = vunpack.c.l.b16 %v85
  %v429 = vunpack.c.l.b16 %v86
  %v430 = vunpack.c.l.b16 %v87
  %v431 = vunpack.c.l.b16 %v88
  %v432 = vunpack.c.l.b16 %v89
  %v433 = vunpack.c.l.b16 %v90
  %v434 = vunpack.c.l.b16 %v91
  %v435 = vunpack.c.l.b16 %v92
  %v436 = vunpack.c.l.b16 %v93
  %v437 = vunpack.c.l.b16 %v94
  %v438 = vunpack.c.l.b16 %v95
  %v439 = vunpack.c.l.b16 %v96
  %v440 = vunpack.c.l.b16 %v97
  %v441 = vunpack.c.l.b16 %v98
  %v442 = vunpack.c.l.b16 %v99
  %v443 = vunpack.c.l.b16 %v100
  %v444 = vunpack.c.l.b16 %v101
  %v445 = vunpack.c.l.b16 %v102
  %v446 = vunpack.c.l.b16 %v103
  %v447 = vunpack.c.l.b16 %v104
  %v448 = vunpack.c.l.b16 %v105
  %v449 = vunpack.c.l.b16 %v106
  %v450 = vunpack.c.l.b16 %v107
  %v451 = vunpack.c.l.b16 %v108
  %v452 = vunpack.c.l.b16 %v109
  %v453 = vunpack.c.l.b16 %v110
  %v454 = vunpack.c.l.b16 %v111
  %v455 = vunpack.c.l.b16 %v112
  %v456 = vunpack.c.l.b16 %v113
  %v457 = vunpack.c.l.b16 %v114
  %v458 = vunpack.c.l.b16 %v115
  %v459 = vunpack.c.l.b16 %v116
  %v460 = vunpack.c.l.b16 %v117
  %v461 = vunpack.c.l.b16 %v118
  %v462 = vunpack.c.l.b16 %v119
  %v463 = vunpack.c.l.b16 %v120
  %v464 = vunpack.c.l.b16 %v121
  %v465 = vunpack.c.l.b16 %v122
  %v466 = vunpack.c.l.b16 %v123
  %v467 = vunpack.c.l.b16 %v124
  %v468 = vunpack.c.l.b16 %v125
  %v469 = vunpack.c.l.b16 %v126
  %v470 = vunpack.c.l.b16 %v127
  %v471 = vunpack.c.l.b16 %v128
  %v472 = vunpack.c.l.b16 %v129
  %v473 = vunpack.c.l.b16 %v130
  %v474 = vunpack.c.l.b16 %v131
  %v475 = vunpack.c.l.b16 %v132
  %v476 = vunpack.c.l.b16 %v133
  %v477 = vunpack.c.l.b16 %v134
  %v478 = vunpack.c.l.b16 %v135
  %v479 = vunpack.c.l.b16 %v136
  %v480 = vunpack.c.l.b16 %v137
  %v481 = vunpack.c.l.b16 %v138
  %v482 = vunpack.c.l.b16 %v139
  %v483 = vunpack.c.l.b16 %v140
  %v484 = vunpack.c.l.b16 %v141
  %v485 = vunpack.c.l.b16 %v142
  %v486 = vunpack.c.l.b16 %v143
  %v487 = vunpack.c.l.b16 %v144
  %v488 = vunpack.c.l.b16 %v145
  %v489 = vunpack.c.l.b16 %v146
  %v490 = vunpack.c.l.b16 %v147
  %v491 = vunpack.c.l.b16 %v148
  %v492 = vunpack.c.l.b16 %v149
  %v493 = vunpack.c.l.b16 %v150
  %v494 = vunpack.c.l.b16 %v151
  %v495 = vunpack.c.l.b16 %v152
  %v496 = vunpack.c.l.b16 %v153
  %v497 = vunpack.c.l.b16 %v154
  %v498 = vunpack.c.l.b16 %v155
  %v499 = vunpack.c.l.b16 %v156
  %v500 = vunpack.c.l.b16 %v157
  %v501 = vunpack.c.l.b16 %v158
  %v502 = vpack.c.b16 %v375, %v374
  %v503 = vpack.c.b16 %v377, %v376
  %v504 = vpack.c.b16 %v379, %v378
  %v505 = vpack.c.b16 %v381, %v380
  %v506 = vpack.c.b16 %v383, %v382
  %v507 = vpack.c.b16 %v385, %v384
  %v508 = vpack.c.b16 %v387, %v386
  %v509 = vpack.c.b16 %v389, %v388
  %v510 = vpack.c.b16 %v391, %v390
  %v511 = vpack.c.b16 %v393, %v392
  %v512 = vpack.c.b16 %v395, %v394
  %v513 = vpack.c.b16 %v397, %v396
  %v514 = vpack.c.b16 %v399, %v398
  %v515 = vpack.c.b16 %v401, %v400
  %v516 = vpack.c.b16 %v403, %v402
  %v517 = vpack.c.b16 %v405, %v404
  %v518 = vpack.c.b16 %v407, %v406
  %v519 = vpack.c.b16 %v409, %v408
  %v520 = vpack.c.b16 %v411, %v410
  %v521 = vpack.c.b16 %v413, %v412
  %v522 = vpack.c.b16 %v415, %v414
  %v523 = vpack.c.b16 %v417, %v416
  %v524 = vpack.c.b16 %v419, %v418
  %v525 = vpack.c.b16 %v421, %v420
  %v526 = vpack.c.b16 %v423, %v422
  %v527 = vpack.c.b16 %v425, %v424
  %v528 = vpack.c.b16 %v427, %v426
  %v529 = vpack.c.b16 %v429, %v428
  %v530 = vpack.c.b16 %v431, %v430
  %v531 = vpack.c.b16 %v433, %v432
  %v532 = vpack.c.b16 %v435, %v434
  %v533 = vpack.c.b16 %v437, %v436
  %v534 = vpack.c.b16 %v439, %v438
  %v535 = vpack.c.b16 %v441, %v440
  %v536 = vpack.c.b16 %v443, %v442
  %v537 = vpack.c.b16 %v445, %v444
  %v538 = vpack.c.b16 %v447, %v446
  %v539 = vpack.c.b16 %v449, %v448
  %v540 = vpack.c.b16 %v451, %v450
  %v541 = vpack.c.b16 %v453, %v452
  %v542 = vpack.c.b16 %v455, %v454
  %v543 = vpack.c.b16 %v457, %v456
  %v544 = vpack.c.b16 %v459, %v458
  %v545 = vpack.c.b16 %v461, %v460
  %v546 = vpack.c.b16 %v463, %v462
  %v547 = vpack.c.b16 %v465, %v464
  %v548 = vpack.c.b16 %v467, %v466
  %v549 = vpack.c.b16 %v469, %v468
  %v550 = vpack.c.b16 %v471, %v470
  %v551 = vpack.c.b16 %v473, %v472
  %v552 = vpack.c.b16 %v475, %v474
  %v553 = vpack.c.b16 %v477, %v476
  %v554 = vpack.c.b16 %v479, %v478
  %v555 = vpack.c.b16 %v481, %v480
  %v556 = vpack.c.b16 %v483, %v482
  %v557 = vpack.c.b16 %v485, %v484
  %v558 = vpack.c.b16 %v487, %v486
  %v559 = vpack.c.b16 %v489, %v488
  %v560 = vpack.c.b16 %v491, %v490
  %v561 = vpack.c.b16 %v493, %v492
  %v562 = vpack.c.b16 %v495, %v494
  %v563 = vpack.c.b16 %v497, %v496
  %v564 = vpack.c.b16 %v499, %v498
  %v565 = vpack.c.b16 %v501, %v500
  %630 = vmatprep.subr.bf16.mxu0 0
  %631 = vmatpush1.bf16.msra.mxu0 %v509
  %632 = vmatprep.subr.bf16.mxu0 0
  %633 = vmatpush1.bf16.msra.mxu0 %v508
  %634 = vmatprep.subr.bf16.mxu0 0
  %635 = vmatpush1.bf16.msra.mxu0 %v507
  %636 = vmatprep.subr.bf16.mxu0 0
  %637 = vmatpush1.bf16.msra.mxu0 %v506
  %638 = vmatprep.subr.bf16.mxu0 0
  %639 = vmatpush1.bf16.msra.mxu0 %v505
  %640 = vmatprep.subr.bf16.mxu0 0
  %641 = vmatpush1.bf16.msra.mxu0 %v504
  %642 = vmatprep.subr.bf16.mxu0 0
  %643 = vmatpush1.bf16.msra.mxu0 %v503
  %644 = vmatprep.subr.bf16.mxu0 0
  %645 = vmatpush1.bf16.msra.mxu0 %v502
  %646 = vmatprep.subr.bf16.mxu0 0
  %647 = vmatpush2.bf16.msra.mxu0 %v517
  %648 = vmatprep.subr.bf16.mxu0 0
  %649 = vmatpush2.bf16.msra.mxu0 %v516
  %650 = vmatprep.subr.bf16.mxu0 0
  %651 = vmatpush2.bf16.msra.mxu0 %v515
  %652 = vmatprep.subr.bf16.mxu0 0
  %653 = vmatpush2.bf16.msra.mxu0 %v514
  %654 = vmatprep.subr.bf16.mxu0 0
  %655 = vmatpush2.bf16.msra.mxu0 %v513
  %656 = vmatprep.subr.bf16.mxu0 0
  %657 = vmatpush2.bf16.msra.mxu0 %v512
  %658 = vmatprep.subr.bf16.mxu0 0
  %659 = vmatpush2.bf16.msra.mxu0 %v511
  %660 = vmatprep.subr.bf16.mxu0 0
  %661 = vmatpush2.bf16.msra.mxu0 %v510
  %662 = vmatprep.mubr.bf16.mxu0 %v215
  %663 = vmatmul.mubr.bf16.gmra.mxu0 %v214
  %v664 = vpop.f32.mrf.mxu0
  %v665 = vadd.f32 %v164, %v664
  %v666 = vpop.f32.mrf.mxu0
  %v667 = vpop.f32.mrf.mxu0
  %v668 = vadd.f32 %v164, %v667
  %v669 = vpop.f32.mrf.mxu0
  %670 = vmatprep.mubr.bf16.mxu0 %v223
  %671 = vmatmul.mubr.bf16.gmra.mxu0 %v222
  %v672 = vpop.f32.mrf.mxu0
  %v673 = vadd.f32 %v164, %v672
  %v674 = vpop.f32.mrf.mxu0
  %v675 = vpop.f32.mrf.mxu0
  %v676 = vadd.f32 %v164, %v675
  %v677 = vpop.f32.mrf.mxu0
  %678 = vdwg.mxu0
  %679 = vmatprep.subr.bf16.mxu0 0
  %680 = vmatpush1.bf16.msra.mxu0 %v525
  %681 = vmatprep.subr.bf16.mxu0 0
  %682 = vmatpush1.bf16.msra.mxu0 %v524
  %683 = vmatprep.subr.bf16.mxu0 0
  %684 = vmatpush1.bf16.msra.mxu0 %v523
  %685 = vmatprep.subr.bf16.mxu0 0
  %686 = vmatpush1.bf16.msra.mxu0 %v522
  %687 = vmatprep.subr.bf16.mxu0 0
  %688 = vmatpush1.bf16.msra.mxu0 %v521
  %689 = vmatprep.subr.bf16.mxu0 0
  %690 = vmatpush1.bf16.msra.mxu0 %v520
  %691 = vmatprep.subr.bf16.mxu0 0
  %692 = vmatpush1.bf16.msra.mxu0 %v519
  %693 = vmatprep.subr.bf16.mxu0 0
  %694 = vmatpush1.bf16.msra.mxu0 %v518
  %695 = vmatprep.subr.bf16.mxu0 0
  %696 = vmatpush2.bf16.msra.mxu0 %v533
  %697 = vmatprep.subr.bf16.mxu0 0
  %698 = vmatpush2.bf16.msra.mxu0 %v532
  %699 = vmatprep.subr.bf16.mxu0 0
  %700 = vmatpush2.bf16.msra.mxu0 %v531
  %701 = vmatprep.subr.bf16.mxu0 0
  %702 = vmatpush2.bf16.msra.mxu0 %v530
  %703 = vmatprep.subr.bf16.mxu0 0
  %704 = vmatpush2.bf16.msra.mxu0 %v529
  %705 = vmatprep.subr.bf16.mxu0 0
  %706 = vmatpush2.bf16.msra.mxu0 %v528
  %707 = vmatprep.subr.bf16.mxu0 0
  %708 = vmatpush2.bf16.msra.mxu0 %v527
  %709 = vmatprep.subr.bf16.mxu0 0
  %710 = vmatpush2.bf16.msra.mxu0 %v526
  %711 = vmatprep.mubr.bf16.mxu0 %v217
  %712 = vmatmul.mubr.bf16.gmra.mxu0 %v216
  %v713 = vpop.f32.mrf.mxu0
  %v714 = vadd.f32 %v665, %v713
  %v715 = vpop.f32.mrf.mxu0
  %v716 = vpop.f32.mrf.mxu0
  %v717 = vadd.f32 %v668, %v716
  %v718 = vpop.f32.mrf.mxu0
  %719 = vmatprep.mubr.bf16.mxu0 %v225
  %720 = vmatmul.mubr.bf16.gmra.mxu0 %v224
  %v721 = vpop.f32.mrf.mxu0
  %v722 = vadd.f32 %v673, %v721
  %v723 = vpop.f32.mrf.mxu0
  %v724 = vpop.f32.mrf.mxu0
  %v725 = vadd.f32 %v676, %v724
  %v726 = vpop.f32.mrf.mxu0
  %727 = vdwg.mxu0
  %728 = vmatprep.subr.bf16.mxu0 0
  %729 = vmatpush1.bf16.msra.mxu0 %v541
  %730 = vmatprep.subr.bf16.mxu0 0
  %731 = vmatpush1.bf16.msra.mxu0 %v540
  %732 = vmatprep.subr.bf16.mxu0 0
  %733 = vmatpush1.bf16.msra.mxu0 %v539
  %734 = vmatprep.subr.bf16.mxu0 0
  %735 = vmatpush1.bf16.msra.mxu0 %v538
  %736 = vmatprep.subr.bf16.mxu0 0
  %737 = vmatpush1.bf16.msra.mxu0 %v537
  %738 = vmatprep.subr.bf16.mxu0 0
  %739 = vmatpush1.bf16.msra.mxu0 %v536
  %740 = vmatprep.subr.bf16.mxu0 0
  %741 = vmatpush1.bf16.msra.mxu0 %v535
  %742 = vmatprep.subr.bf16.mxu0 0
  %743 = vmatpush1.bf16.msra.mxu0 %v534
  %744 = vmatprep.subr.bf16.mxu0 0
  %745 = vmatpush2.bf16.msra.mxu0 %v549
  %746 = vmatprep.subr.bf16.mxu0 0
  %747 = vmatpush2.bf16.msra.mxu0 %v548
  %748 = vmatprep.subr.bf16.mxu0 0
  %749 = vmatpush2.bf16.msra.mxu0 %v547
  %750 = vmatprep.subr.bf16.mxu0 0
  %751 = vmatpush2.bf16.msra.mxu0 %v546
  %752 = vmatprep.subr.bf16.mxu0 0
  %753 = vmatpush2.bf16.msra.mxu0 %v545
  %754 = vmatprep.subr.bf16.mxu0 0
  %755 = vmatpush2.bf16.msra.mxu0 %v544
  %756 = vmatprep.subr.bf16.mxu0 0
  %757 = vmatpush2.bf16.msra.mxu0 %v543
  %758 = vmatprep.subr.bf16.mxu0 0
  %759 = vmatpush2.bf16.msra.mxu0 %v542
  %760 = vmatprep.mubr.bf16.mxu0 %v219
  %761 = vmatmul.mubr.bf16.gmra.mxu0 %v218
  %v762 = vpop.f32.mrf.mxu0
  %v763 = vadd.f32 %v714, %v762
  %v764 = vpop.f32.mrf.mxu0
  %v765 = vpop.f32.mrf.mxu0
  %v766 = vadd.f32 %v717, %v765
  %v767 = vpop.f32.mrf.mxu0
  %768 = vmatprep.mubr.bf16.mxu0 %v227
  %769 = vmatmul.mubr.bf16.gmra.mxu0 %v226
  %v770 = vpop.f32.mrf.mxu0
  %v771 = vadd.f32 %v722, %v770
  %v772 = vpop.f32.mrf.mxu0
  %v773 = vpop.f32.mrf.mxu0
  %v774 = vadd.f32 %v725, %v773
  %v775 = vpop.f32.mrf.mxu0
  %776 = vdwg.mxu0
  %777 = vmatprep.subr.bf16.mxu0 0
  %778 = vmatpush1.bf16.msra.mxu0 %v557
  %779 = vmatprep.subr.bf16.mxu0 0
  %780 = vmatpush1.bf16.msra.mxu0 %v556
  %781 = vmatprep.subr.bf16.mxu0 0
  %782 = vmatpush1.bf16.msra.mxu0 %v555
  %783 = vmatprep.subr.bf16.mxu0 0
  %784 = vmatpush1.bf16.msra.mxu0 %v554
  %785 = vmatprep.subr.bf16.mxu0 0
  %786 = vmatpush1.bf16.msra.mxu0 %v553
  %787 = vmatprep.subr.bf16.mxu0 0
  %788 = vmatpush1.bf16.msra.mxu0 %v552
  %789 = vmatprep.subr.bf16.mxu0 0
  %790 = vmatpush1.bf16.msra.mxu0 %v551
  %791 = vmatprep.subr.bf16.mxu0 0
  %792 = vmatpush1.bf16.msra.mxu0 %v550
  %793 = vmatprep.subr.bf16.mxu0 0
  %794 = vmatpush2.bf16.msra.mxu0 %v565
  %795 = vmatprep.subr.bf16.mxu0 0
  %796 = vmatpush2.bf16.msra.mxu0 %v564
  %797 = vmatprep.subr.bf16.mxu0 0
  %798 = vmatpush2.bf16.msra.mxu0 %v563
  %799 = vmatprep.subr.bf16.mxu0 0
  %800 = vmatpush2.bf16.msra.mxu0 %v562
  %801 = vmatprep.subr.bf16.mxu0 0
  %802 = vmatpush2.bf16.msra.mxu0 %v561
  %803 = vmatprep.subr.bf16.mxu0 0
  %804 = vmatpush2.bf16.msra.mxu0 %v560
  %805 = vmatprep.subr.bf16.mxu0 0
  %806 = vmatpush2.bf16.msra.mxu0 %v559
  %807 = vmatprep.subr.bf16.mxu0 0
  %808 = vmatpush2.bf16.msra.mxu0 %v558
  %809 = vmatprep.mubr.bf16.mxu0 %v221
  %810 = vmatmul.mubr.bf16.gmra.mxu0 %v220
  %v811 = vpop.f32.mrf.mxu0
  %v812 = vadd.f32 %v763, %v811
  %v813 = vpop.f32.mrf.mxu0
  %v814 = vpop.f32.mrf.mxu0
  %v815 = vadd.f32 %v766, %v814
  %v816 = vpop.f32.mrf.mxu0
  %817 = vmatprep.mubr.bf16.mxu0 %v229
  %818 = vmatmul.mubr.bf16.gmra.mxu0 %v228
  %v819 = vpop.f32.mrf.mxu0
  %v820 = vadd.f32 %v771, %v819
  %v821 = vpop.f32.mrf.mxu0
  %v822 = vpop.f32.mrf.mxu0
  %v823 = vadd.f32 %v774, %v822
  %v824 = vpop.f32.mrf.mxu0
  %825 = vdwg.mxu0
  %vm826 = vcmp.gt.f32.partialorder %v812, 0.0
  %vm827 = vcmp.gt.f32.partialorder %v815, 0.0
  %vm828 = vcmp.gt.f32.partialorder %v820, 0.0
  %vm829 = vcmp.gt.f32.partialorder %v823, 0.0
  %v830 = vmul.f32 %v812, 0.2
  %v831 = vmul.f32 %v815, 0.2
  %v832 = vmul.f32 %v820, 0.2
  %v833 = vmul.f32 %v823, 0.2
  %v834 = vsel %vm826, %v812, %v830
  %v835 = vsel %vm827, %v815, %v831
  %v836 = vsel %vm828, %v820, %v832
  %v837 = vsel %vm829, %v823, %v833
  %v838 = vpack.c.bf16 %v835, %v834
  %v839 = vpack.c.bf16 %v837, %v836
  %v842 = vunpack.c.l.b16 %v838
  %v843 = vunpack.c.h.b16 %v838
  %v844 = vunpack.c.l.b16 %v839
  %v845 = vunpack.c.h.b16 %v839
  %v846 = vpack.c.b16 %v842, %v842
  %v847 = vpack.c.b16 %v843, %v843
  %v848 = vpack.c.b16 %v844, %v844
  %v849 = vpack.c.b16 %v845, %v845
  %854 = vst [vmem:[%s3] sm:$0xf] %v846
  %855 = vst [vmem:[%s3 + $0x4] sm:$0xf] %v847
  %856 = vst [vmem:[%s3 + $0x8] sm:$0xf] %v848
  %857 = vst [vmem:[%s3 + $0xc] sm:$0xf] %v849
  // Predicated region
  $region14: #{transport_t_forward.7} parent=0 // pred_check
    _
  $region15: #{transport_t_forward.7} parent=0 // pred_check_branch
    %859 = sbr.rel (0) target = $region17
  $region16: #{transport_t_forward.7} parent=0 // pred_region
    _
  $region17: #{transport_t_forward.7} parent=0 // pred_fallthru
    _
  // Predicated region
  $region18: #{transport_t_forward.7} parent=0 // pred_check
    _
  $region19: #{transport_t_forward.7} parent=0 // pred_check_branch
    %861 = sbr.rel (0) target = $region21
  $region20: #{transport_t_forward.7} parent=0 // pred_region
    _
  $region21: #{transport_t_forward.7} parent=0 // pred_fallthru
    _

// kernel: transport_t_forward.9
$region0: #{transport_t_forward.9}
  #allocation0 [shape = 'u32[]', space=smem, size = 0x4, offset = 0x4, fixed_abs, tag = 'smem constant byte address 0x4 - core index']
  #allocation1 [shape = 'u32[144,128]{1,0:T(1,128)}', space=vmem, size = 0x12000, scoped, tag = 'internal scratch']
  #allocation2 [shape = 'f32[1,1]{1,0:T(1,128)S(1)}', space=vmem, size = 0x200, scoped, tag = 'scoped memory for transport_t_forward.9']
  %s0 = inlined_call_operand.vmem [shape: bf16[2,1024], index: 0, kind: input, shape index: {}]
  %s1 = inlined_call_operand.vmem [shape: f32[1,1024], index: 1, kind: input, shape index: {}]
  %s2 = inlined_call_operand.<no memory space> [shape: f32[1,1], index: 2, kind: input, shape index: {}]
  %s3 = inlined_call_operand.vmem [shape: f32[2,1], index: 3, kind: output, shape index: {}]
  %s4 = sld [smem:[#allocation0]]
  $region22: #{transport_t_forward.9} parent=0
    _
  %s6 = ssub.s32 1, %s4
  %s7 = scalar_select 0, %s6, %s4
  %v8 = vstv %s2
  %9 = vst [vmem:[#allocation2] sm:$0x1] %v8
  // Predicated region
  $region2: #{transport_t_forward.9} parent=0 // pred_check
    _
  $region3: #{transport_t_forward.9} parent=0 // pred_check_branch
    %11 = sbr.rel (0) target = $region5
  $region4: #{transport_t_forward.9} parent=0 // pred_region
    _
  $region5: #{transport_t_forward.9} parent=0 // pred_fallthru
    _
  // Predicated region
  $region6: #{transport_t_forward.9} parent=0 // pred_check
    _
  $region7: #{transport_t_forward.9} parent=0 // pred_check_branch
    %13 = sbr.rel (0) target = $region9
  $region8: #{transport_t_forward.9} parent=0 // pred_region
    _
  $region9: #{transport_t_forward.9} parent=0 // pred_fallthru
    _
  // Predicated region
  $region10: #{transport_t_forward.9} parent=0 // pred_check
    _
  $region11: #{transport_t_forward.9} parent=0 // pred_check_branch
    %15 = sbr.rel (0) target = $region13
  $region12: #{transport_t_forward.9} parent=0 // pred_region
    _
  $region13: #{transport_t_forward.9} parent=0 // pred_fallthru
    _
  %v16 = vld [vmem:[%s0] sm:$0xff]
  %v17 = vunpack.c.l.bf16 %v16
  %v18 = vunpack.c.h.bf16 %v16
  %v19 = vld [vmem:[%s1] sm:$0xff]
  %v21 = vlaneseq
  %v22 = vshrl.u32 %v21, 7
  %v23 = vsub.s32 0, %v22
  %v24 = vrot.slane %v19, %v23
  %v25 = vlaneseq
  %v26 = vshrl.u32 %v25, 7
  %v27 = vsub.s32 1, %v26
  %v28 = vrot.slane %v19, %v27
  %v29 = vlaneseq
  %v30 = vshrl.u32 %v29, 7
  %v31 = vsub.s32 2, %v30
  %v32 = vrot.slane %v19, %v31
  %v33 = vlaneseq
  %v34 = vshrl.u32 %v33, 7
  %v35 = vsub.s32 3, %v34
  %v36 = vrot.slane %v19, %v35
  %v37 = vlaneseq
  %v38 = vshrl.u32 %v37, 7
  %v39 = vsub.s32 4, %v38
  %v40 = vrot.slane %v19, %v39
  %v41 = vlaneseq
  %v42 = vshrl.u32 %v41, 7
  %v43 = vsub.s32 5, %v42
  %v44 = vrot.slane %v19, %v43
  %v45 = vlaneseq
  %v46 = vshrl.u32 %v45, 7
  %v47 = vsub.s32 6, %v46
  %v48 = vrot.slane %v19, %v47
  %v49 = vlaneseq
  %v50 = vshrl.u32 %v49, 7
  %v51 = vsub.s32 7, %v50
  %v52 = vrot.slane %v19, %v51
  %v53 = vcombine.low %v24, %v28
  %v54 = vcombine.low %v32, %v36
  %v56 = vunpack.c.l.s4 1983009808
  %v57 = vunpack.c.0.s8 %v56
  %v58 = vlaneseq
  %v59 = vshrl.u32 %v58, 7
  %v60 = vsub.s32 %v57, %v59
  %v61 = vrot.slane %v53, %v60
  %v63 = vunpack.c.l.s4 1983009808
  %v64 = vunpack.c.0.s8 %v63
  %v65 = vlaneseq
  %v66 = vshrl.u32 %v65, 7
  %v67 = vsub.s32 %v64, %v66
  %v68 = vrot.slane %v54, %v67
  %v69 = vcombine.low %v61, %v68
  %v70 = vcombine.low %v40, %v44
  %v71 = vcombine.low %v48, %v52
  %v73 = vunpack.c.l.s4 1983009808
  %v74 = vunpack.c.0.s8 %v73
  %v75 = vlaneseq
  %v76 = vshrl.u32 %v75, 7
  %v77 = vsub.s32 %v74, %v76
  %v78 = vrot.slane %v70, %v77
  %v80 = vunpack.c.l.s4 1983009808
  %v81 = vunpack.c.0.s8 %v80
  %v82 = vlaneseq
  %v83 = vshrl.u32 %v82, 7
  %v84 = vsub.s32 %v81, %v83
  %v85 = vrot.slane %v71, %v84
  %v86 = vcombine.low %v78, %v85
  %v89 = vmul.f32 %v17, %v69
  %v90 = vmul.f32 %v18, %v86
  %v93 = vcombine.high %v89, %v89
  %v95 = vunpack.c.l.s4 1983009808
  %v96 = vunpack.c.0.s8 %v95
  %v97 = vlaneseq
  %v98 = vshrl.u32 %v97, 7
  %v99 = vsub.s32 %v96, %v98
  %v100 = vrot.slane %v89, %v99
  %v102 = vunpack.c.l.s4 1983009808
  %v103 = vunpack.c.0.s8 %v102
  %v104 = vlaneseq
  %v105 = vshrl.u32 %v104, 7
  %v106 = vsub.s32 %v103, %v105
  %v107 = vrot.slane %v93, %v106
  %v108 = vcombine.high %v100, %v100
  %v109 = vcombine.high %v107, %v107
  %v110 = vcombine.high %v90, %v90
  %v112 = vunpack.c.l.s4 1983009808
  %v113 = vunpack.c.0.s8 %v112
  %v114 = vlaneseq
  %v115 = vshrl.u32 %v114, 7
  %v116 = vsub.s32 %v113, %v115
  %v117 = vrot.slane %v90, %v116
  %v119 = vunpack.c.l.s4 1983009808
  %v120 = vunpack.c.0.s8 %v119
  %v121 = vlaneseq
  %v122 = vshrl.u32 %v121, 7
  %v123 = vsub.s32 %v120, %v122
  %v124 = vrot.slane %v110, %v123
  %v125 = vcombine.high %v117, %v117
  %v126 = vcombine.high %v124, %v124
  %vm135 = vcmask 1041408
  %v136 = vsel %vm135, %v100, 0.0
  %v137 = vsel %vm135, %v108, 0.0
  %v138 = vadd.f32 %v136, %v137
  %v139 = vsel %vm135, %v107, 0.0
  %v140 = vadd.f32 %v138, %v139
  %v141 = vsel %vm135, %v109, 0.0
  %v142 = vadd.f32 %v140, %v141
  %v143 = vsel %vm135, %v117, 0.0
  %v144 = vadd.f32 %v142, %v143
  %v145 = vsel %vm135, %v125, 0.0
  %v146 = vadd.f32 %v144, %v145
  %v147 = vsel %vm135, %v124, 0.0
  %v148 = vadd.f32 %v146, %v147
  %v149 = vsel %vm135, %v126, 0.0
  %v150 = vadd.f32 %v148, %v149
  %151 = vadd.xlane.f32.xlu0 %v150
  %v152 = vpop.xlane.xlu0 %151
  %v153 = vld [vmem:[#allocation2] sm:$0x1]
  %v155 = vlaneseq
  %v156 = vshrl.u32 %v155, 7
  %v157 = vsub.s32 0, %v156
  %v158 = vrot.slane %v153, %v157
  %v160 = vadd.f32 %v152, %v158
  %vm161 = vcmask 1024
  %162 = vst.msk [vmem:[%s3] sm:$0x3] %vm161, %v160
  // Predicated region
  $region14: #{transport_t_forward.9} parent=0 // pred_check
    _
  $region15: #{transport_t_forward.9} parent=0 // pred_check_branch
    %164 = sbr.rel (0) target = $region17
  $region16: #{transport_t_forward.9} parent=0 // pred_region
    _
  $region17: #{transport_t_forward.9} parent=0 // pred_fallthru
    _
  // Predicated region
  $region18: #{transport_t_forward.9} parent=0 // pred_check
    _
  $region19: #{transport_t_forward.9} parent=0 // pred_check_branch
    %166 = sbr.rel (0) target = $region21
  $region20: #{transport_t_forward.9} parent=0 // pred_region
    _
  $region21: #{transport_t_forward.9} parent=0 // pred_fallthru
    _

// kernel: transport_t_forward.8
$region0: #{transport_t_forward.8}
  #allocation0 [shape = 'u32[]', space=smem, size = 0x4, offset = 0x4, fixed_abs, tag = 'smem constant byte address 0x4 - core index']
  #allocation1 [shape = 'u32[144,128]{1,0:T(1,128)}', space=vmem, size = 0x12000, scoped, tag = 'internal scratch']
  %s0 = inlined_call_operand.vmem [shape: bf16[8,2048], index: 0, kind: input, shape index: {}]
  %s1 = inlined_call_operand.vmem [shape: bf16[2048,256], index: 1, kind: input, shape index: {}]
  %s2 = inlined_call_operand.vmem [shape: f32[1,256], index: 2, kind: input, shape index: {}]
  %s3 = inlined_call_operand.vmem [shape: bf16[8,256], index: 3, kind: output, shape index: {}]
  %s4 = sld [smem:[#allocation0]]
  $region22: #{transport_t_forward.8} parent=0
    _
  %s6 = ssub.s32 1, %s4
  %s7 = scalar_select 0, %s6, %s4
  // Predicated region
  $region2: #{transport_t_forward.8} parent=0 // pred_check
    _
  $region3: #{transport_t_forward.8} parent=0 // pred_check_branch
    %9 = sbr.rel (0) target = $region5
  $region4: #{transport_t_forward.8} parent=0 // pred_region
    _
  $region5: #{transport_t_forward.8} parent=0 // pred_fallthru
    _
  // Predicated region
  $region6: #{transport_t_forward.8} parent=0 // pred_check
    _
  $region7: #{transport_t_forward.8} parent=0 // pred_check_branch
    %11 = sbr.rel (0) target = $region9
  $region8: #{transport_t_forward.8} parent=0 // pred_region
    _
  $region9: #{transport_t_forward.8} parent=0 // pred_fallthru
    _
  // Predicated region
  $region10: #{transport_t_forward.8} parent=0 // pred_check
    _
  $region11: #{transport_t_forward.8} parent=0 // pred_check_branch
    %13 = sbr.rel (0) target = $region13
  $region12: #{transport_t_forward.8} parent=0 // pred_region
    _
  $region13: #{transport_t_forward.8} parent=0 // pred_fallthru
    _
  %v14 = vld [vmem:[%s0] sm:$0xff]
  %v15 = vld [vmem:[%s0 + $0x8] sm:$0xff]
  %v16 = vld [vmem:[%s0 + $0x10] sm:$0xff]
  %v17 = vld [vmem:[%s0 + $0x18] sm:$0xff]
  %v18 = vld [vmem:[%s0 + $0x20] sm:$0xff]
  %v19 = vld [vmem:[%s0 + $0x28] sm:$0xff]
  %v20 = vld [vmem:[%s0 + $0x30] sm:$0xff]
  %v21 = vld [vmem:[%s0 + $0x38] sm:$0xff]
  %v22 = vld [vmem:[%s1] sm:$0xff]
  %v23 = vld [vmem:[%s1 + $0x8] sm:$0xff]
  %v24 = vld [vmem:[%s1 + $0x10] sm:$0xff]
  %v25 = vld [vmem:[%s1 + $0x18] sm:$0xff]
  %v26 = vld [vmem:[%s1 + $0x20] sm:$0xff]
  %v27 = vld [vmem:[%s1 + $0x28] sm:$0xff]
  %v28 = vld [vmem:[%s1 + $0x30] sm:$0xff]
  %v29 = vld [vmem:[%s1 + $0x38] sm:$0xff]
  %v30 = vld [vmem:[%s1 + $0x40] sm:$0xff]
  %v31 = vld [vmem:[%s1 + $0x48] sm:$0xff]
  %v32 = vld [vmem:[%s1 + $0x50] sm:$0xff]
  %v33 = vld [vmem:[%s1 + $0x58] sm:$0xff]
  %v34 = vld [vmem:[%s1 + $0x60] sm:$0xff]
  %v35 = vld [vmem:[%s1 + $0x68] sm:$0xff]
  %v36 = vld [vmem:[%s1 + $0x70] sm:$0xff]
  %v37 = vld [vmem:[%s1 + $0x78] sm:$0xff]
  %v38 = vld [vmem:[%s1 + $0x80] sm:$0xff]
  %v39 = vld [vmem:[%s1 + $0x88] sm:$0xff]
  %v40 = vld [vmem:[%s1 + $0x90] sm:$0xff]
  %v41 = vld [vmem:[%s1 + $0x98] sm:$0xff]
  %v42 = vld [vmem:[%s1 + $0xa0] sm:$0xff]
  %v43 = vld [vmem:[%s1 + $0xa8] sm:$0xff]
  %v44 = vld [vmem:[%s1 + $0xb0] sm:$0xff]
  %v45 = vld [vmem:[%s1 + $0xb8] sm:$0xff]
  %v46 = vld [vmem:[%s1 + $0xc0] sm:$0xff]
  %v47 = vld [vmem:[%s1 + $0xc8] sm:$0xff]
  %v48 = vld [vmem:[%s1 + $0xd0] sm:$0xff]
  %v49 = vld [vmem:[%s1 + $0xd8] sm:$0xff]
  %v50 = vld [vmem:[%s1 + $0xe0] sm:$0xff]
  %v51 = vld [vmem:[%s1 + $0xe8] sm:$0xff]
  %v52 = vld [vmem:[%s1 + $0xf0] sm:$0xff]
  %v53 = vld [vmem:[%s1 + $0xf8] sm:$0xff]
  %v54 = vld [vmem:[%s1 + $0x100] sm:$0xff]
  %v55 = vld [vmem:[%s1 + $0x108] sm:$0xff]
  %v56 = vld [vmem:[%s1 + $0x110] sm:$0xff]
  %v57 = vld [vmem:[%s1 + $0x118] sm:$0xff]
  %v58 = vld [vmem:[%s1 + $0x120] sm:$0xff]
  %v59 = vld [vmem:[%s1 + $0x128] sm:$0xff]
  %v60 = vld [vmem:[%s1 + $0x130] sm:$0xff]
  %v61 = vld [vmem:[%s1 + $0x138] sm:$0xff]
  %v62 = vld [vmem:[%s1 + $0x140] sm:$0xff]
  %v63 = vld [vmem:[%s1 + $0x148] sm:$0xff]
  %v64 = vld [vmem:[%s1 + $0x150] sm:$0xff]
  %v65 = vld [vmem:[%s1 + $0x158] sm:$0xff]
  %v66 = vld [vmem:[%s1 + $0x160] sm:$0xff]
  %v67 = vld [vmem:[%s1 + $0x168] sm:$0xff]
  %v68 = vld [vmem:[%s1 + $0x170] sm:$0xff]
  %v69 = vld [vmem:[%s1 + $0x178] sm:$0xff]
  %v70 = vld [vmem:[%s1 + $0x180] sm:$0xff]
  %v71 = vld [vmem:[%s1 + $0x188] sm:$0xff]
  %v72 = vld [vmem:[%s1 + $0x190] sm:$0xff]
  %v73 = vld [vmem:[%s1 + $0x198] sm:$0xff]
  %v74 = vld [vmem:[%s1 + $0x1a0] sm:$0xff]
  %v75 = vld [vmem:[%s1 + $0x1a8] sm:$0xff]
  %v76 = vld [vmem:[%s1 + $0x1b0] sm:$0xff]
  %v77 = vld [vmem:[%s1 + $0x1b8] sm:$0xff]
  %v78 = vld [vmem:[%s1 + $0x1c0] sm:$0xff]
  %v79 = vld [vmem:[%s1 + $0x1c8] sm:$0xff]
  %v80 = vld [vmem:[%s1 + $0x1d0] sm:$0xff]
  %v81 = vld [vmem:[%s1 + $0x1d8] sm:$0xff]
  %v82 = vld [vmem:[%s1 + $0x1e0] sm:$0xff]
  %v83 = vld [vmem:[%s1 + $0x1e8] sm:$0xff]
  %v84 = vld [vmem:[%s1 + $0x1f0] sm:$0xff]
  %v85 = vld [vmem:[%s1 + $0x1f8] sm:$0xff]
  %v86 = vld [vmem:[%s1 + $0x200] sm:$0xff]
  %v87 = vld [vmem:[%s1 + $0x208] sm:$0xff]
  %v88 = vld [vmem:[%s1 + $0x210] sm:$0xff]
  %v89 = vld [vmem:[%s1 + $0x218] sm:$0xff]
  %v90 = vld [vmem:[%s1 + $0x220] sm:$0xff]
  %v91 = vld [vmem:[%s1 + $0x228] sm:$0xff]
  %v92 = vld [vmem:[%s1 + $0x230] sm:$0xff]
  %v93 = vld [vmem:[%s1 + $0x238] sm:$0xff]
  %v94 = vld [vmem:[%s1 + $0x240] sm:$0xff]
  %v95 = vld [vmem:[%s1 + $0x248] sm:$0xff]
  %v96 = vld [vmem:[%s1 + $0x250] sm:$0xff]
  %v97 = vld [vmem:[%s1 + $0x258] sm:$0xff]
  %v98 = vld [vmem:[%s1 + $0x260] sm:$0xff]
  %v99 = vld [vmem:[%s1 + $0x268] sm:$0xff]
  %v100 = vld [vmem:[%s1 + $0x270] sm:$0xff]
  %v101 = vld [vmem:[%s1 + $0x278] sm:$0xff]
  %v102 = vld [vmem:[%s1 + $0x280] sm:$0xff]
  %v103 = vld [vmem:[%s1 + $0x288] sm:$0xff]
  %v104 = vld [vmem:[%s1 + $0x290] sm:$0xff]
  %v105 = vld [vmem:[%s1 + $0x298] sm:$0xff]
  %v106 = vld [vmem:[%s1 + $0x2a0] sm:$0xff]
  %v107 = vld [vmem:[%s1 + $0x2a8] sm:$0xff]
  %v108 = vld [vmem:[%s1 + $0x2b0] sm:$0xff]
  %v109 = vld [vmem:[%s1 + $0x2b8] sm:$0xff]
  %v110 = vld [vmem:[%s1 + $0x2c0] sm:$0xff]
  %v111 = vld [vmem:[%s1 + $0x2c8] sm:$0xff]
  %v112 = vld [vmem:[%s1 + $0x2d0] sm:$0xff]
  %v113 = vld [vmem:[%s1 + $0x2d8] sm:$0xff]
  %v114 = vld [vmem:[%s1 + $0x2e0] sm:$0xff]
  %v115 = vld [vmem:[%s1 + $0x2e8] sm:$0xff]
  %v116 = vld [vmem:[%s1 + $0x2f0] sm:$0xff]
  %v117 = vld [vmem:[%s1 + $0x2f8] sm:$0xff]
  %v118 = vld [vmem:[%s1 + $0x300] sm:$0xff]
  %v119 = vld [vmem:[%s1 + $0x308] sm:$0xff]
  %v120 = vld [vmem:[%s1 + $0x310] sm:$0xff]
  %v121 = vld [vmem:[%s1 + $0x318] sm:$0xff]
  %v122 = vld [vmem:[%s1 + $0x320] sm:$0xff]
  %v123 = vld [vmem:[%s1 + $0x328] sm:$0xff]
  %v124 = vld [vmem:[%s1 + $0x330] sm:$0xff]
  %v125 = vld [vmem:[%s1 + $0x338] sm:$0xff]
  %v126 = vld [vmem:[%s1 + $0x340] sm:$0xff]
  %v127 = vld [vmem:[%s1 + $0x348] sm:$0xff]
  %v128 = vld [vmem:[%s1 + $0x350] sm:$0xff]
  %v129 = vld [vmem:[%s1 + $0x358] sm:$0xff]
  %v130 = vld [vmem:[%s1 + $0x360] sm:$0xff]
  %v131 = vld [vmem:[%s1 + $0x368] sm:$0xff]
  %v132 = vld [vmem:[%s1 + $0x370] sm:$0xff]
  %v133 = vld [vmem:[%s1 + $0x378] sm:$0xff]
  %v134 = vld [vmem:[%s1 + $0x380] sm:$0xff]
  %v135 = vld [vmem:[%s1 + $0x388] sm:$0xff]
  %v136 = vld [vmem:[%s1 + $0x390] sm:$0xff]
  %v137 = vld [vmem:[%s1 + $0x398] sm:$0xff]
  %v138 = vld [vmem:[%s1 + $0x3a0] sm:$0xff]
  %v139 = vld [vmem:[%s1 + $0x3a8] sm:$0xff]
  %v140 = vld [vmem:[%s1 + $0x3b0] sm:$0xff]
  %v141 = vld [vmem:[%s1 + $0x3b8] sm:$0xff]
  %v142 = vld [vmem:[%s1 + $0x3c0] sm:$0xff]
  %v143 = vld [vmem:[%s1 + $0x3c8] sm:$0xff]
  %v144 = vld [vmem:[%s1 + $0x3d0] sm:$0xff]
  %v145 = vld [vmem:[%s1 + $0x3d8] sm:$0xff]
  %v146 = vld [vmem:[%s1 + $0x3e0] sm:$0xff]
  %v147 = vld [vmem:[%s1 + $0x3e8] sm:$0xff]
  %v148 = vld [vmem:[%s1 + $0x3f0] sm:$0xff]
  %v149 = vld [vmem:[%s1 + $0x3f8] sm:$0xff]
  %v150 = vld [vmem:[%s1 + $0x400] sm:$0xff]
  %v151 = vld [vmem:[%s1 + $0x408] sm:$0xff]
  %v152 = vld [vmem:[%s1 + $0x410] sm:$0xff]
  %v153 = vld [vmem:[%s1 + $0x418] sm:$0xff]
  %v154 = vld [vmem:[%s1 + $0x420] sm:$0xff]
  %v155 = vld [vmem:[%s1 + $0x428] sm:$0xff]
  %v156 = vld [vmem:[%s1 + $0x430] sm:$0xff]
  %v157 = vld [vmem:[%s1 + $0x438] sm:$0xff]
  %v158 = vld [vmem:[%s1 + $0x440] sm:$0xff]
  %v159 = vld [vmem:[%s1 + $0x448] sm:$0xff]
  %v160 = vld [vmem:[%s1 + $0x450] sm:$0xff]
  %v161 = vld [vmem:[%s1 + $0x458] sm:$0xff]
  %v162 = vld [vmem:[%s1 + $0x460] sm:$0xff]
  %v163 = vld [vmem:[%s1 + $0x468] sm:$0xff]
  %v164 = vld [vmem:[%s1 + $0x470] sm:$0xff]
  %v165 = vld [vmem:[%s1 + $0x478] sm:$0xff]
  %v166 = vld [vmem:[%s1 + $0x480] sm:$0xff]
  %v167 = vld [vmem:[%s1 + $0x488] sm:$0xff]
  %v168 = vld [vmem:[%s1 + $0x490] sm:$0xff]
  %v169 = vld [vmem:[%s1 + $0x498] sm:$0xff]
  %v170 = vld [vmem:[%s1 + $0x4a0] sm:$0xff]
  %v171 = vld [vmem:[%s1 + $0x4a8] sm:$0xff]
  %v172 = vld [vmem:[%s1 + $0x4b0] sm:$0xff]
  %v173 = vld [vmem:[%s1 + $0x4b8] sm:$0xff]
  %v174 = vld [vmem:[%s1 + $0x4c0] sm:$0xff]
  %v175 = vld [vmem:[%s1 + $0x4c8] sm:$0xff]
  %v176 = vld [vmem:[%s1 + $0x4d0] sm:$0xff]
  %v177 = vld [vmem:[%s1 + $0x4d8] sm:$0xff]
  %v178 = vld [vmem:[%s1 + $0x4e0] sm:$0xff]
  %v179 = vld [vmem:[%s1 + $0x4e8] sm:$0xff]
  %v180 = vld [vmem:[%s1 + $0x4f0] sm:$0xff]
  %v181 = vld [vmem:[%s1 + $0x4f8] sm:$0xff]
  %v182 = vld [vmem:[%s1 + $0x500] sm:$0xff]
  %v183 = vld [vmem:[%s1 + $0x508] sm:$0xff]
  %v184 = vld [vmem:[%s1 + $0x510] sm:$0xff]
  %v185 = vld [vmem:[%s1 + $0x518] sm:$0xff]
  %v186 = vld [vmem:[%s1 + $0x520] sm:$0xff]
  %v187 = vld [vmem:[%s1 + $0x528] sm:$0xff]
  %v188 = vld [vmem:[%s1 + $0x530] sm:$0xff]
  %v189 = vld [vmem:[%s1 + $0x538] sm:$0xff]
  %v190 = vld [vmem:[%s1 + $0x540] sm:$0xff]
  %v191 = vld [vmem:[%s1 + $0x548] sm:$0xff]
  %v192 = vld [vmem:[%s1 + $0x550] sm:$0xff]
  %v193 = vld [vmem:[%s1 + $0x558] sm:$0xff]
  %v194 = vld [vmem:[%s1 + $0x560] sm:$0xff]
  %v195 = vld [vmem:[%s1 + $0x568] sm:$0xff]
  %v196 = vld [vmem:[%s1 + $0x570] sm:$0xff]
  %v197 = vld [vmem:[%s1 + $0x578] sm:$0xff]
  %v198 = vld [vmem:[%s1 + $0x580] sm:$0xff]
  %v199 = vld [vmem:[%s1 + $0x588] sm:$0xff]
  %v200 = vld [vmem:[%s1 + $0x590] sm:$0xff]
  %v201 = vld [vmem:[%s1 + $0x598] sm:$0xff]
  %v202 = vld [vmem:[%s1 + $0x5a0] sm:$0xff]
  %v203 = vld [vmem:[%s1 + $0x5a8] sm:$0xff]
  %v204 = vld [vmem:[%s1 + $0x5b0] sm:$0xff]
  %v205 = vld [vmem:[%s1 + $0x5b8] sm:$0xff]
  %v206 = vld [vmem:[%s1 + $0x5c0] sm:$0xff]
  %v207 = vld [vmem:[%s1 + $0x5c8] sm:$0xff]
  %v208 = vld [vmem:[%s1 + $0x5d0] sm:$0xff]
  %v209 = vld [vmem:[%s1 + $0x5d8] sm:$0xff]
  %v210 = vld [vmem:[%s1 + $0x5e0] sm:$0xff]
  %v211 = vld [vmem:[%s1 + $0x5e8] sm:$0xff]
  %v212 = vld [vmem:[%s1 + $0x5f0] sm:$0xff]
  %v213 = vld [vmem:[%s1 + $0x5f8] sm:$0xff]
  %v214 = vld [vmem:[%s1 + $0x600] sm:$0xff]
  %v215 = vld [vmem:[%s1 + $0x608] sm:$0xff]
  %v216 = vld [vmem:[%s1 + $0x610] sm:$0xff]
  %v217 = vld [vmem:[%s1 + $0x618] sm:$0xff]
  %v218 = vld [vmem:[%s1 + $0x620] sm:$0xff]
  %v219 = vld [vmem:[%s1 + $0x628] sm:$0xff]
  %v220 = vld [vmem:[%s1 + $0x630] sm:$0xff]
  %v221 = vld [vmem:[%s1 + $0x638] sm:$0xff]
  %v222 = vld [vmem:[%s1 + $0x640] sm:$0xff]
  %v223 = vld [vmem:[%s1 + $0x648] sm:$0xff]
  %v224 = vld [vmem:[%s1 + $0x650] sm:$0xff]
  %v225 = vld [vmem:[%s1 + $0x658] sm:$0xff]
  %v226 = vld [vmem:[%s1 + $0x660] sm:$0xff]
  %v227 = vld [vmem:[%s1 + $0x668] sm:$0xff]
  %v228 = vld [vmem:[%s1 + $0x670] sm:$0xff]
  %v229 = vld [vmem:[%s1 + $0x678] sm:$0xff]
  %v230 = vld [vmem:[%s1 + $0x680] sm:$0xff]
  %v231 = vld [vmem:[%s1 + $0x688] sm:$0xff]
  %v232 = vld [vmem:[%s1 + $0x690] sm:$0xff]
  %v233 = vld [vmem:[%s1 + $0x698] sm:$0xff]
  %v234 = vld [vmem:[%s1 + $0x6a0] sm:$0xff]
  %v235 = vld [vmem:[%s1 + $0x6a8] sm:$0xff]
  %v236 = vld [vmem:[%s1 + $0x6b0] sm:$0xff]
  %v237 = vld [vmem:[%s1 + $0x6b8] sm:$0xff]
  %v238 = vld [vmem:[%s1 + $0x6c0] sm:$0xff]
  %v239 = vld [vmem:[%s1 + $0x6c8] sm:$0xff]
  %v240 = vld [vmem:[%s1 + $0x6d0] sm:$0xff]
  %v241 = vld [vmem:[%s1 + $0x6d8] sm:$0xff]
  %v242 = vld [vmem:[%s1 + $0x6e0] sm:$0xff]
  %v243 = vld [vmem:[%s1 + $0x6e8] sm:$0xff]
  %v244 = vld [vmem:[%s1 + $0x6f0] sm:$0xff]
  %v245 = vld [vmem:[%s1 + $0x6f8] sm:$0xff]
  %v246 = vld [vmem:[%s1 + $0x700] sm:$0xff]
  %v247 = vld [vmem:[%s1 + $0x708] sm:$0xff]
  %v248 = vld [vmem:[%s1 + $0x710] sm:$0xff]
  %v249 = vld [vmem:[%s1 + $0x718] sm:$0xff]
  %v250 = vld [vmem:[%s1 + $0x720] sm:$0xff]
  %v251 = vld [vmem:[%s1 + $0x728] sm:$0xff]
  %v252 = vld [vmem:[%s1 + $0x730] sm:$0xff]
  %v253 = vld [vmem:[%s1 + $0x738] sm:$0xff]
  %v254 = vld [vmem:[%s1 + $0x740] sm:$0xff]
  %v255 = vld [vmem:[%s1 + $0x748] sm:$0xff]
  %v256 = vld [vmem:[%s1 + $0x750] sm:$0xff]
  %v257 = vld [vmem:[%s1 + $0x758] sm:$0xff]
  %v258 = vld [vmem:[%s1 + $0x760] sm:$0xff]
  %v259 = vld [vmem:[%s1 + $0x768] sm:$0xff]
  %v260 = vld [vmem:[%s1 + $0x770] sm:$0xff]
  %v261 = vld [vmem:[%s1 + $0x778] sm:$0xff]
  %v262 = vld [vmem:[%s1 + $0x780] sm:$0xff]
  %v263 = vld [vmem:[%s1 + $0x788] sm:$0xff]
  %v264 = vld [vmem:[%s1 + $0x790] sm:$0xff]
  %v265 = vld [vmem:[%s1 + $0x798] sm:$0xff]
  %v266 = vld [vmem:[%s1 + $0x7a0] sm:$0xff]
  %v267 = vld [vmem:[%s1 + $0x7a8] sm:$0xff]
  %v268 = vld [vmem:[%s1 + $0x7b0] sm:$0xff]
  %v269 = vld [vmem:[%s1 + $0x7b8] sm:$0xff]
  %v270 = vld [vmem:[%s1 + $0x7c0] sm:$0xff]
  %v271 = vld [vmem:[%s1 + $0x7c8] sm:$0xff]
  %v272 = vld [vmem:[%s1 + $0x7d0] sm:$0xff]
  %v273 = vld [vmem:[%s1 + $0x7d8] sm:$0xff]
  %v274 = vld [vmem:[%s1 + $0x7e0] sm:$0xff]
  %v275 = vld [vmem:[%s1 + $0x7e8] sm:$0xff]
  %v276 = vld [vmem:[%s1 + $0x7f0] sm:$0xff]
  %v277 = vld [vmem:[%s1 + $0x7f8] sm:$0xff]
  %v278 = vld [vmem:[%s2] sm:$0x3]
  %v280 = vlaneseq
  %v281 = vshrl.u32 %v280, 7
  %v282 = vsub.s32 0, %v281
  %v283 = vrot.slane %v278, %v282
  %v284 = vlaneseq
  %v285 = vshrl.u32 %v284, 7
  %v286 = vsub.s32 1, %v285
  %v287 = vrot.slane %v278, %v286
  %v298 = vunpack.c.l.b16 %v14
  %v299 = vunpack.c.h.b16 %v14
  %v300 = vunpack.c.l.b16 %v15
  %v301 = vunpack.c.h.b16 %v15
  %v302 = vunpack.c.l.b16 %v16
  %v303 = vunpack.c.h.b16 %v16
  %v304 = vunpack.c.l.b16 %v17
  %v305 = vunpack.c.h.b16 %v17
  %v306 = vunpack.c.l.b16 %v18
  %v307 = vunpack.c.h.b16 %v18
  %v308 = vunpack.c.l.b16 %v19
  %v309 = vunpack.c.h.b16 %v19
  %v310 = vunpack.c.l.b16 %v20
  %v311 = vunpack.c.h.b16 %v20
  %v312 = vunpack.c.l.b16 %v21
  %v313 = vunpack.c.h.b16 %v21
  %v314 = vpack.c.b16 %v298, %v298
  %v315 = vpack.c.b16 %v299, %v299
  %v316 = vpack.c.b16 %v300, %v300
  %v317 = vpack.c.b16 %v301, %v301
  %v318 = vpack.c.b16 %v302, %v302
  %v319 = vpack.c.b16 %v303, %v303
  %v320 = vpack.c.b16 %v304, %v304
  %v321 = vpack.c.b16 %v305, %v305
  %v322 = vpack.c.b16 %v306, %v306
  %v323 = vpack.c.b16 %v307, %v307
  %v324 = vpack.c.b16 %v308, %v308
  %v325 = vpack.c.b16 %v309, %v309
  %v326 = vpack.c.b16 %v310, %v310
  %v327 = vpack.c.b16 %v311, %v311
  %v328 = vpack.c.b16 %v312, %v312
  %v329 = vpack.c.b16 %v313, %v313
  %v602 = vunpack.c.l.b16 %v22
  %v603 = vunpack.c.h.b16 %v22
  %v604 = vunpack.c.l.b16 %v23
  %v605 = vunpack.c.h.b16 %v23
  %v606 = vunpack.c.l.b16 %v24
  %v607 = vunpack.c.h.b16 %v24
  %v608 = vunpack.c.l.b16 %v25
  %v609 = vunpack.c.h.b16 %v25
  %v610 = vunpack.c.l.b16 %v26
  %v611 = vunpack.c.h.b16 %v26
  %v612 = vunpack.c.l.b16 %v27
  %v613 = vunpack.c.h.b16 %v27
  %v614 = vunpack.c.l.b16 %v28
  %v615 = vunpack.c.h.b16 %v28
  %v616 = vunpack.c.l.b16 %v29
  %v617 = vunpack.c.h.b16 %v29
  %v618 = vunpack.c.l.b16 %v30
  %v619 = vunpack.c.h.b16 %v30
  %v620 = vunpack.c.l.b16 %v31
  %v621 = vunpack.c.h.b16 %v31
  %v622 = vunpack.c.l.b16 %v32
  %v623 = vunpack.c.h.b16 %v32
  %v624 = vunpack.c.l.b16 %v33
  %v625 = vunpack.c.h.b16 %v33
  %v626 = vunpack.c.l.b16 %v34
  %v627 = vunpack.c.h.b16 %v34
  %v628 = vunpack.c.l.b16 %v35
  %v629 = vunpack.c.h.b16 %v35
  %v630 = vunpack.c.l.b16 %v36
  %v631 = vunpack.c.h.b16 %v36
  %v632 = vunpack.c.l.b16 %v37
  %v633 = vunpack.c.h.b16 %v37
  %v634 = vunpack.c.l.b16 %v38
  %v635 = vunpack.c.h.b16 %v38
  %v636 = vunpack.c.l.b16 %v39
  %v637 = vunpack.c.h.b16 %v39
  %v638 = vunpack.c.l.b16 %v40
  %v639 = vunpack.c.h.b16 %v40
  %v640 = vunpack.c.l.b16 %v41
  %v641 = vunpack.c.h.b16 %v41
  %v642 = vunpack.c.l.b16 %v42
  %v643 = vunpack.c.h.b16 %v42
  %v644 = vunpack.c.l.b16 %v43
  %v645 = vunpack.c.h.b16 %v43
  %v646 = vunpack.c.l.b16 %v44
  %v647 = vunpack.c.h.b16 %v44
  %v648 = vunpack.c.l.b16 %v45
  %v649 = vunpack.c.h.b16 %v45
  %v650 = vunpack.c.l.b16 %v46
  %v651 = vunpack.c.h.b16 %v46
  %v652 = vunpack.c.l.b16 %v47
  %v653 = vunpack.c.h.b16 %v47
  %v654 = vunpack.c.l.b16 %v48
  %v655 = vunpack.c.h.b16 %v48
  %v656 = vunpack.c.l.b16 %v49
  %v657 = vunpack.c.h.b16 %v49
  %v658 = vunpack.c.l.b16 %v50
  %v659 = vunpack.c.h.b16 %v50
  %v660 = vunpack.c.l.b16 %v51
  %v661 = vunpack.c.h.b16 %v51
  %v662 = vunpack.c.l.b16 %v52
  %v663 = vunpack.c.h.b16 %v52
  %v664 = vunpack.c.l.b16 %v53
  %v665 = vunpack.c.h.b16 %v53
  %v666 = vunpack.c.l.b16 %v54
  %v667 = vunpack.c.h.b16 %v54
  %v668 = vunpack.c.l.b16 %v55
  %v669 = vunpack.c.h.b16 %v55
  %v670 = vunpack.c.l.b16 %v56
  %v671 = vunpack.c.h.b16 %v56
  %v672 = vunpack.c.l.b16 %v57
  %v673 = vunpack.c.h.b16 %v57
  %v674 = vunpack.c.l.b16 %v58
  %v675 = vunpack.c.h.b16 %v58
  %v676 = vunpack.c.l.b16 %v59
  %v677 = vunpack.c.h.b16 %v59
  %v678 = vunpack.c.l.b16 %v60
  %v679 = vunpack.c.h.b16 %v60
  %v680 = vunpack.c.l.b16 %v61
  %v681 = vunpack.c.h.b16 %v61
  %v682 = vunpack.c.l.b16 %v62
  %v683 = vunpack.c.h.b16 %v62
  %v684 = vunpack.c.l.b16 %v63
  %v685 = vunpack.c.h.b16 %v63
  %v686 = vunpack.c.l.b16 %v64
  %v687 = vunpack.c.h.b16 %v64
  %v688 = vunpack.c.l.b16 %v65
  %v689 = vunpack.c.h.b16 %v65
  %v690 = vunpack.c.l.b16 %v66
  %v691 = vunpack.c.h.b16 %v66
  %v692 = vunpack.c.l.b16 %v67
  %v693 = vunpack.c.h.b16 %v67
  %v694 = vunpack.c.l.b16 %v68
  %v695 = vunpack.c.h.b16 %v68
  %v696 = vunpack.c.l.b16 %v69
  %v697 = vunpack.c.h.b16 %v69
  %v698 = vunpack.c.l.b16 %v70
  %v699 = vunpack.c.h.b16 %v70
  %v700 = vunpack.c.l.b16 %v71
  %v701 = vunpack.c.h.b16 %v71
  %v702 = vunpack.c.l.b16 %v72
  %v703 = vunpack.c.h.b16 %v72
  %v704 = vunpack.c.l.b16 %v73
  %v705 = vunpack.c.h.b16 %v73
  %v706 = vunpack.c.l.b16 %v74
  %v707 = vunpack.c.h.b16 %v74
  %v708 = vunpack.c.l.b16 %v75
  %v709 = vunpack.c.h.b16 %v75
  %v710 = vunpack.c.l.b16 %v76
  %v711 = vunpack.c.h.b16 %v76
  %v712 = vunpack.c.l.b16 %v77
  %v713 = vunpack.c.h.b16 %v77
  %v714 = vunpack.c.l.b16 %v78
  %v715 = vunpack.c.h.b16 %v78
  %v716 = vunpack.c.l.b16 %v79
  %v717 = vunpack.c.h.b16 %v79
  %v718 = vunpack.c.l.b16 %v80
  %v719 = vunpack.c.h.b16 %v80
  %v720 = vunpack.c.l.b16 %v81
  %v721 = vunpack.c.h.b16 %v81
  %v722 = vunpack.c.l.b16 %v82
  %v723 = vunpack.c.h.b16 %v82
  %v724 = vunpack.c.l.b16 %v83
  %v725 = vunpack.c.h.b16 %v83
  %v726 = vunpack.c.l.b16 %v84
  %v727 = vunpack.c.h.b16 %v84
  %v728 = vunpack.c.l.b16 %v85
  %v729 = vunpack.c.h.b16 %v85
  %v730 = vunpack.c.l.b16 %v86
  %v731 = vunpack.c.h.b16 %v86
  %v732 = vunpack.c.l.b16 %v87
  %v733 = vunpack.c.h.b16 %v87
  %v734 = vunpack.c.l.b16 %v88
  %v735 = vunpack.c.h.b16 %v88
  %v736 = vunpack.c.l.b16 %v89
  %v737 = vunpack.c.h.b16 %v89
  %v738 = vunpack.c.l.b16 %v90
  %v739 = vunpack.c.h.b16 %v90
  %v740 = vunpack.c.l.b16 %v91
  %v741 = vunpack.c.h.b16 %v91
  %v742 = vunpack.c.l.b16 %v92
  %v743 = vunpack.c.h.b16 %v92
  %v744 = vunpack.c.l.b16 %v93
  %v745 = vunpack.c.h.b16 %v93
  %v746 = vunpack.c.l.b16 %v94
  %v747 = vunpack.c.h.b16 %v94
  %v748 = vunpack.c.l.b16 %v95
  %v749 = vunpack.c.h.b16 %v95
  %v750 = vunpack.c.l.b16 %v96
  %v751 = vunpack.c.h.b16 %v96
  %v752 = vunpack.c.l.b16 %v97
  %v753 = vunpack.c.h.b16 %v97
  %v754 = vunpack.c.l.b16 %v98
  %v755 = vunpack.c.h.b16 %v98
  %v756 = vunpack.c.l.b16 %v99
  %v757 = vunpack.c.h.b16 %v99
  %v758 = vunpack.c.l.b16 %v100
  %v759 = vunpack.c.h.b16 %v100
  %v760 = vunpack.c.l.b16 %v101
  %v761 = vunpack.c.h.b16 %v101
  %v762 = vunpack.c.l.b16 %v102
  %v763 = vunpack.c.h.b16 %v102
  %v764 = vunpack.c.l.b16 %v103
  %v765 = vunpack.c.h.b16 %v103
  %v766 = vunpack.c.l.b16 %v104
  %v767 = vunpack.c.h.b16 %v104
  %v768 = vunpack.c.l.b16 %v105
  %v769 = vunpack.c.h.b16 %v105
  %v770 = vunpack.c.l.b16 %v106
  %v771 = vunpack.c.h.b16 %v106
  %v772 = vunpack.c.l.b16 %v107
  %v773 = vunpack.c.h.b16 %v107
  %v774 = vunpack.c.l.b16 %v108
  %v775 = vunpack.c.h.b16 %v108
  %v776 = vunpack.c.l.b16 %v109
  %v777 = vunpack.c.h.b16 %v109
  %v778 = vunpack.c.l.b16 %v110
  %v779 = vunpack.c.h.b16 %v110
  %v780 = vunpack.c.l.b16 %v111
  %v781 = vunpack.c.h.b16 %v111
  %v782 = vunpack.c.l.b16 %v112
  %v783 = vunpack.c.h.b16 %v112
  %v784 = vunpack.c.l.b16 %v113
  %v785 = vunpack.c.h.b16 %v113
  %v786 = vunpack.c.l.b16 %v114
  %v787 = vunpack.c.h.b16 %v114
  %v788 = vunpack.c.l.b16 %v115
  %v789 = vunpack.c.h.b16 %v115
  %v790 = vunpack.c.l.b16 %v116
  %v791 = vunpack.c.h.b16 %v116
  %v792 = vunpack.c.l.b16 %v117
  %v793 = vunpack.c.h.b16 %v117
  %v794 = vunpack.c.l.b16 %v118
  %v795 = vunpack.c.h.b16 %v118
  %v796 = vunpack.c.l.b16 %v119
  %v797 = vunpack.c.h.b16 %v119
  %v798 = vunpack.c.l.b16 %v120
  %v799 = vunpack.c.h.b16 %v120
  %v800 = vunpack.c.l.b16 %v121
  %v801 = vunpack.c.h.b16 %v121
  %v802 = vunpack.c.l.b16 %v122
  %v803 = vunpack.c.h.b16 %v122
  %v804 = vunpack.c.l.b16 %v123
  %v805 = vunpack.c.h.b16 %v123
  %v806 = vunpack.c.l.b16 %v124
  %v807 = vunpack.c.h.b16 %v124
  %v808 = vunpack.c.l.b16 %v125
  %v809 = vunpack.c.h.b16 %v125
  %v810 = vunpack.c.l.b16 %v126
  %v811 = vunpack.c.h.b16 %v126
  %v812 = vunpack.c.l.b16 %v127
  %v813 = vunpack.c.h.b16 %v127
  %v814 = vunpack.c.l.b16 %v128
  %v815 = vunpack.c.h.b16 %v128
  %v816 = vunpack.c.l.b16 %v129
  %v817 = vunpack.c.h.b16 %v129
  %v818 = vunpack.c.l.b16 %v130
  %v819 = vunpack.c.h.b16 %v130
  %v820 = vunpack.c.l.b16 %v131
  %v821 = vunpack.c.h.b16 %v131
  %v822 = vunpack.c.l.b16 %v132
  %v823 = vunpack.c.h.b16 %v132
  %v824 = vunpack.c.l.b16 %v133
  %v825 = vunpack.c.h.b16 %v133
  %v826 = vunpack.c.l.b16 %v134
  %v827 = vunpack.c.h.b16 %v134
  %v828 = vunpack.c.l.b16 %v135
  %v829 = vunpack.c.h.b16 %v135
  %v830 = vunpack.c.l.b16 %v136
  %v831 = vunpack.c.h.b16 %v136
  %v832 = vunpack.c.l.b16 %v137
  %v833 = vunpack.c.h.b16 %v137
  %v834 = vunpack.c.l.b16 %v138
  %v835 = vunpack.c.h.b16 %v138
  %v836 = vunpack.c.l.b16 %v139
  %v837 = vunpack.c.h.b16 %v139
  %v838 = vunpack.c.l.b16 %v140
  %v839 = vunpack.c.h.b16 %v140
  %v840 = vunpack.c.l.b16 %v141
  %v841 = vunpack.c.h.b16 %v141
  %v842 = vunpack.c.l.b16 %v142
  %v843 = vunpack.c.h.b16 %v142
  %v844 = vunpack.c.l.b16 %v143
  %v845 = vunpack.c.h.b16 %v143
  %v846 = vunpack.c.l.b16 %v144
  %v847 = vunpack.c.h.b16 %v144
  %v848 = vunpack.c.l.b16 %v145
  %v849 = vunpack.c.h.b16 %v145
  %v850 = vunpack.c.l.b16 %v146
  %v851 = vunpack.c.h.b16 %v146
  %v852 = vunpack.c.l.b16 %v147
  %v853 = vunpack.c.h.b16 %v147
  %v854 = vunpack.c.l.b16 %v148
  %v855 = vunpack.c.h.b16 %v148
  %v856 = vunpack.c.l.b16 %v149
  %v857 = vunpack.c.h.b16 %v149
  %v858 = vunpack.c.l.b16 %v150
  %v859 = vunpack.c.h.b16 %v150
  %v860 = vunpack.c.l.b16 %v151
  %v861 = vunpack.c.h.b16 %v151
  %v862 = vunpack.c.l.b16 %v152
  %v863 = vunpack.c.h.b16 %v152
  %v864 = vunpack.c.l.b16 %v153
  %v865 = vunpack.c.h.b16 %v153
  %v866 = vunpack.c.l.b16 %v154
  %v867 = vunpack.c.h.b16 %v154
  %v868 = vunpack.c.l.b16 %v155
  %v869 = vunpack.c.h.b16 %v155
  %v870 = vunpack.c.l.b16 %v156
  %v871 = vunpack.c.h.b16 %v156
  %v872 = vunpack.c.l.b16 %v157
  %v873 = vunpack.c.h.b16 %v157
  %v874 = vunpack.c.l.b16 %v158
  %v875 = vunpack.c.h.b16 %v158
  %v876 = vunpack.c.l.b16 %v159
  %v877 = vunpack.c.h.b16 %v159
  %v878 = vunpack.c.l.b16 %v160
  %v879 = vunpack.c.h.b16 %v160
  %v880 = vunpack.c.l.b16 %v161
  %v881 = vunpack.c.h.b16 %v161
  %v882 = vunpack.c.l.b16 %v162
  %v883 = vunpack.c.h.b16 %v162
  %v884 = vunpack.c.l.b16 %v163
  %v885 = vunpack.c.h.b16 %v163
  %v886 = vunpack.c.l.b16 %v164
  %v887 = vunpack.c.h.b16 %v164
  %v888 = vunpack.c.l.b16 %v165
  %v889 = vunpack.c.h.b16 %v165
  %v890 = vunpack.c.l.b16 %v166
  %v891 = vunpack.c.h.b16 %v166
  %v892 = vunpack.c.l.b16 %v167
  %v893 = vunpack.c.h.b16 %v167
  %v894 = vunpack.c.l.b16 %v168
  %v895 = vunpack.c.h.b16 %v168
  %v896 = vunpack.c.l.b16 %v169
  %v897 = vunpack.c.h.b16 %v169
  %v898 = vunpack.c.l.b16 %v170
  %v899 = vunpack.c.h.b16 %v170
  %v900 = vunpack.c.l.b16 %v171
  %v901 = vunpack.c.h.b16 %v171
  %v902 = vunpack.c.l.b16 %v172
  %v903 = vunpack.c.h.b16 %v172
  %v904 = vunpack.c.l.b16 %v173
  %v905 = vunpack.c.h.b16 %v173
  %v906 = vunpack.c.l.b16 %v174
  %v907 = vunpack.c.h.b16 %v174
  %v908 = vunpack.c.l.b16 %v175
  %v909 = vunpack.c.h.b16 %v175
  %v910 = vunpack.c.l.b16 %v176
  %v911 = vunpack.c.h.b16 %v176
  %v912 = vunpack.c.l.b16 %v177
  %v913 = vunpack.c.h.b16 %v177
  %v914 = vunpack.c.l.b16 %v178
  %v915 = vunpack.c.h.b16 %v178
  %v916 = vunpack.c.l.b16 %v179
  %v917 = vunpack.c.h.b16 %v179
  %v918 = vunpack.c.l.b16 %v180
  %v919 = vunpack.c.h.b16 %v180
  %v920 = vunpack.c.l.b16 %v181
  %v921 = vunpack.c.h.b16 %v181
  %v922 = vunpack.c.l.b16 %v182
  %v923 = vunpack.c.h.b16 %v182
  %v924 = vunpack.c.l.b16 %v183
  %v925 = vunpack.c.h.b16 %v183
  %v926 = vunpack.c.l.b16 %v184
  %v927 = vunpack.c.h.b16 %v184
  %v928 = vunpack.c.l.b16 %v185
  %v929 = vunpack.c.h.b16 %v185
  %v930 = vunpack.c.l.b16 %v186
  %v931 = vunpack.c.h.b16 %v186
  %v932 = vunpack.c.l.b16 %v187
  %v933 = vunpack.c.h.b16 %v187
  %v934 = vunpack.c.l.b16 %v188
  %v935 = vunpack.c.h.b16 %v188
  %v936 = vunpack.c.l.b16 %v189
  %v937 = vunpack.c.h.b16 %v189
  %v938 = vunpack.c.l.b16 %v190
  %v939 = vunpack.c.h.b16 %v190
  %v940 = vunpack.c.l.b16 %v191
  %v941 = vunpack.c.h.b16 %v191
  %v942 = vunpack.c.l.b16 %v192
  %v943 = vunpack.c.h.b16 %v192
  %v944 = vunpack.c.l.b16 %v193
  %v945 = vunpack.c.h.b16 %v193
  %v946 = vunpack.c.l.b16 %v194
  %v947 = vunpack.c.h.b16 %v194
  %v948 = vunpack.c.l.b16 %v195
  %v949 = vunpack.c.h.b16 %v195
  %v950 = vunpack.c.l.b16 %v196
  %v951 = vunpack.c.h.b16 %v196
  %v952 = vunpack.c.l.b16 %v197
  %v953 = vunpack.c.h.b16 %v197
  %v954 = vunpack.c.l.b16 %v198
  %v955 = vunpack.c.h.b16 %v198
  %v956 = vunpack.c.l.b16 %v199
  %v957 = vunpack.c.h.b16 %v199
  %v958 = vunpack.c.l.b16 %v200
  %v959 = vunpack.c.h.b16 %v200
  %v960 = vunpack.c.l.b16 %v201
  %v961 = vunpack.c.h.b16 %v201
  %v962 = vunpack.c.l.b16 %v202
  %v963 = vunpack.c.h.b16 %v202
  %v964 = vunpack.c.l.b16 %v203
  %v965 = vunpack.c.h.b16 %v203
  %v966 = vunpack.c.l.b16 %v204
  %v967 = vunpack.c.h.b16 %v204
  %v968 = vunpack.c.l.b16 %v205
  %v969 = vunpack.c.h.b16 %v205
  %v970 = vunpack.c.l.b16 %v206
  %v971 = vunpack.c.h.b16 %v206
  %v972 = vunpack.c.l.b16 %v207
  %v973 = vunpack.c.h.b16 %v207
  %v974 = vunpack.c.l.b16 %v208
  %v975 = vunpack.c.h.b16 %v208
  %v976 = vunpack.c.l.b16 %v209
  %v977 = vunpack.c.h.b16 %v209
  %v978 = vunpack.c.l.b16 %v210
  %v979 = vunpack.c.h.b16 %v210
  %v980 = vunpack.c.l.b16 %v211
  %v981 = vunpack.c.h.b16 %v211
  %v982 = vunpack.c.l.b16 %v212
  %v983 = vunpack.c.h.b16 %v212
  %v984 = vunpack.c.l.b16 %v213
  %v985 = vunpack.c.h.b16 %v213
  %v986 = vunpack.c.l.b16 %v214
  %v987 = vunpack.c.h.b16 %v214
  %v988 = vunpack.c.l.b16 %v215
  %v989 = vunpack.c.h.b16 %v215
  %v990 = vunpack.c.l.b16 %v216
  %v991 = vunpack.c.h.b16 %v216
  %v992 = vunpack.c.l.b16 %v217
  %v993 = vunpack.c.h.b16 %v217
  %v994 = vunpack.c.l.b16 %v218
  %v995 = vunpack.c.h.b16 %v218
  %v996 = vunpack.c.l.b16 %v219
  %v997 = vunpack.c.h.b16 %v219
  %v998 = vunpack.c.l.b16 %v220
  %v999 = vunpack.c.h.b16 %v220
  %v1000 = vunpack.c.l.b16 %v221
  %v1001 = vunpack.c.h.b16 %v221
  %v1002 = vunpack.c.l.b16 %v222
  %v1003 = vunpack.c.h.b16 %v222
  %v1004 = vunpack.c.l.b16 %v223
  %v1005 = vunpack.c.h.b16 %v223
  %v1006 = vunpack.c.l.b16 %v224
  %v1007 = vunpack.c.h.b16 %v224
  %v1008 = vunpack.c.l.b16 %v225
  %v1009 = vunpack.c.h.b16 %v225
  %v1010 = vunpack.c.l.b16 %v226
  %v1011 = vunpack.c.h.b16 %v226
  %v1012 = vunpack.c.l.b16 %v227
  %v1013 = vunpack.c.h.b16 %v227
  %v1014 = vunpack.c.l.b16 %v228
  %v1015 = vunpack.c.h.b16 %v228
  %v1016 = vunpack.c.l.b16 %v229
  %v1017 = vunpack.c.h.b16 %v229
  %v1018 = vunpack.c.l.b16 %v230
  %v1019 = vunpack.c.h.b16 %v230
  %v1020 = vunpack.c.l.b16 %v231
  %v1021 = vunpack.c.h.b16 %v231
  %v1022 = vunpack.c.l.b16 %v232
  %v1023 = vunpack.c.h.b16 %v232
  %v1024 = vunpack.c.l.b16 %v233
  %v1025 = vunpack.c.h.b16 %v233
  %v1026 = vunpack.c.l.b16 %v234
  %v1027 = vunpack.c.h.b16 %v234
  %v1028 = vunpack.c.l.b16 %v235
  %v1029 = vunpack.c.h.b16 %v235
  %v1030 = vunpack.c.l.b16 %v236
  %v1031 = vunpack.c.h.b16 %v236
  %v1032 = vunpack.c.l.b16 %v237
  %v1033 = vunpack.c.h.b16 %v237
  %v1034 = vunpack.c.l.b16 %v238
  %v1035 = vunpack.c.h.b16 %v238
  %v1036 = vunpack.c.l.b16 %v239
  %v1037 = vunpack.c.h.b16 %v239
  %v1038 = vunpack.c.l.b16 %v240
  %v1039 = vunpack.c.h.b16 %v240
  %v1040 = vunpack.c.l.b16 %v241
  %v1041 = vunpack.c.h.b16 %v241
  %v1042 = vunpack.c.l.b16 %v242
  %v1043 = vunpack.c.h.b16 %v242
  %v1044 = vunpack.c.l.b16 %v243
  %v1045 = vunpack.c.h.b16 %v243
  %v1046 = vunpack.c.l.b16 %v244
  %v1047 = vunpack.c.h.b16 %v244
  %v1048 = vunpack.c.l.b16 %v245
  %v1049 = vunpack.c.h.b16 %v245
  %v1050 = vunpack.c.l.b16 %v246
  %v1051 = vunpack.c.h.b16 %v246
  %v1052 = vunpack.c.l.b16 %v247
  %v1053 = vunpack.c.h.b16 %v247
  %v1054 = vunpack.c.l.b16 %v248
  %v1055 = vunpack.c.h.b16 %v248
  %v1056 = vunpack.c.l.b16 %v249
  %v1057 = vunpack.c.h.b16 %v249
  %v1058 = vunpack.c.l.b16 %v250
  %v1059 = vunpack.c.h.b16 %v250
  %v1060 = vunpack.c.l.b16 %v251
  %v1061 = vunpack.c.h.b16 %v251
  %v1062 = vunpack.c.l.b16 %v252
  %v1063 = vunpack.c.h.b16 %v252
  %v1064 = vunpack.c.l.b16 %v253
  %v1065 = vunpack.c.h.b16 %v253
  %v1066 = vunpack.c.l.b16 %v254
  %v1067 = vunpack.c.h.b16 %v254
  %v1068 = vunpack.c.l.b16 %v255
  %v1069 = vunpack.c.h.b16 %v255
  %v1070 = vunpack.c.l.b16 %v256
  %v1071 = vunpack.c.h.b16 %v256
  %v1072 = vunpack.c.l.b16 %v257
  %v1073 = vunpack.c.h.b16 %v257
  %v1074 = vunpack.c.l.b16 %v258
  %v1075 = vunpack.c.h.b16 %v258
  %v1076 = vunpack.c.l.b16 %v259
  %v1077 = vunpack.c.h.b16 %v259
  %v1078 = vunpack.c.l.b16 %v260
  %v1079 = vunpack.c.h.b16 %v260
  %v1080 = vunpack.c.l.b16 %v261
  %v1081 = vunpack.c.h.b16 %v261
  %v1082 = vunpack.c.l.b16 %v262
  %v1083 = vunpack.c.h.b16 %v262
  %v1084 = vunpack.c.l.b16 %v263
  %v1085 = vunpack.c.h.b16 %v263
  %v1086 = vunpack.c.l.b16 %v264
  %v1087 = vunpack.c.h.b16 %v264
  %v1088 = vunpack.c.l.b16 %v265
  %v1089 = vunpack.c.h.b16 %v265
  %v1090 = vunpack.c.l.b16 %v266
  %v1091 = vunpack.c.h.b16 %v266
  %v1092 = vunpack.c.l.b16 %v267
  %v1093 = vunpack.c.h.b16 %v267
  %v1094 = vunpack.c.l.b16 %v268
  %v1095 = vunpack.c.h.b16 %v268
  %v1096 = vunpack.c.l.b16 %v269
  %v1097 = vunpack.c.h.b16 %v269
  %v1098 = vunpack.c.l.b16 %v270
  %v1099 = vunpack.c.h.b16 %v270
  %v1100 = vunpack.c.l.b16 %v271
  %v1101 = vunpack.c.h.b16 %v271
  %v1102 = vunpack.c.l.b16 %v272
  %v1103 = vunpack.c.h.b16 %v272
  %v1104 = vunpack.c.l.b16 %v273
  %v1105 = vunpack.c.h.b16 %v273
  %v1106 = vunpack.c.l.b16 %v274
  %v1107 = vunpack.c.h.b16 %v274
  %v1108 = vunpack.c.l.b16 %v275
  %v1109 = vunpack.c.h.b16 %v275
  %v1110 = vunpack.c.l.b16 %v276
  %v1111 = vunpack.c.h.b16 %v276
  %v1112 = vunpack.c.l.b16 %v277
  %v1113 = vunpack.c.h.b16 %v277
  %v1114 = vpack.c.b16 %v604, %v602
  %v1115 = vpack.c.b16 %v605, %v603
  %v1116 = vpack.c.b16 %v608, %v606
  %v1117 = vpack.c.b16 %v609, %v607
  %v1118 = vpack.c.b16 %v612, %v610
  %v1119 = vpack.c.b16 %v613, %v611
  %v1120 = vpack.c.b16 %v616, %v614
  %v1121 = vpack.c.b16 %v617, %v615
  %v1122 = vpack.c.b16 %v620, %v618
  %v1123 = vpack.c.b16 %v621, %v619
  %v1124 = vpack.c.b16 %v624, %v622
  %v1125 = vpack.c.b16 %v625, %v623
  %v1126 = vpack.c.b16 %v628, %v626
  %v1127 = vpack.c.b16 %v629, %v627
  %v1128 = vpack.c.b16 %v632, %v630
  %v1129 = vpack.c.b16 %v633, %v631
  %v1130 = vpack.c.b16 %v636, %v634
  %v1131 = vpack.c.b16 %v637, %v635
  %v1132 = vpack.c.b16 %v640, %v638
  %v1133 = vpack.c.b16 %v641, %v639
  %v1134 = vpack.c.b16 %v644, %v642
  %v1135 = vpack.c.b16 %v645, %v643
  %v1136 = vpack.c.b16 %v648, %v646
  %v1137 = vpack.c.b16 %v649, %v647
  %v1138 = vpack.c.b16 %v652, %v650
  %v1139 = vpack.c.b16 %v653, %v651
  %v1140 = vpack.c.b16 %v656, %v654
  %v1141 = vpack.c.b16 %v657, %v655
  %v1142 = vpack.c.b16 %v660, %v658
  %v1143 = vpack.c.b16 %v661, %v659
  %v1144 = vpack.c.b16 %v664, %v662
  %v1145 = vpack.c.b16 %v665, %v663
  %v1146 = vpack.c.b16 %v668, %v666
  %v1147 = vpack.c.b16 %v669, %v667
  %v1148 = vpack.c.b16 %v672, %v670
  %v1149 = vpack.c.b16 %v673, %v671
  %v1150 = vpack.c.b16 %v676, %v674
  %v1151 = vpack.c.b16 %v677, %v675
  %v1152 = vpack.c.b16 %v680, %v678
  %v1153 = vpack.c.b16 %v681, %v679
  %v1154 = vpack.c.b16 %v684, %v682
  %v1155 = vpack.c.b16 %v685, %v683
  %v1156 = vpack.c.b16 %v688, %v686
  %v1157 = vpack.c.b16 %v689, %v687
  %v1158 = vpack.c.b16 %v692, %v690
  %v1159 = vpack.c.b16 %v693, %v691
  %v1160 = vpack.c.b16 %v696, %v694
  %v1161 = vpack.c.b16 %v697, %v695
  %v1162 = vpack.c.b16 %v700, %v698
  %v1163 = vpack.c.b16 %v701, %v699
  %v1164 = vpack.c.b16 %v704, %v702
  %v1165 = vpack.c.b16 %v705, %v703
  %v1166 = vpack.c.b16 %v708, %v706
  %v1167 = vpack.c.b16 %v709, %v707
  %v1168 = vpack.c.b16 %v712, %v710
  %v1169 = vpack.c.b16 %v713, %v711
  %v1170 = vpack.c.b16 %v716, %v714
  %v1171 = vpack.c.b16 %v717, %v715
  %v1172 = vpack.c.b16 %v720, %v718
  %v1173 = vpack.c.b16 %v721, %v719
  %v1174 = vpack.c.b16 %v724, %v722
  %v1175 = vpack.c.b16 %v725, %v723
  %v1176 = vpack.c.b16 %v728, %v726
  %v1177 = vpack.c.b16 %v729, %v727
  %v1178 = vpack.c.b16 %v732, %v730
  %v1179 = vpack.c.b16 %v733, %v731
  %v1180 = vpack.c.b16 %v736, %v734
  %v1181 = vpack.c.b16 %v737, %v735
  %v1182 = vpack.c.b16 %v740, %v738
  %v1183 = vpack.c.b16 %v741, %v739
  %v1184 = vpack.c.b16 %v744, %v742
  %v1185 = vpack.c.b16 %v745, %v743
  %v1186 = vpack.c.b16 %v748, %v746
  %v1187 = vpack.c.b16 %v749, %v747
  %v1188 = vpack.c.b16 %v752, %v750
  %v1189 = vpack.c.b16 %v753, %v751
  %v1190 = vpack.c.b16 %v756, %v754
  %v1191 = vpack.c.b16 %v757, %v755
  %v1192 = vpack.c.b16 %v760, %v758
  %v1193 = vpack.c.b16 %v761, %v759
  %v1194 = vpack.c.b16 %v764, %v762
  %v1195 = vpack.c.b16 %v765, %v763
  %v1196 = vpack.c.b16 %v768, %v766
  %v1197 = vpack.c.b16 %v769, %v767
  %v1198 = vpack.c.b16 %v772, %v770
  %v1199 = vpack.c.b16 %v773, %v771
  %v1200 = vpack.c.b16 %v776, %v774
  %v1201 = vpack.c.b16 %v777, %v775
  %v1202 = vpack.c.b16 %v780, %v778
  %v1203 = vpack.c.b16 %v781, %v779
  %v1204 = vpack.c.b16 %v784, %v782
  %v1205 = vpack.c.b16 %v785, %v783
  %v1206 = vpack.c.b16 %v788, %v786
  %v1207 = vpack.c.b16 %v789, %v787
  %v1208 = vpack.c.b16 %v792, %v790
  %v1209 = vpack.c.b16 %v793, %v791
  %v1210 = vpack.c.b16 %v796, %v794
  %v1211 = vpack.c.b16 %v797, %v795
  %v1212 = vpack.c.b16 %v800, %v798
  %v1213 = vpack.c.b16 %v801, %v799
  %v1214 = vpack.c.b16 %v804, %v802
  %v1215 = vpack.c.b16 %v805, %v803
  %v1216 = vpack.c.b16 %v808, %v806
  %v1217 = vpack.c.b16 %v809, %v807
  %v1218 = vpack.c.b16 %v812, %v810
  %v1219 = vpack.c.b16 %v813, %v811
  %v1220 = vpack.c.b16 %v816, %v814
  %v1221 = vpack.c.b16 %v817, %v815
  %v1222 = vpack.c.b16 %v820, %v818
  %v1223 = vpack.c.b16 %v821, %v819
  %v1224 = vpack.c.b16 %v824, %v822
  %v1225 = vpack.c.b16 %v825, %v823
  %v1226 = vpack.c.b16 %v828, %v826
  %v1227 = vpack.c.b16 %v829, %v827
  %v1228 = vpack.c.b16 %v832, %v830
  %v1229 = vpack.c.b16 %v833, %v831
  %v1230 = vpack.c.b16 %v836, %v834
  %v1231 = vpack.c.b16 %v837, %v835
  %v1232 = vpack.c.b16 %v840, %v838
  %v1233 = vpack.c.b16 %v841, %v839
  %v1234 = vpack.c.b16 %v844, %v842
  %v1235 = vpack.c.b16 %v845, %v843
  %v1236 = vpack.c.b16 %v848, %v846
  %v1237 = vpack.c.b16 %v849, %v847
  %v1238 = vpack.c.b16 %v852, %v850
  %v1239 = vpack.c.b16 %v853, %v851
  %v1240 = vpack.c.b16 %v856, %v854
  %v1241 = vpack.c.b16 %v857, %v855
  %v1242 = vpack.c.b16 %v860, %v858
  %v1243 = vpack.c.b16 %v861, %v859
  %v1244 = vpack.c.b16 %v864, %v862
  %v1245 = vpack.c.b16 %v865, %v863
  %v1246 = vpack.c.b16 %v868, %v866
  %v1247 = vpack.c.b16 %v869, %v867
  %v1248 = vpack.c.b16 %v872, %v870
  %v1249 = vpack.c.b16 %v873, %v871
  %v1250 = vpack.c.b16 %v876, %v874
  %v1251 = vpack.c.b16 %v877, %v875
  %v1252 = vpack.c.b16 %v880, %v878
  %v1253 = vpack.c.b16 %v881, %v879
  %v1254 = vpack.c.b16 %v884, %v882
  %v1255 = vpack.c.b16 %v885, %v883
  %v1256 = vpack.c.b16 %v888, %v886
  %v1257 = vpack.c.b16 %v889, %v887
  %v1258 = vpack.c.b16 %v892, %v890
  %v1259 = vpack.c.b16 %v893, %v891
  %v1260 = vpack.c.b16 %v896, %v894
  %v1261 = vpack.c.b16 %v897, %v895
  %v1262 = vpack.c.b16 %v900, %v898
  %v1263 = vpack.c.b16 %v901, %v899
  %v1264 = vpack.c.b16 %v904, %v902
  %v1265 = vpack.c.b16 %v905, %v903
  %v1266 = vpack.c.b16 %v908, %v906
  %v1267 = vpack.c.b16 %v909, %v907
  %v1268 = vpack.c.b16 %v912, %v910
  %v1269 = vpack.c.b16 %v913, %v911
  %v1270 = vpack.c.b16 %v916, %v914
  %v1271 = vpack.c.b16 %v917, %v915
  %v1272 = vpack.c.b16 %v920, %v918
  %v1273 = vpack.c.b16 %v921, %v919
  %v1274 = vpack.c.b16 %v924, %v922
  %v1275 = vpack.c.b16 %v925, %v923
  %v1276 = vpack.c.b16 %v928, %v926
  %v1277 = vpack.c.b16 %v929, %v927
  %v1278 = vpack.c.b16 %v932, %v930
  %v1279 = vpack.c.b16 %v933, %v931
  %v1280 = vpack.c.b16 %v936, %v934
  %v1281 = vpack.c.b16 %v937, %v935
  %v1282 = vpack.c.b16 %v940, %v938
  %v1283 = vpack.c.b16 %v941, %v939
  %v1284 = vpack.c.b16 %v944, %v942
  %v1285 = vpack.c.b16 %v945, %v943
  %v1286 = vpack.c.b16 %v948, %v946
  %v1287 = vpack.c.b16 %v949, %v947
  %v1288 = vpack.c.b16 %v952, %v950
  %v1289 = vpack.c.b16 %v953, %v951
  %v1290 = vpack.c.b16 %v956, %v954
  %v1291 = vpack.c.b16 %v957, %v955
  %v1292 = vpack.c.b16 %v960, %v958
  %v1293 = vpack.c.b16 %v961, %v959
  %v1294 = vpack.c.b16 %v964, %v962
  %v1295 = vpack.c.b16 %v965, %v963
  %v1296 = vpack.c.b16 %v968, %v966
  %v1297 = vpack.c.b16 %v969, %v967
  %v1298 = vpack.c.b16 %v972, %v970
  %v1299 = vpack.c.b16 %v973, %v971
  %v1300 = vpack.c.b16 %v976, %v974
  %v1301 = vpack.c.b16 %v977, %v975
  %v1302 = vpack.c.b16 %v980, %v978
  %v1303 = vpack.c.b16 %v981, %v979
  %v1304 = vpack.c.b16 %v984, %v982
  %v1305 = vpack.c.b16 %v985, %v983
  %v1306 = vpack.c.b16 %v988, %v986
  %v1307 = vpack.c.b16 %v989, %v987
  %v1308 = vpack.c.b16 %v992, %v990
  %v1309 = vpack.c.b16 %v993, %v991
  %v1310 = vpack.c.b16 %v996, %v994
  %v1311 = vpack.c.b16 %v997, %v995
  %v1312 = vpack.c.b16 %v1000, %v998
  %v1313 = vpack.c.b16 %v1001, %v999
  %v1314 = vpack.c.b16 %v1004, %v1002
  %v1315 = vpack.c.b16 %v1005, %v1003
  %v1316 = vpack.c.b16 %v1008, %v1006
  %v1317 = vpack.c.b16 %v1009, %v1007
  %v1318 = vpack.c.b16 %v1012, %v1010
  %v1319 = vpack.c.b16 %v1013, %v1011
  %v1320 = vpack.c.b16 %v1016, %v1014
  %v1321 = vpack.c.b16 %v1017, %v1015
  %v1322 = vpack.c.b16 %v1020, %v1018
  %v1323 = vpack.c.b16 %v1021, %v1019
  %v1324 = vpack.c.b16 %v1024, %v1022
  %v1325 = vpack.c.b16 %v1025, %v1023
  %v1326 = vpack.c.b16 %v1028, %v1026
  %v1327 = vpack.c.b16 %v1029, %v1027
  %v1328 = vpack.c.b16 %v1032, %v1030
  %v1329 = vpack.c.b16 %v1033, %v1031
  %v1330 = vpack.c.b16 %v1036, %v1034
  %v1331 = vpack.c.b16 %v1037, %v1035
  %v1332 = vpack.c.b16 %v1040, %v1038
  %v1333 = vpack.c.b16 %v1041, %v1039
  %v1334 = vpack.c.b16 %v1044, %v1042
  %v1335 = vpack.c.b16 %v1045, %v1043
  %v1336 = vpack.c.b16 %v1048, %v1046
  %v1337 = vpack.c.b16 %v1049, %v1047
  %v1338 = vpack.c.b16 %v1052, %v1050
  %v1339 = vpack.c.b16 %v1053, %v1051
  %v1340 = vpack.c.b16 %v1056, %v1054
  %v1341 = vpack.c.b16 %v1057, %v1055
  %v1342 = vpack.c.b16 %v1060, %v1058
  %v1343 = vpack.c.b16 %v1061, %v1059
  %v1344 = vpack.c.b16 %v1064, %v1062
  %v1345 = vpack.c.b16 %v1065, %v1063
  %v1346 = vpack.c.b16 %v1068, %v1066
  %v1347 = vpack.c.b16 %v1069, %v1067
  %v1348 = vpack.c.b16 %v1072, %v1070
  %v1349 = vpack.c.b16 %v1073, %v1071
  %v1350 = vpack.c.b16 %v1076, %v1074
  %v1351 = vpack.c.b16 %v1077, %v1075
  %v1352 = vpack.c.b16 %v1080, %v1078
  %v1353 = vpack.c.b16 %v1081, %v1079
  %v1354 = vpack.c.b16 %v1084, %v1082
  %v1355 = vpack.c.b16 %v1085, %v1083
  %v1356 = vpack.c.b16 %v1088, %v1086
  %v1357 = vpack.c.b16 %v1089, %v1087
  %v1358 = vpack.c.b16 %v1092, %v1090
  %v1359 = vpack.c.b16 %v1093, %v1091
  %v1360 = vpack.c.b16 %v1096, %v1094
  %v1361 = vpack.c.b16 %v1097, %v1095
  %v1362 = vpack.c.b16 %v1100, %v1098
  %v1363 = vpack.c.b16 %v1101, %v1099
  %v1364 = vpack.c.b16 %v1104, %v1102
  %v1365 = vpack.c.b16 %v1105, %v1103
  %v1366 = vpack.c.b16 %v1108, %v1106
  %v1367 = vpack.c.b16 %v1109, %v1107
  %v1368 = vpack.c.b16 %v1112, %v1110
  %v1369 = vpack.c.b16 %v1113, %v1111
  %1626 = vmatprep.subr.bf16.mxu0 %v1129
  %1627 = vmatpush1.bf16.msra.mxu0 %v1128
  %1628 = vmatprep.subr.bf16.mxu0 %v1127
  %1629 = vmatpush1.bf16.msra.mxu0 %v1126
  %1630 = vmatprep.subr.bf16.mxu0 %v1125
  %1631 = vmatpush1.bf16.msra.mxu0 %v1124
  %1632 = vmatprep.subr.bf16.mxu0 %v1123
  %1633 = vmatpush1.bf16.msra.mxu0 %v1122
  %1634 = vmatprep.subr.bf16.mxu0 %v1121
  %1635 = vmatpush1.bf16.msra.mxu0 %v1120
  %1636 = vmatprep.subr.bf16.mxu0 %v1119
  %1637 = vmatpush1.bf16.msra.mxu0 %v1118
  %1638 = vmatprep.subr.bf16.mxu0 %v1117
  %1639 = vmatpush1.bf16.msra.mxu0 %v1116
  %1640 = vmatprep.subr.bf16.mxu0 %v1115
  %1641 = vmatpush1.bf16.msra.mxu0 %v1114
  %1642 = vmatprep.subr.bf16.mxu0 %v1145
  %1643 = vmatpush2.bf16.msra.mxu0 %v1144
  %1644 = vmatprep.subr.bf16.mxu0 %v1143
  %1645 = vmatpush2.bf16.msra.mxu0 %v1142
  %1646 = vmatprep.subr.bf16.mxu0 %v1141
  %1647 = vmatpush2.bf16.msra.mxu0 %v1140
  %1648 = vmatprep.subr.bf16.mxu0 %v1139
  %1649 = vmatpush2.bf16.msra.mxu0 %v1138
  %1650 = vmatprep.subr.bf16.mxu0 %v1137
  %1651 = vmatpush2.bf16.msra.mxu0 %v1136
  %1652 = vmatprep.subr.bf16.mxu0 %v1135
  %1653 = vmatpush2.bf16.msra.mxu0 %v1134
  %1654 = vmatprep.subr.bf16.mxu0 %v1133
  %1655 = vmatpush2.bf16.msra.mxu0 %v1132
  %1656 = vmatprep.subr.bf16.mxu0 %v1131
  %1657 = vmatpush2.bf16.msra.mxu0 %v1130
  %1658 = vmatprep.mubr.bf16.mxu0 %v315
  %1659 = vmatmul.mubr.bf16.gmra.mxu0 %v314
  %v1660 = vpop.f32.mrf.mxu0
  %v1661 = vadd.f32 %v283, %v1660
  %v1662 = vpop.f32.mrf.mxu0
  %v1663 = vadd.f32 %v287, %v1662
  %v1664 = vpop.f32.mrf.mxu0
  %v1665 = vpop.f32.mrf.mxu0
  %1666 = vdwg.mxu0
  %1667 = vmatprep.subr.bf16.mxu0 %v1161
  %1668 = vmatpush1.bf16.msra.mxu0 %v1160
  %1669 = vmatprep.subr.bf16.mxu0 %v1159
  %1670 = vmatpush1.bf16.msra.mxu0 %v1158
  %1671 = vmatprep.subr.bf16.mxu0 %v1157
  %1672 = vmatpush1.bf16.msra.mxu0 %v1156
  %1673 = vmatprep.subr.bf16.mxu0 %v1155
  %1674 = vmatpush1.bf16.msra.mxu0 %v1154
  %1675 = vmatprep.subr.bf16.mxu0 %v1153
  %1676 = vmatpush1.bf16.msra.mxu0 %v1152
  %1677 = vmatprep.subr.bf16.mxu0 %v1151
  %1678 = vmatpush1.bf16.msra.mxu0 %v1150
  %1679 = vmatprep.subr.bf16.mxu0 %v1149
  %1680 = vmatpush1.bf16.msra.mxu0 %v1148
  %1681 = vmatprep.subr.bf16.mxu0 %v1147
  %1682 = vmatpush1.bf16.msra.mxu0 %v1146
  %1683 = vmatprep.subr.bf16.mxu0 %v1177
  %1684 = vmatpush2.bf16.msra.mxu0 %v1176
  %1685 = vmatprep.subr.bf16.mxu0 %v1175
  %1686 = vmatpush2.bf16.msra.mxu0 %v1174
  %1687 = vmatprep.subr.bf16.mxu0 %v1173
  %1688 = vmatpush2.bf16.msra.mxu0 %v1172
  %1689 = vmatprep.subr.bf16.mxu0 %v1171
  %1690 = vmatpush2.bf16.msra.mxu0 %v1170
  %1691 = vmatprep.subr.bf16.mxu0 %v1169
  %1692 = vmatpush2.bf16.msra.mxu0 %v1168
  %1693 = vmatprep.subr.bf16.mxu0 %v1167
  %1694 = vmatpush2.bf16.msra.mxu0 %v1166
  %1695 = vmatprep.subr.bf16.mxu0 %v1165
  %1696 = vmatpush2.bf16.msra.mxu0 %v1164
  %1697 = vmatprep.subr.bf16.mxu0 %v1163
  %1698 = vmatpush2.bf16.msra.mxu0 %v1162
  %1699 = vmatprep.mubr.bf16.mxu0 %v317
  %1700 = vmatmul.mubr.bf16.gmra.mxu0 %v316
  %v1701 = vpop.f32.mrf.mxu0
  %v1702 = vadd.f32 %v1661, %v1701
  %v1703 = vpop.f32.mrf.mxu0
  %v1704 = vadd.f32 %v1663, %v1703
  %v1705 = vpop.f32.mrf.mxu0
  %v1706 = vpop.f32.mrf.mxu0
  %1707 = vdwg.mxu0
  %1708 = vmatprep.subr.bf16.mxu0 %v1193
  %1709 = vmatpush1.bf16.msra.mxu0 %v1192
  %1710 = vmatprep.subr.bf16.mxu0 %v1191
  %1711 = vmatpush1.bf16.msra.mxu0 %v1190
  %1712 = vmatprep.subr.bf16.mxu0 %v1189
  %1713 = vmatpush1.bf16.msra.mxu0 %v1188
  %1714 = vmatprep.subr.bf16.mxu0 %v1187
  %1715 = vmatpush1.bf16.msra.mxu0 %v1186
  %1716 = vmatprep.subr.bf16.mxu0 %v1185
  %1717 = vmatpush1.bf16.msra.mxu0 %v1184
  %1718 = vmatprep.subr.bf16.mxu0 %v1183
  %1719 = vmatpush1.bf16.msra.mxu0 %v1182
  %1720 = vmatprep.subr.bf16.mxu0 %v1181
  %1721 = vmatpush1.bf16.msra.mxu0 %v1180
  %1722 = vmatprep.subr.bf16.mxu0 %v1179
  %1723 = vmatpush1.bf16.msra.mxu0 %v1178
  %1724 = vmatprep.subr.bf16.mxu0 %v1209
  %1725 = vmatpush2.bf16.msra.mxu0 %v1208
  %1726 = vmatprep.subr.bf16.mxu0 %v1207
  %1727 = vmatpush2.bf16.msra.mxu0 %v1206
  %1728 = vmatprep.subr.bf16.mxu0 %v1205
  %1729 = vmatpush2.bf16.msra.mxu0 %v1204
  %1730 = vmatprep.subr.bf16.mxu0 %v1203
  %1731 = vmatpush2.bf16.msra.mxu0 %v1202
  %1732 = vmatprep.subr.bf16.mxu0 %v1201
  %1733 = vmatpush2.bf16.msra.mxu0 %v1200
  %1734 = vmatprep.subr.bf16.mxu0 %v1199
  %1735 = vmatpush2.bf16.msra.mxu0 %v1198
  %1736 = vmatprep.subr.bf16.mxu0 %v1197
  %1737 = vmatpush2.bf16.msra.mxu0 %v1196
  %1738 = vmatprep.subr.bf16.mxu0 %v1195
  %1739 = vmatpush2.bf16.msra.mxu0 %v1194
  %1740 = vmatprep.mubr.bf16.mxu0 %v319
  %1741 = vmatmul.mubr.bf16.gmra.mxu0 %v318
  %v1742 = vpop.f32.mrf.mxu0
  %v1743 = vadd.f32 %v1702, %v1742
  %v1744 = vpop.f32.mrf.mxu0
  %v1745 = vadd.f32 %v1704, %v1744
  %v1746 = vpop.f32.mrf.mxu0
  %v1747 = vpop.f32.mrf.mxu0
  %1748 = vdwg.mxu0
  %1749 = vmatprep.subr.bf16.mxu0 %v1225
  %1750 = vmatpush1.bf16.msra.mxu0 %v1224
  %1751 = vmatprep.subr.bf16.mxu0 %v1223
  %1752 = vmatpush1.bf16.msra.mxu0 %v1222
  %1753 = vmatprep.subr.bf16.mxu0 %v1221
  %1754 = vmatpush1.bf16.msra.mxu0 %v1220
  %1755 = vmatprep.subr.bf16.mxu0 %v1219
  %1756 = vmatpush1.bf16.msra.mxu0 %v1218
  %1757 = vmatprep.subr.bf16.mxu0 %v1217
  %1758 = vmatpush1.bf16.msra.mxu0 %v1216
  %1759 = vmatprep.subr.bf16.mxu0 %v1215
  %1760 = vmatpush1.bf16.msra.mxu0 %v1214
  %1761 = vmatprep.subr.bf16.mxu0 %v1213
  %1762 = vmatpush1.bf16.msra.mxu0 %v1212
  %1763 = vmatprep.subr.bf16.mxu0 %v1211
  %1764 = vmatpush1.bf16.msra.mxu0 %v1210
  %1765 = vmatprep.subr.bf16.mxu0 %v1241
  %1766 = vmatpush2.bf16.msra.mxu0 %v1240
  %1767 = vmatprep.subr.bf16.mxu0 %v1239
  %1768 = vmatpush2.bf16.msra.mxu0 %v1238
  %1769 = vmatprep.subr.bf16.mxu0 %v1237
  %1770 = vmatpush2.bf16.msra.mxu0 %v1236
  %1771 = vmatprep.subr.bf16.mxu0 %v1235
  %1772 = vmatpush2.bf16.msra.mxu0 %v1234
  %1773 = vmatprep.subr.bf16.mxu0 %v1233
  %1774 = vmatpush2.bf16.msra.mxu0 %v1232
  %1775 = vmatprep.subr.bf16.mxu0 %v1231
  %1776 = vmatpush2.bf16.msra.mxu0 %v1230
  %1777 = vmatprep.subr.bf16.mxu0 %v1229
  %1778 = vmatpush2.bf16.msra.mxu0 %v1228
  %1779 = vmatprep.subr.bf16.mxu0 %v1227
  %1780 = vmatpush2.bf16.msra.mxu0 %v1226
  %1781 = vmatprep.mubr.bf16.mxu0 %v321
  %1782 = vmatmul.mubr.bf16.gmra.mxu0 %v320
  %v1783 = vpop.f32.mrf.mxu0
  %v1784 = vadd.f32 %v1743, %v1783
  %v1785 = vpop.f32.mrf.mxu0
  %v1786 = vadd.f32 %v1745, %v1785
  %v1787 = vpop.f32.mrf.mxu0
  %v1788 = vpop.f32.mrf.mxu0
  %1789 = vdwg.mxu0
  %1790 = vmatprep.subr.bf16.mxu0 %v1257
  %1791 = vmatpush1.bf16.msra.mxu0 %v1256
  %1792 = vmatprep.subr.bf16.mxu0 %v1255
  %1793 = vmatpush1.bf16.msra.mxu0 %v1254
  %1794 = vmatprep.subr.bf16.mxu0 %v1253
  %1795 = vmatpush1.bf16.msra.mxu0 %v1252
  %1796 = vmatprep.subr.bf16.mxu0 %v1251
  %1797 = vmatpush1.bf16.msra.mxu0 %v1250
  %1798 = vmatprep.subr.bf16.mxu0 %v1249
  %1799 = vmatpush1.bf16.msra.mxu0 %v1248
  %1800 = vmatprep.subr.bf16.mxu0 %v1247
  %1801 = vmatpush1.bf16.msra.mxu0 %v1246
  %1802 = vmatprep.subr.bf16.mxu0 %v1245
  %1803 = vmatpush1.bf16.msra.mxu0 %v1244
  %1804 = vmatprep.subr.bf16.mxu0 %v1243
  %1805 = vmatpush1.bf16.msra.mxu0 %v1242
  %1806 = vmatprep.subr.bf16.mxu0 %v1273
  %1807 = vmatpush2.bf16.msra.mxu0 %v1272
  %1808 = vmatprep.subr.bf16.mxu0 %v1271
  %1809 = vmatpush2.bf16.msra.mxu0 %v1270
  %1810 = vmatprep.subr.bf16.mxu0 %v1269
  %1811 = vmatpush2.bf16.msra.mxu0 %v1268
  %1812 = vmatprep.subr.bf16.mxu0 %v1267
  %1813 = vmatpush2.bf16.msra.mxu0 %v1266
  %1814 = vmatprep.subr.bf16.mxu0 %v1265
  %1815 = vmatpush2.bf16.msra.mxu0 %v1264
  %1816 = vmatprep.subr.bf16.mxu0 %v1263
  %1817 = vmatpush2.bf16.msra.mxu0 %v1262
  %1818 = vmatprep.subr.bf16.mxu0 %v1261
  %1819 = vmatpush2.bf16.msra.mxu0 %v1260
  %1820 = vmatprep.subr.bf16.mxu0 %v1259
  %1821 = vmatpush2.bf16.msra.mxu0 %v1258
  %1822 = vmatprep.mubr.bf16.mxu0 %v323
  %1823 = vmatmul.mubr.bf16.gmra.mxu0 %v322
  %v1824 = vpop.f32.mrf.mxu0
  %v1825 = vadd.f32 %v1784, %v1824
  %v1826 = vpop.f32.mrf.mxu0
  %v1827 = vadd.f32 %v1786, %v1826
  %v1828 = vpop.f32.mrf.mxu0
  %v1829 = vpop.f32.mrf.mxu0
  %1830 = vdwg.mxu0
  %1831 = vmatprep.subr.bf16.mxu0 %v1289
  %1832 = vmatpush1.bf16.msra.mxu0 %v1288
  %1833 = vmatprep.subr.bf16.mxu0 %v1287
  %1834 = vmatpush1.bf16.msra.mxu0 %v1286
  %1835 = vmatprep.subr.bf16.mxu0 %v1285
  %1836 = vmatpush1.bf16.msra.mxu0 %v1284
  %1837 = vmatprep.subr.bf16.mxu0 %v1283
  %1838 = vmatpush1.bf16.msra.mxu0 %v1282
  %1839 = vmatprep.subr.bf16.mxu0 %v1281
  %1840 = vmatpush1.bf16.msra.mxu0 %v1280
  %1841 = vmatprep.subr.bf16.mxu0 %v1279
  %1842 = vmatpush1.bf16.msra.mxu0 %v1278
  %1843 = vmatprep.subr.bf16.mxu0 %v1277
  %1844 = vmatpush1.bf16.msra.mxu0 %v1276
  %1845 = vmatprep.subr.bf16.mxu0 %v1275
  %1846 = vmatpush1.bf16.msra.mxu0 %v1274
  %1847 = vmatprep.subr.bf16.mxu0 %v1305
  %1848 = vmatpush2.bf16.msra.mxu0 %v1304
  %1849 = vmatprep.subr.bf16.mxu0 %v1303
  %1850 = vmatpush2.bf16.msra.mxu0 %v1302
  %1851 = vmatprep.subr.bf16.mxu0 %v1301
  %1852 = vmatpush2.bf16.msra.mxu0 %v1300
  %1853 = vmatprep.subr.bf16.mxu0 %v1299
  %1854 = vmatpush2.bf16.msra.mxu0 %v1298
  %1855 = vmatprep.subr.bf16.mxu0 %v1297
  %1856 = vmatpush2.bf16.msra.mxu0 %v1296
  %1857 = vmatprep.subr.bf16.mxu0 %v1295
  %1858 = vmatpush2.bf16.msra.mxu0 %v1294
  %1859 = vmatprep.subr.bf16.mxu0 %v1293
  %1860 = vmatpush2.bf16.msra.mxu0 %v1292
  %1861 = vmatprep.subr.bf16.mxu0 %v1291
  %1862 = vmatpush2.bf16.msra.mxu0 %v1290
  %1863 = vmatprep.mubr.bf16.mxu0 %v325
  %1864 = vmatmul.mubr.bf16.gmra.mxu0 %v324
  %v1865 = vpop.f32.mrf.mxu0
  %v1866 = vadd.f32 %v1825, %v1865
  %v1867 = vpop.f32.mrf.mxu0
  %v1868 = vadd.f32 %v1827, %v1867
  %v1869 = vpop.f32.mrf.mxu0
  %v1870 = vpop.f32.mrf.mxu0
  %1871 = vdwg.mxu0
  %1872 = vmatprep.subr.bf16.mxu0 %v1321
  %1873 = vmatpush1.bf16.msra.mxu0 %v1320
  %1874 = vmatprep.subr.bf16.mxu0 %v1319
  %1875 = vmatpush1.bf16.msra.mxu0 %v1318
  %1876 = vmatprep.subr.bf16.mxu0 %v1317
  %1877 = vmatpush1.bf16.msra.mxu0 %v1316
  %1878 = vmatprep.subr.bf16.mxu0 %v1315
  %1879 = vmatpush1.bf16.msra.mxu0 %v1314
  %1880 = vmatprep.subr.bf16.mxu0 %v1313
  %1881 = vmatpush1.bf16.msra.mxu0 %v1312
  %1882 = vmatprep.subr.bf16.mxu0 %v1311
  %1883 = vmatpush1.bf16.msra.mxu0 %v1310
  %1884 = vmatprep.subr.bf16.mxu0 %v1309
  %1885 = vmatpush1.bf16.msra.mxu0 %v1308
  %1886 = vmatprep.subr.bf16.mxu0 %v1307
  %1887 = vmatpush1.bf16.msra.mxu0 %v1306
  %1888 = vmatprep.subr.bf16.mxu0 %v1337
  %1889 = vmatpush2.bf16.msra.mxu0 %v1336
  %1890 = vmatprep.subr.bf16.mxu0 %v1335
  %1891 = vmatpush2.bf16.msra.mxu0 %v1334
  %1892 = vmatprep.subr.bf16.mxu0 %v1333
  %1893 = vmatpush2.bf16.msra.mxu0 %v1332
  %1894 = vmatprep.subr.bf16.mxu0 %v1331
  %1895 = vmatpush2.bf16.msra.mxu0 %v1330
  %1896 = vmatprep.subr.bf16.mxu0 %v1329
  %1897 = vmatpush2.bf16.msra.mxu0 %v1328
  %1898 = vmatprep.subr.bf16.mxu0 %v1327
  %1899 = vmatpush2.bf16.msra.mxu0 %v1326
  %1900 = vmatprep.subr.bf16.mxu0 %v1325
  %1901 = vmatpush2.bf16.msra.mxu0 %v1324
  %1902 = vmatprep.subr.bf16.mxu0 %v1323
  %1903 = vmatpush2.bf16.msra.mxu0 %v1322
  %1904 = vmatprep.mubr.bf16.mxu0 %v327
  %1905 = vmatmul.mubr.bf16.gmra.mxu0 %v326
  %v1906 = vpop.f32.mrf.mxu0
  %v1907 = vadd.f32 %v1866, %v1906
  %v1908 = vpop.f32.mrf.mxu0
  %v1909 = vadd.f32 %v1868, %v1908
  %v1910 = vpop.f32.mrf.mxu0
  %v1911 = vpop.f32.mrf.mxu0
  %1912 = vdwg.mxu0
  %1913 = vmatprep.subr.bf16.mxu0 %v1353
  %1914 = vmatpush1.bf16.msra.mxu0 %v1352
  %1915 = vmatprep.subr.bf16.mxu0 %v1351
  %1916 = vmatpush1.bf16.msra.mxu0 %v1350
  %1917 = vmatprep.subr.bf16.mxu0 %v1349
  %1918 = vmatpush1.bf16.msra.mxu0 %v1348
  %1919 = vmatprep.subr.bf16.mxu0 %v1347
  %1920 = vmatpush1.bf16.msra.mxu0 %v1346
  %1921 = vmatprep.subr.bf16.mxu0 %v1345
  %1922 = vmatpush1.bf16.msra.mxu0 %v1344
  %1923 = vmatprep.subr.bf16.mxu0 %v1343
  %1924 = vmatpush1.bf16.msra.mxu0 %v1342
  %1925 = vmatprep.subr.bf16.mxu0 %v1341
  %1926 = vmatpush1.bf16.msra.mxu0 %v1340
  %1927 = vmatprep.subr.bf16.mxu0 %v1339
  %1928 = vmatpush1.bf16.msra.mxu0 %v1338
  %1929 = vmatprep.subr.bf16.mxu0 %v1369
  %1930 = vmatpush2.bf16.msra.mxu0 %v1368
  %1931 = vmatprep.subr.bf16.mxu0 %v1367
  %1932 = vmatpush2.bf16.msra.mxu0 %v1366
  %1933 = vmatprep.subr.bf16.mxu0 %v1365
  %1934 = vmatpush2.bf16.msra.mxu0 %v1364
  %1935 = vmatprep.subr.bf16.mxu0 %v1363
  %1936 = vmatpush2.bf16.msra.mxu0 %v1362
  %1937 = vmatprep.subr.bf16.mxu0 %v1361
  %1938 = vmatpush2.bf16.msra.mxu0 %v1360
  %1939 = vmatprep.subr.bf16.mxu0 %v1359
  %1940 = vmatpush2.bf16.msra.mxu0 %v1358
  %1941 = vmatprep.subr.bf16.mxu0 %v1357
  %1942 = vmatpush2.bf16.msra.mxu0 %v1356
  %1943 = vmatprep.subr.bf16.mxu0 %v1355
  %1944 = vmatpush2.bf16.msra.mxu0 %v1354
  %1945 = vmatprep.mubr.bf16.mxu0 %v329
  %1946 = vmatmul.mubr.bf16.gmra.mxu0 %v328
  %v1947 = vpop.f32.mrf.mxu0
  %v1948 = vadd.f32 %v1907, %v1947
  %v1949 = vpop.f32.mrf.mxu0
  %v1950 = vadd.f32 %v1909, %v1949
  %v1951 = vpop.f32.mrf.mxu0
  %v1952 = vpop.f32.mrf.mxu0
  %1953 = vdwg.mxu0
  %vm1954 = vcmp.gt.f32.partialorder %v1948, 0.0
  %vm1955 = vcmp.gt.f32.partialorder %v1950, 0.0
  %v1956 = vmul.f32 %v1948, 0.2
  %v1957 = vmul.f32 %v1950, 0.2
  %v1958 = vsel %vm1954, %v1948, %v1956
  %v1959 = vsel %vm1955, %v1950, %v1957
  %v1960 = vpack.c.bf16 %v1958, %v1958
  %v1961 = vpack.c.bf16 %v1959, %v1959
  %v1964 = vunpack.c.l.b16 %v1960
  %v1965 = vunpack.c.l.b16 %v1961
  %v1966 = vpack.c.b16 %v1965, %v1964
  %1968 = vst [vmem:[%s3] sm:$0xff] %v1966
  // Predicated region
  $region14: #{transport_t_forward.8} parent=0 // pred_check
    _
  $region15: #{transport_t_forward.8} parent=0 // pred_check_branch
    %1970 = sbr.rel (0) target = $region17
  $region16: #{transport_t_forward.8} parent=0 // pred_region
    _
  $region17: #{transport_t_forward.8} parent=0 // pred_fallthru
    _
  // Predicated region
  $region18: #{transport_t_forward.8} parent=0 // pred_check
    _
  $region19: #{transport_t_forward.8} parent=0 // pred_check_branch
    %1972 = sbr.rel (0) target = $region21
  $region20: #{transport_t_forward.8} parent=0 // pred_region
    _
  $region21: #{transport_t_forward.8} parent=0 // pred_fallthru
    _

</llo_original>
